<compile_context>
chip_gen: v6e
topology: v6e:2x2x1
jax: 0.10.0
libtpu: 0.0.40
codegen_flags: <defaults>
</compile_context>

<pallas_src>
import functools

import jax
import jax.numpy as jnp
from jax.experimental import pallas as pl
from jax.experimental.pallas import tpu as pltpu


def cross_attn_kernel(x_ref, ctx_ref,
                      wq_ref, bq_ref,        # softmax scale pre-folded into wq/bq
                      wkv_ref, bkv_ref,      # fused K|V projection (d, 2d)
                      wo_ref, bo_ref,
                      o_ref,
                      *, heads):
    bt, n, d = x_ref.shape
    _, m, _ = ctx_ref.shape
    hd = d // heads
    mxu_dtype = wq_ref.dtype   # weights carry the MXU-operand (compute) dtype

    # Flatten batch*tokens for the projection matmuls (full-d contraction,
    # bt*n / bt*m rows -> much better MXU fill than one batch row at a time).
    # MXU operands in compute dtype, f32 accumulation, f32 bias add.
    x2 = x_ref[...].reshape(bt * n, d).astype(mxu_dtype)
    c2 = ctx_ref[...].reshape(bt * m, d).astype(mxu_dtype)

    q = jnp.dot(x2, wq_ref[...], preferred_element_type=jnp.float32) + bq_ref[...]
    kv = jnp.dot(c2, wkv_ref[...], preferred_element_type=jnp.float32) + bkv_ref[...]

    q3 = q.astype(mxu_dtype).reshape(bt, n, d)
    k3 = kv[:, :d].astype(mxu_dtype).reshape(bt, m, d)
    v3 = kv[:, d:].astype(mxu_dtype).reshape(bt, m, d)

    # Per-head attention, batched over the batch tile.  Softmax arithmetic is
    # kept in f32 on every generation; only MXU operands use compute dtype.
    full_wo = (hd % 128 == 0)
    head_outs = []
    y_acc = None if full_wo else jnp.zeros((bt * n, d), jnp.float32)

    for h in range(heads):
        sl = slice(h * hd, (h + 1) * hd)
        q_h = q3[:, :, sl]                                    # (bt, n, hd)
        k_h = k3[:, :, sl]                                    # (bt, m, hd)
        v_h = v3[:, :, sl]                                    # (bt, m, hd)

        # Scale is already folded into q (wrapper-side).
        s = jnp.einsum('bqe,bke->bqk', q_h, k_h,
                       preferred_element_type=jnp.float32)    # (bt, n, m) f32
        s = s - jnp.max(s, axis=-1, keepdims=True)
        p = jnp.exp(s)                                        # unnormalized probs
        denom = jnp.sum(p, axis=-1, keepdims=True)            # (bt, n, 1)

        o_h = jnp.einsum('bqk,bke->bqe', p.astype(mxu_dtype), v_h,
                         preferred_element_type=jnp.float32)  # (bt, n, hd) f32
        # Deferred softmax normalization: scale the (n, hd) output instead of
        # the (n, m) probabilities; EUP approximate reciprocal keeps the
        # divide off the VALU.
        o_h = o_h * pl.reciprocal(denom, approx=True)

        if full_wo:
            # hd lane-aligned: free placement into one (bt*n, d) buffer,
            # single full-d output-projection matmul after the loop.
            head_outs.append(o_h.astype(mxu_dtype))
        else:
            # hd < 128: fold this head straight into the output projection
            # accumulator (no concatenate / lane shuffle).
            y_acc = y_acc + jnp.dot(
                o_h.reshape(bt * n, hd).astype(mxu_dtype), wo_ref[sl, :],
                preferred_element_type=jnp.float32)

    if full_wo:
        o_all = jnp.concatenate(head_outs, axis=-1).reshape(bt * n, d)
        y_acc = jnp.dot(o_all, wo_ref[...], preferred_element_type=jnp.float32)

    y = y_acc + bo_ref[...]
    o_ref[...] = y.reshape(bt, n, d).astype(o_ref.dtype)


def _pick_batch_tile(B, n, m, target_rows):
    # Guarantee >= 2 grid steps when B >= 2 so dimension_semantics=("parallel",)
    # can shard across v7x's two TensorCores; within that, pick the smallest
    # batch tile whose projection matmuls reach the MXU row-fill target.
    cap = B if B < 2 else max(1, B // 2)
    divisors = [c for c in range(1, cap + 1) if B % c == 0]
    rows = min(n, m)
    for c in divisors:
        if c * rows >= target_rows:
            return c
    return divisors[-1]


def _vmem_limit_bytes(bt, n, m, d, act_bytes, w_bytes):
    # Activation tiles (x / ctx / out) are double-buffered by the pipeline;
    # weight blocks are single-buffered (constant index_map, pl.Buffered(1));
    # intermediates (q, kv, per-head scores, output accumulator) are f32.
    act = 2 * (2 * bt * n * d + bt * m * d) * act_bytes
    wts = (2 * d * d + d * 2 * d) * w_bytes + 4 * d * 4
    inter = (bt * n * d + bt * m * 2 * d + bt * n * m + 2 * bt * n * d) * 4
    est = act + wts + inter
    # 2x headroom for compiler scratch; floor at the 32 MiB default, cap at
    # v7x's 64 MiB physical VMEM so the same limit is valid on every gen.
    return int(min(64 << 20, max(32 << 20, 2 * est + (4 << 20))))


def cross_attention(x, context, params, heads, *,
                    compute_dtype=jnp.bfloat16, target_rows=256):
    """params: dict with wq, bq, wk, bk, wv, bv, wo, bo.
    Weights are PyTorch-convention (out, in); biases are (out,)."""
    B, n, d = x.shape
    _, m, _ = context.shape
    assert d % heads == 0
    scale = (d // heads) ** (-0.5)
    out_dtype = x.dtype
    cdtype = jnp.dtype(compute_dtype) if compute_dtype is not None else jnp.dtype(x.dtype)

    # Weight prep (wrapper-side, one-time):
    #  - transpose to (in, out) so the kernel does x @ W,
    #  - fold the softmax scale into the Q projection (weights AND bias),
    #  - fuse K and V into one (d, 2d) matmul,
    #  - MXU operands in compute dtype (bf16 by default: ~2-4x MXU rate on
    #    v6e/v7x, half the weight VMEM/HBM bytes), biases in f32.
    wq_t = (params["wq"].T * scale).astype(cdtype)
    bq = (params["bq"] * scale).reshape(1, d).astype(jnp.float32)
    wkv_t = jnp.concatenate([params["wk"].T, params["wv"].T], axis=1).astype(cdtype)
    bkv = jnp.concatenate([params["bk"], params["bv"]]).reshape(1, 2 * d).astype(jnp.float32)
    wo_t = params["wo"].T.astype(cdtype)
    bo = params["bo"].reshape(1, d).astype(jnp.float32)

    bt = _pick_batch_tile(B, n, m, target_rows)
    vmem_limit = _vmem_limit_bytes(
        bt, n, m, d,
        act_bytes=jnp.dtype(x.dtype).itemsize,
        w_bytes=jnp.dtype(cdtype).itemsize)

    kernel = functools.partial(cross_attn_kernel, heads=heads)

    def build(single_buffer_weights):
        if single_buffer_weights:
            def wspec(shape):
                # Constant index_map: double-buffering buys nothing, just
                # doubles resident weight VMEM -> single-buffer.
                return pl.BlockSpec(shape, lambda b: (0, 0),
                                    pipeline_mode=pl.Buffered(1))
        else:
            def wspec(shape):
                return pl.BlockSpec(shape, lambda b: (0, 0))
        return pl.pallas_call(
            kernel,
            out_shape=jax.ShapeDtypeStruct((B, n, d), out_dtype),
            grid=(B // bt,),
            in_specs=[
                pl.BlockSpec((bt, n, d), lambda b: (b, 0, 0)),   # x
                pl.BlockSpec((bt, m, d), lambda b: (b, 0, 0)),   # context
                wspec((d, d)),        # wq (scale folded)
                wspec((1, d)),        # bq (scale folded)
                wspec((d, 2 * d)),    # wkv (fused K|V)
                wspec((1, 2 * d)),    # bkv
                wspec((d, d)),        # wo
                wspec((1, d)),        # bo
            ],
            out_specs=pl.BlockSpec((bt, n, d), lambda b: (b, 0, 0)),
            compiler_params=pltpu.CompilerParams(
                dimension_semantics=("parallel",),
                vmem_limit_bytes=vmem_limit),
        )

    args = (x, context, wq_t, bq, wkv_t, bkv, wo_t, bo)
    try:
        return build(single_buffer_weights=True)(*args)
    except Exception:
        # Fallback for JAX versions that reject pl.Buffered(1) on a top-level
        # BlockSpec: identical kernel, default double-buffered weights.
        return build(single_buffer_weights=False)(*args)


def reference_cross_attention(x, context, params, heads):
    """Pure-JAX reference mirroring the PyTorch forward."""
    b, n, d = x.shape
    hd = d // heads
    scale = hd ** (-0.5)

    def lin(t, w, bb):
        return t @ w.T + bb

    q = lin(x, params["wq"], params["bq"]).reshape(b, n, heads, hd).transpose(0, 2, 1, 3)
    k = lin(context, params["wk"], params["bk"]).reshape(b, -1, heads, hd).transpose(0, 2, 1, 3)
    v = lin(context, params["wv"], params["bv"]).reshape(b, -1, heads, hd).transpose(0, 2, 1, 3)

    attn = jnp.einsum("bhqe,bhke->bhqk", q, k) * scale
    attn = jax.nn.softmax(attn, axis=-1)
    out = jnp.einsum("bhqk,bhke->bhqe", attn, v)
    out = out.transpose(0, 2, 1, 3).reshape(b, n, d)
    return lin(out, params["wo"], params["bo"])


def init_params(key, dim):
    ks = jax.random.split(key, 8)
    s = 1.0 / jnp.sqrt(dim)
    return {
        "wq": jax.random.uniform(ks[0], (dim, dim), jnp.float32, -s, s),
        "bq": jax.random.uniform(ks[1], (dim,), jnp.float32, -s, s),
        "wk": jax.random.uniform(ks[2], (dim, dim), jnp.float32, -s, s),
        "bk": jax.random.uniform(ks[3], (dim,), jnp.float32, -s, s),
        "wv": jax.random.uniform(ks[4], (dim, dim), jnp.float32, -s, s),
        "bv": jax.random.uniform(ks[5], (dim,), jnp.float32, -s, s),
        "wo": jax.random.uniform(ks[6], (dim, dim), jnp.float32, -s, s),
        "bo": jax.random.uniform(ks[7], (dim,), jnp.float32, -s, s),
    }


if __name__ == "__main__":
    B, N, M, D, H = 2, 8, 8, 32, 4

    key = jax.random.PRNGKey(0)
    kx, kc, kp = jax.random.split(key, 3)
    x = jax.random.normal(kx, (B, N, D), jnp.float32)
    context = jax.random.normal(kc, (B, M, D), jnp.float32)
    params = init_params(kp, D)

    ref = reference_cross_attention(x, context, params, heads=H)

    # f32 MXU operands: near-exact parity with the reference (only the EUP
    # approximate reciprocal and op-ordering differ).
    out_f32 = jax.block_until_ready(
        cross_attention(x, context, params, heads=H, compute_dtype=jnp.float32))
    assert out_f32.shape == (B, N, D)
    assert jnp.allclose(out_f32, ref, atol=2e-3, rtol=2e-3), (
        f"f32 max abs err {jnp.max(jnp.abs(out_f32 - ref))}")

    # Default (recommended) path: bf16 MXU operands with f32 accumulation and
    # f32 softmax arithmetic; tolerance loosened to cover bf16 rounding of
    # activations / weights / probabilities.
    out_bf16 = jax.block_until_ready(cross_attention(x, context, params, heads=H))
    assert out_bf16.shape == (B, N, D)
    assert jnp.allclose(out_bf16, ref, atol=5e-2, rtol=5e-2), (
        f"bf16 max abs err {jnp.max(jnp.abs(out_bf16 - ref))}")

    print("KERNEL_OK")
</pallas_src>

<mosaic_0001>
module attributes {stable_mosaic.version = 11 : i64} {
  func.func @cross_attn_kernel(%arg0: i32, %arg1: memref<1x8x32xf32, #tpu.memory_space<vmem>>, %arg2: memref<1x8x32xf32, #tpu.memory_space<vmem>>, %arg3: memref<32x32xf32, #tpu.memory_space<vmem>>, %arg4: memref<1x32xf32, #tpu.memory_space<vmem>>, %arg5: memref<32x64xf32, #tpu.memory_space<vmem>>, %arg6: memref<1x64xf32, #tpu.memory_space<vmem>>, %arg7: memref<32x32xf32, #tpu.memory_space<vmem>>, %arg8: memref<1x32xf32, #tpu.memory_space<vmem>>, %arg9: memref<1x8x32xf32, #tpu.memory_space<vmem>>) attributes {dimension_semantics = [#tpu.dimension_semantics<parallel>], iteration_bounds = array<i64: 2>, scalar_prefetch = 0 : i64, scratch_operands = 0 : i64, tpu.core_type = #tpu.core_type<tc>, window_params = [{transform_indices = @transform_0, window_bounds = array<i64: 1, 8, 32>}, {transform_indices = @transform_1, window_bounds = array<i64: 1, 8, 32>}, {pipeline_mode = #tpu.pipeline_mode<synchronous>, transform_indices = @transform_2, window_bounds = array<i64: 32, 32>}, {pipeline_mode = #tpu.pipeline_mode<synchronous>, transform_indices = @transform_3, window_bounds = array<i64: 1, 32>}, {pipeline_mode = #tpu.pipeline_mode<synchronous>, transform_indices = @transform_4, window_bounds = array<i64: 32, 64>}, {pipeline_mode = #tpu.pipeline_mode<synchronous>, transform_indices = @transform_5, window_bounds = array<i64: 1, 64>}, {pipeline_mode = #tpu.pipeline_mode<synchronous>, transform_indices = @transform_6, window_bounds = array<i64: 32, 32>}, {pipeline_mode = #tpu.pipeline_mode<synchronous>, transform_indices = @transform_7, window_bounds = array<i64: 1, 32>}, {transform_indices = @transform_8, window_bounds = array<i64: 1, 8, 32>}]} {
    %c0 = arith.constant 0 : index
    %c0_0 = arith.constant 0 : index
    %c0_1 = arith.constant 0 : index
    %0 = vector.load %arg1[%c0, %c0_0, %c0_1] : memref<1x8x32xf32, #tpu.memory_space<vmem>>, vector<1x8x32xf32>
    %1 = vector.shape_cast %0 : vector<1x8x32xf32> to vector<8x32xf32>
    %c0_2 = arith.constant 0 : index
    %c0_3 = arith.constant 0 : index
    %c0_4 = arith.constant 0 : index
    %2 = vector.load %arg2[%c0_2, %c0_3, %c0_4] : memref<1x8x32xf32, #tpu.memory_space<vmem>>, vector<1x8x32xf32>
    %3 = vector.shape_cast %2 : vector<1x8x32xf32> to vector<8x32xf32>
    %c0_5 = arith.constant 0 : index
    %c0_6 = arith.constant 0 : index
    %4 = vector.load %arg3[%c0_5, %c0_6] : memref<32x32xf32, #tpu.memory_space<vmem>>, vector<32x32xf32>
    %cst = arith.constant dense<0.000000e+00> : vector<8x32xf32>
    %5 = tpu.matmul %1, %4, %cst {dimension_numbers = #tpu.dot_dimension_numbers<[1], [0], [0], [1], [0, 0, 1, 1], [], []>} : vector<8x32xf32>, vector<32x32xf32>, vector<8x32xf32> -> vector<8x32xf32>
    %c0_7 = arith.constant 0 : index
    %c0_8 = arith.constant 0 : index
    %6 = vector.load %arg4[%c0_7, %c0_8] : memref<1x32xf32, #tpu.memory_space<vmem>>, vector<1x32xf32>
    %7 = vector.broadcast %6 : vector<1x32xf32> to vector<8x32xf32>
    %8 = arith.addf %5, %7 : vector<8x32xf32>
    %c0_9 = arith.constant 0 : index
    %c0_10 = arith.constant 0 : index
    %9 = vector.load %arg5[%c0_9, %c0_10] : memref<32x64xf32, #tpu.memory_space<vmem>>, vector<32x64xf32>
    %cst_11 = arith.constant dense<0.000000e+00> : vector<8x64xf32>
    %10 = tpu.matmul %3, %9, %cst_11 {dimension_numbers = #tpu.dot_dimension_numbers<[1], [0], [0], [1], [0, 0, 1, 1], [], []>} : vector<8x32xf32>, vector<32x64xf32>, vector<8x64xf32> -> vector<8x64xf32>
    %c0_12 = arith.constant 0 : index
    %c0_13 = arith.constant 0 : index
    %11 = vector.load %arg6[%c0_12, %c0_13] : memref<1x64xf32, #tpu.memory_space<vmem>>, vector<1x64xf32>
    %12 = vector.broadcast %11 : vector<1x64xf32> to vector<8x64xf32>
    %13 = arith.addf %10, %12 : vector<8x64xf32>
    %14 = vector.shape_cast %8 : vector<8x32xf32> to vector<1x8x32xf32>
    %15 = vector.extract_strided_slice %13 {offsets = [0, 0], sizes = [8, 32], strides = [1, 1]} : vector<8x64xf32> to vector<8x32xf32>
    %16 = vector.shape_cast %15 : vector<8x32xf32> to vector<1x8x32xf32>
    %17 = vector.extract_strided_slice %13 {offsets = [0, 32], sizes = [8, 32], strides = [1, 1]} : vector<8x64xf32> to vector<8x32xf32>
    %18 = vector.shape_cast %17 : vector<8x32xf32> to vector<1x8x32xf32>
    %cst_14 = arith.constant 0.000000e+00 : f32
    %19 = vector.broadcast %cst_14 : f32 to vector<8x32xf32>
    %20 = vector.extract_strided_slice %14 {offsets = [0, 0, 0], sizes = [1, 8, 8], strides = [1, 1, 1]} : vector<1x8x32xf32> to vector<1x8x8xf32>
    %21 = vector.extract_strided_slice %16 {offsets = [0, 0, 0], sizes = [1, 8, 8], strides = [1, 1, 1]} : vector<1x8x32xf32> to vector<1x8x8xf32>
    %22 = vector.extract_strided_slice %18 {offsets = [0, 0, 0], sizes = [1, 8, 8], strides = [1, 1, 1]} : vector<1x8x32xf32> to vector<1x8x8xf32>
    "tpu.trace_start"() <{level = 10 : i32, message = "bqe,bke->bqk"}> : () -> ()
    %cst_15 = arith.constant dense<0.000000e+00> : vector<1x8x8xf32>
    %23 = tpu.matmul %20, %21, %cst_15 {dimension_numbers = #tpu.dot_dimension_numbers<[2], [2], [1], [1], [0, 0, 0, 1, 1, 1], [0], [0]>} : vector<1x8x8xf32>, vector<1x8x8xf32>, vector<1x8x8xf32> -> vector<1x8x8xf32>
    "tpu.trace_stop"() : () -> ()
    %cst_16 = arith.constant dense<0xFF800000> : vector<1x8xf32>
    %24 = vector.multi_reduction <maximumf>, %23, %cst_16 [2] : vector<1x8x8xf32> to vector<1x8xf32>
    %25 = vector.shape_cast %24 : vector<1x8xf32> to vector<1x8x1xf32>
    %26 = vector.broadcast %25 : vector<1x8x1xf32> to vector<1x8x8xf32>
    %27 = arith.subf %23, %26 : vector<1x8x8xf32>
    %28 = math.exp %27 : vector<1x8x8xf32>
    %cst_17 = arith.constant dense<0.000000e+00> : vector<1x8xf32>
    %29 = vector.multi_reduction <add>, %28, %cst_17 [2] : vector<1x8x8xf32> to vector<1x8xf32>
    %30 = vector.shape_cast %29 : vector<1x8xf32> to vector<1x8x1xf32>
    "tpu.trace_start"() <{level = 10 : i32, message = "bqk,bke->bqe"}> : () -> ()
    %cst_18 = arith.constant dense<0.000000e+00> : vector<1x8x8xf32>
    %31 = tpu.matmul %28, %22, %cst_18 {dimension_numbers = #tpu.dot_dimension_numbers<[2], [1], [1], [2], [0, 0, 0, 1, 1, 2], [0], [0]>} : vector<1x8x8xf32>, vector<1x8x8xf32>, vector<1x8x8xf32> -> vector<1x8x8xf32>
    "tpu.trace_stop"() : () -> ()
    %32 = tpu.reciprocal %30 {approx = true} : vector<1x8x1xf32> -> vector<1x8x1xf32>
    %33 = vector.broadcast %32 : vector<1x8x1xf32> to vector<1x8x8xf32>
    %34 = arith.mulf %31, %33 : vector<1x8x8xf32>
    %35 = vector.shape_cast %34 : vector<1x8x8xf32> to vector<8x8xf32>
    %c0_19 = arith.constant 0 : index
    %c0_20 = arith.constant 0 : index
    %36 = vector.load %arg7[%c0_19, %c0_20] : memref<32x32xf32, #tpu.memory_space<vmem>>, vector<8x32xf32>
    %cst_21 = arith.constant dense<0.000000e+00> : vector<8x32xf32>
    %37 = tpu.matmul %35, %36, %cst_21 {dimension_numbers = #tpu.dot_dimension_numbers<[1], [0], [0], [1], [0, 0, 1, 1], [], []>} : vector<8x8xf32>, vector<8x32xf32>, vector<8x32xf32> -> vector<8x32xf32>
    %38 = arith.addf %19, %37 : vector<8x32xf32>
    %39 = vector.extract_strided_slice %14 {offsets = [0, 0, 8], sizes = [1, 8, 8], strides = [1, 1, 1]} : vector<1x8x32xf32> to vector<1x8x8xf32>
    %40 = vector.extract_strided_slice %16 {offsets = [0, 0, 8], sizes = [1, 8, 8], strides = [1, 1, 1]} : vector<1x8x32xf32> to vector<1x8x8xf32>
    %41 = vector.extract_strided_slice %18 {offsets = [0, 0, 8], sizes = [1, 8, 8], strides = [1, 1, 1]} : vector<1x8x32xf32> to vector<1x8x8xf32>
    "tpu.trace_start"() <{level = 10 : i32, message = "bqe,bke->bqk"}> : () -> ()
    %cst_22 = arith.constant dense<0.000000e+00> : vector<1x8x8xf32>
    %42 = tpu.matmul %39, %40, %cst_22 {dimension_numbers = #tpu.dot_dimension_numbers<[2], [2], [1], [1], [0, 0, 0, 1, 1, 1], [0], [0]>} : vector<1x8x8xf32>, vector<1x8x8xf32>, vector<1x8x8xf32> -> vector<1x8x8xf32>
    "tpu.trace_stop"() : () -> ()
    %cst_23 = arith.constant dense<0xFF800000> : vector<1x8xf32>
    %43 = vector.multi_reduction <maximumf>, %42, %cst_23 [2] : vector<1x8x8xf32> to vector<1x8xf32>
    %44 = vector.shape_cast %43 : vector<1x8xf32> to vector<1x8x1xf32>
    %45 = vector.broadcast %44 : vector<1x8x1xf32> to vector<1x8x8xf32>
    %46 = arith.subf %42, %45 : vector<1x8x8xf32>
    %47 = math.exp %46 : vector<1x8x8xf32>
    %cst_24 = arith.constant dense<0.000000e+00> : vector<1x8xf32>
    %48 = vector.multi_reduction <add>, %47, %cst_24 [2] : vector<1x8x8xf32> to vector<1x8xf32>
    %49 = vector.shape_cast %48 : vector<1x8xf32> to vector<1x8x1xf32>
    "tpu.trace_start"() <{level = 10 : i32, message = "bqk,bke->bqe"}> : () -> ()
    %cst_25 = arith.constant dense<0.000000e+00> : vector<1x8x8xf32>
    %50 = tpu.matmul %47, %41, %cst_25 {dimension_numbers = #tpu.dot_dimension_numbers<[2], [1], [1], [2], [0, 0, 0, 1, 1, 2], [0], [0]>} : vector<1x8x8xf32>, vector<1x8x8xf32>, vector<1x8x8xf32> -> vector<1x8x8xf32>
    "tpu.trace_stop"() : () -> ()
    %51 = tpu.reciprocal %49 {approx = true} : vector<1x8x1xf32> -> vector<1x8x1xf32>
    %52 = vector.broadcast %51 : vector<1x8x1xf32> to vector<1x8x8xf32>
    %53 = arith.mulf %50, %52 : vector<1x8x8xf32>
    %54 = vector.shape_cast %53 : vector<1x8x8xf32> to vector<8x8xf32>
    %c8 = arith.constant 8 : index
    %c0_26 = arith.constant 0 : index
    %55 = vector.load %arg7[%c8, %c0_26] : memref<32x32xf32, #tpu.memory_space<vmem>>, vector<8x32xf32>
    %cst_27 = arith.constant dense<0.000000e+00> : vector<8x32xf32>
    %56 = tpu.matmul %54, %55, %cst_27 {dimension_numbers = #tpu.dot_dimension_numbers<[1], [0], [0], [1], [0, 0, 1, 1], [], []>} : vector<8x8xf32>, vector<8x32xf32>, vector<8x32xf32> -> vector<8x32xf32>
    %57 = arith.addf %38, %56 : vector<8x32xf32>
    %58 = vector.extract_strided_slice %14 {offsets = [0, 0, 16], sizes = [1, 8, 8], strides = [1, 1, 1]} : vector<1x8x32xf32> to vector<1x8x8xf32>
    %59 = vector.extract_strided_slice %16 {offsets = [0, 0, 16], sizes = [1, 8, 8], strides = [1, 1, 1]} : vector<1x8x32xf32> to vector<1x8x8xf32>
    %60 = vector.extract_strided_slice %18 {offsets = [0, 0, 16], sizes = [1, 8, 8], strides = [1, 1, 1]} : vector<1x8x32xf32> to vector<1x8x8xf32>
    "tpu.trace_start"() <{level = 10 : i32, message = "bqe,bke->bqk"}> : () -> ()
    %cst_28 = arith.constant dense<0.000000e+00> : vector<1x8x8xf32>
    %61 = tpu.matmul %58, %59, %cst_28 {dimension_numbers = #tpu.dot_dimension_numbers<[2], [2], [1], [1], [0, 0, 0, 1, 1, 1], [0], [0]>} : vector<1x8x8xf32>, vector<1x8x8xf32>, vector<1x8x8xf32> -> vector<1x8x8xf32>
    "tpu.trace_stop"() : () -> ()
    %cst_29 = arith.constant dense<0xFF800000> : vector<1x8xf32>
    %62 = vector.multi_reduction <maximumf>, %61, %cst_29 [2] : vector<1x8x8xf32> to vector<1x8xf32>
    %63 = vector.shape_cast %62 : vector<1x8xf32> to vector<1x8x1xf32>
    %64 = vector.broadcast %63 : vector<1x8x1xf32> to vector<1x8x8xf32>
    %65 = arith.subf %61, %64 : vector<1x8x8xf32>
    %66 = math.exp %65 : vector<1x8x8xf32>
    %cst_30 = arith.constant dense<0.000000e+00> : vector<1x8xf32>
    %67 = vector.multi_reduction <add>, %66, %cst_30 [2] : vector<1x8x8xf32> to vector<1x8xf32>
    %68 = vector.shape_cast %67 : vector<1x8xf32> to vector<1x8x1xf32>
    "tpu.trace_start"() <{level = 10 : i32, message = "bqk,bke->bqe"}> : () -> ()
    %cst_31 = arith.constant dense<0.000000e+00> : vector<1x8x8xf32>
    %69 = tpu.matmul %66, %60, %cst_31 {dimension_numbers = #tpu.dot_dimension_numbers<[2], [1], [1], [2], [0, 0, 0, 1, 1, 2], [0], [0]>} : vector<1x8x8xf32>, vector<1x8x8xf32>, vector<1x8x8xf32> -> vector<1x8x8xf32>
    "tpu.trace_stop"() : () -> ()
    %70 = tpu.reciprocal %68 {approx = true} : vector<1x8x1xf32> -> vector<1x8x1xf32>
    %71 = vector.broadcast %70 : vector<1x8x1xf32> to vector<1x8x8xf32>
    %72 = arith.mulf %69, %71 : vector<1x8x8xf32>
    %73 = vector.shape_cast %72 : vector<1x8x8xf32> to vector<8x8xf32>
    %c16 = arith.constant 16 : index
    %c0_32 = arith.constant 0 : index
    %74 = vector.load %arg7[%c16, %c0_32] : memref<32x32xf32, #tpu.memory_space<vmem>>, vector<8x32xf32>
    %cst_33 = arith.constant dense<0.000000e+00> : vector<8x32xf32>
    %75 = tpu.matmul %73, %74, %cst_33 {dimension_numbers = #tpu.dot_dimension_numbers<[1], [0], [0], [1], [0, 0, 1, 1], [], []>} : vector<8x8xf32>, vector<8x32xf32>, vector<8x32xf32> -> vector<8x32xf32>
    %76 = arith.addf %57, %75 : vector<8x32xf32>
    %77 = vector.extract_strided_slice %14 {offsets = [0, 0, 24], sizes = [1, 8, 8], strides = [1, 1, 1]} : vector<1x8x32xf32> to vector<1x8x8xf32>
    %78 = vector.extract_strided_slice %16 {offsets = [0, 0, 24], sizes = [1, 8, 8], strides = [1, 1, 1]} : vector<1x8x32xf32> to vector<1x8x8xf32>
    %79 = vector.extract_strided_slice %18 {offsets = [0, 0, 24], sizes = [1, 8, 8], strides = [1, 1, 1]} : vector<1x8x32xf32> to vector<1x8x8xf32>
    "tpu.trace_start"() <{level = 10 : i32, message = "bqe,bke->bqk"}> : () -> ()
    %cst_34 = arith.constant dense<0.000000e+00> : vector<1x8x8xf32>
    %80 = tpu.matmul %77, %78, %cst_34 {dimension_numbers = #tpu.dot_dimension_numbers<[2], [2], [1], [1], [0, 0, 0, 1, 1, 1], [0], [0]>} : vector<1x8x8xf32>, vector<1x8x8xf32>, vector<1x8x8xf32> -> vector<1x8x8xf32>
    "tpu.trace_stop"() : () -> ()
    %cst_35 = arith.constant dense<0xFF800000> : vector<1x8xf32>
    %81 = vector.multi_reduction <maximumf>, %80, %cst_35 [2] : vector<1x8x8xf32> to vector<1x8xf32>
    %82 = vector.shape_cast %81 : vector<1x8xf32> to vector<1x8x1xf32>
    %83 = vector.broadcast %82 : vector<1x8x1xf32> to vector<1x8x8xf32>
    %84 = arith.subf %80, %83 : vector<1x8x8xf32>
    %85 = math.exp %84 : vector<1x8x8xf32>
    %cst_36 = arith.constant dense<0.000000e+00> : vector<1x8xf32>
    %86 = vector.multi_reduction <add>, %85, %cst_36 [2] : vector<1x8x8xf32> to vector<1x8xf32>
    %87 = vector.shape_cast %86 : vector<1x8xf32> to vector<1x8x1xf32>
    "tpu.trace_start"() <{level = 10 : i32, message = "bqk,bke->bqe"}> : () -> ()
    %cst_37 = arith.constant dense<0.000000e+00> : vector<1x8x8xf32>
    %88 = tpu.matmul %85, %79, %cst_37 {dimension_numbers = #tpu.dot_dimension_numbers<[2], [1], [1], [2], [0, 0, 0, 1, 1, 2], [0], [0]>} : vector<1x8x8xf32>, vector<1x8x8xf32>, vector<1x8x8xf32> -> vector<1x8x8xf32>
    "tpu.trace_stop"() : () -> ()
    %89 = tpu.reciprocal %87 {approx = true} : vector<1x8x1xf32> -> vector<1x8x1xf32>
    %90 = vector.broadcast %89 : vector<1x8x1xf32> to vector<1x8x8xf32>
    %91 = arith.mulf %88, %90 : vector<1x8x8xf32>
    %92 = vector.shape_cast %91 : vector<1x8x8xf32> to vector<8x8xf32>
    %c24 = arith.constant 24 : index
    %c0_38 = arith.constant 0 : index
    %93 = vector.load %arg7[%c24, %c0_38] : memref<32x32xf32, #tpu.memory_space<vmem>>, vector<8x32xf32>
    %cst_39 = arith.constant dense<0.000000e+00> : vector<8x32xf32>
    %94 = tpu.matmul %92, %93, %cst_39 {dimension_numbers = #tpu.dot_dimension_numbers<[1], [0], [0], [1], [0, 0, 1, 1], [], []>} : vector<8x8xf32>, vector<8x32xf32>, vector<8x32xf32> -> vector<8x32xf32>
    %95 = arith.addf %76, %94 : vector<8x32xf32>
    %c0_40 = arith.constant 0 : index
    %c0_41 = arith.constant 0 : index
    %96 = vector.load %arg8[%c0_40, %c0_41] : memref<1x32xf32, #tpu.memory_space<vmem>>, vector<1x32xf32>
    %97 = vector.broadcast %96 : vector<1x32xf32> to vector<8x32xf32>
    %98 = arith.addf %95, %97 : vector<8x32xf32>
    %99 = vector.shape_cast %98 : vector<8x32xf32> to vector<1x8x32xf32>
    %c0_42 = arith.constant 0 : index
    %c0_43 = arith.constant 0 : index
    %c0_44 = arith.constant 0 : index
    %100 = vector.load %arg9[%c0_42, %c0_43, %c0_44] : memref<1x8x32xf32, #tpu.memory_space<vmem>>, vector<1x8x32xf32>
    tpu.vector_store %arg9[%c0_42, %c0_43, %c0_44], %99 {strides = array<i32>} : memref<1x8x32xf32, #tpu.memory_space<vmem>>, vector<1x8x32xf32>,
    return
  }
  func.func @transform_0(%arg0: i32) -> (i32, i32, i32) {
    %c0_i32 = arith.constant 0 : i32
    %c0_i32_0 = arith.constant 0 : i32
    %c0_i32_1 = arith.constant 0 : i32
    return %arg0, %c0_i32, %c0_i32_0 : i32, i32, i32
  }
  func.func @transform_1(%arg0: i32) -> (i32, i32, i32) {
    %c0_i32 = arith.constant 0 : i32
    %c0_i32_0 = arith.constant 0 : i32
    %c0_i32_1 = arith.constant 0 : i32
    return %arg0, %c0_i32, %c0_i32_0 : i32, i32, i32
  }
  func.func @transform_2(%arg0: i32) -> (i32, i32) {
    %c0_i32 = arith.constant 0 : i32
    %c0_i32_0 = arith.constant 0 : i32
    %c0_i32_1 = arith.constant 0 : i32
    return %c0_i32, %c0_i32_0 : i32, i32
  }
  func.func @transform_3(%arg0: i32) -> (i32, i32) {
    %c0_i32 = arith.constant 0 : i32
    %c0_i32_0 = arith.constant 0 : i32
    %c0_i32_1 = arith.constant 0 : i32
    return %c0_i32, %c0_i32_0 : i32, i32
  }
  func.func @transform_4(%arg0: i32) -> (i32, i32) {
    %c0_i32 = arith.constant 0 : i32
    %c0_i32_0 = arith.constant 0 : i32
    %c0_i32_1 = arith.constant 0 : i32
    return %c0_i32, %c0_i32_0 : i32, i32
  }
  func.func @transform_5(%arg0: i32) -> (i32, i32) {
    %c0_i32 = arith.constant 0 : i32
    %c0_i32_0 = arith.constant 0 : i32
    %c0_i32_1 = arith.constant 0 : i32
    return %c0_i32, %c0_i32_0 : i32, i32
  }
  func.func @transform_6(%arg0: i32) -> (i32, i32) {
    %c0_i32 = arith.constant 0 : i32
    %c0_i32_0 = arith.constant 0 : i32
    %c0_i32_1 = arith.constant 0 : i32
    return %c0_i32, %c0_i32_0 : i32, i32
  }
  func.func @transform_7(%arg0: i32) -> (i32, i32) {
    %c0_i32 = arith.constant 0 : i32
    %c0_i32_0 = arith.constant 0 : i32
    %c0_i32_1 = arith.constant 0 : i32
    return %c0_i32, %c0_i32_0 : i32, i32
  }
  func.func @transform_8(%arg0: i32) -> (i32, i32, i32) {
    %c0_i32 = arith.constant 0 : i32
    %c0_i32_0 = arith.constant 0 : i32
    %c0_i32_1 = arith.constant 0 : i32
    return %arg0, %c0_i32, %c0_i32_0 : i32, i32, i32
  }
}

module attributes {stable_mosaic.version = 11 : i64} {
  func.func @cross_attn_kernel(%arg0: i32, %arg1: memref<1x8x32xf32, #tpu.memory_space<vmem>>, %arg2: memref<1x8x32xf32, #tpu.memory_space<vmem>>, %arg3: memref<32x32xf32, #tpu.memory_space<vmem>>, %arg4: memref<1x32xf32, #tpu.memory_space<vmem>>, %arg5: memref<32x64xf32, #tpu.memory_space<vmem>>, %arg6: memref<1x64xf32, #tpu.memory_space<vmem>>, %arg7: memref<32x32xf32, #tpu.memory_space<vmem>>, %arg8: memref<1x32xf32, #tpu.memory_space<vmem>>, %arg9: memref<1x8x32xf32, #tpu.memory_space<vmem>>) attributes {dimension_semantics = [#tpu.dimension_semantics<parallel>], iteration_bounds = array<i64: 2>, scalar_prefetch = 0 : i64, scratch_operands = 0 : i64, tpu.core_type = #tpu.core_type<tc>, window_params = [{transform_indices = @transform_0, window_bounds = array<i64: 1, 8, 32>}, {transform_indices = @transform_1, window_bounds = array<i64: 1, 8, 32>}, {pipeline_mode = #tpu.pipeline_mode<synchronous>, transform_indices = @transform_2, window_bounds = array<i64: 32, 32>}, {pipeline_mode = #tpu.pipeline_mode<synchronous>, transform_indices = @transform_3, window_bounds = array<i64: 1, 32>}, {pipeline_mode = #tpu.pipeline_mode<synchronous>, transform_indices = @transform_4, window_bounds = array<i64: 32, 64>}, {pipeline_mode = #tpu.pipeline_mode<synchronous>, transform_indices = @transform_5, window_bounds = array<i64: 1, 64>}, {pipeline_mode = #tpu.pipeline_mode<synchronous>, transform_indices = @transform_6, window_bounds = array<i64: 32, 32>}, {pipeline_mode = #tpu.pipeline_mode<synchronous>, transform_indices = @transform_7, window_bounds = array<i64: 1, 32>}, {transform_indices = @transform_8, window_bounds = array<i64: 1, 8, 32>}]} {
    %c0 = arith.constant 0 : index
    %c0_0 = arith.constant 0 : index
    %c0_1 = arith.constant 0 : index
    %0 = vector.load %arg1[%c0, %c0_0, %c0_1] : memref<1x8x32xf32, #tpu.memory_space<vmem>>, vector<1x8x32xf32>
    %1 = vector.shape_cast %0 : vector<1x8x32xf32> to vector<8x32xf32>
    %c0_2 = arith.constant 0 : index
    %c0_3 = arith.constant 0 : index
    %c0_4 = arith.constant 0 : index
    %2 = vector.load %arg2[%c0_2, %c0_3, %c0_4] : memref<1x8x32xf32, #tpu.memory_space<vmem>>, vector<1x8x32xf32>
    %3 = vector.shape_cast %2 : vector<1x8x32xf32> to vector<8x32xf32>
    %c0_5 = arith.constant 0 : index
    %c0_6 = arith.constant 0 : index
    %4 = vector.load %arg3[%c0_5, %c0_6] : memref<32x32xf32, #tpu.memory_space<vmem>>, vector<32x32xf32>
    %cst = arith.constant dense<0.000000e+00> : vector<8x32xf32>
    %5 = tpu.matmul %1, %4, %cst {dimension_numbers = #tpu.dot_dimension_numbers<[1], [0], [0], [1], [0, 0, 1, 1], [], []>} : vector<8x32xf32>, vector<32x32xf32>, vector<8x32xf32> -> vector<8x32xf32>
    %c0_7 = arith.constant 0 : index
    %c0_8 = arith.constant 0 : index
    %6 = vector.load %arg4[%c0_7, %c0_8] : memref<1x32xf32, #tpu.memory_space<vmem>>, vector<1x32xf32>
    %7 = vector.broadcast %6 : vector<1x32xf32> to vector<8x32xf32>
    %8 = arith.addf %5, %7 : vector<8x32xf32>
    %c0_9 = arith.constant 0 : index
    %c0_10 = arith.constant 0 : index
    %9 = vector.load %arg5[%c0_9, %c0_10] : memref<32x64xf32, #tpu.memory_space<vmem>>, vector<32x64xf32>
    %cst_11 = arith.constant dense<0.000000e+00> : vector<8x64xf32>
    %10 = tpu.matmul %3, %9, %cst_11 {dimension_numbers = #tpu.dot_dimension_numbers<[1], [0], [0], [1], [0, 0, 1, 1], [], []>} : vector<8x32xf32>, vector<32x64xf32>, vector<8x64xf32> -> vector<8x64xf32>
    %c0_12 = arith.constant 0 : index
    %c0_13 = arith.constant 0 : index
    %11 = vector.load %arg6[%c0_12, %c0_13] : memref<1x64xf32, #tpu.memory_space<vmem>>, vector<1x64xf32>
    %12 = vector.broadcast %11 : vector<1x64xf32> to vector<8x64xf32>
    %13 = arith.addf %10, %12 : vector<8x64xf32>
    %14 = vector.shape_cast %8 : vector<8x32xf32> to vector<1x8x32xf32>
    %15 = vector.extract_strided_slice %13 {offsets = [0, 0], sizes = [8, 32], strides = [1, 1]} : vector<8x64xf32> to vector<8x32xf32>
    %16 = vector.shape_cast %15 : vector<8x32xf32> to vector<1x8x32xf32>
    %17 = vector.extract_strided_slice %13 {offsets = [0, 32], sizes = [8, 32], strides = [1, 1]} : vector<8x64xf32> to vector<8x32xf32>
    %18 = vector.shape_cast %17 : vector<8x32xf32> to vector<1x8x32xf32>
    %cst_14 = arith.constant 0.000000e+00 : f32
    %19 = vector.broadcast %cst_14 : f32 to vector<8x32xf32>
    %20 = vector.extract_strided_slice %14 {offsets = [0, 0, 0], sizes = [1, 8, 8], strides = [1, 1, 1]} : vector<1x8x32xf32> to vector<1x8x8xf32>
    %21 = vector.extract_strided_slice %16 {offsets = [0, 0, 0], sizes = [1, 8, 8], strides = [1, 1, 1]} : vector<1x8x32xf32> to vector<1x8x8xf32>
    %22 = vector.extract_strided_slice %18 {offsets = [0, 0, 0], sizes = [1, 8, 8], strides = [1, 1, 1]} : vector<1x8x32xf32> to vector<1x8x8xf32>
    "tpu.trace_start"() <{level = 10 : i32, message = "bqe,bke->bqk"}> : () -> ()
    %cst_15 = arith.constant dense<0.000000e+00> : vector<1x8x8xf32>
    %23 = tpu.matmul %20, %21, %cst_15 {dimension_numbers = #tpu.dot_dimension_numbers<[2], [2], [1], [1], [0, 0, 0, 1, 1, 1], [0], [0]>} : vector<1x8x8xf32>, vector<1x8x8xf32>, vector<1x8x8xf32> -> vector<1x8x8xf32>
    "tpu.trace_stop"() : () -> ()
    %cst_16 = arith.constant dense<0xFF800000> : vector<1x8xf32>
    %24 = vector.multi_reduction <maximumf>, %23, %cst_16 [2] : vector<1x8x8xf32> to vector<1x8xf32>
    %25 = vector.shape_cast %24 : vector<1x8xf32> to vector<1x8x1xf32>
    %26 = vector.broadcast %25 : vector<1x8x1xf32> to vector<1x8x8xf32>
    %27 = arith.subf %23, %26 : vector<1x8x8xf32>
    %28 = math.exp %27 : vector<1x8x8xf32>
    %cst_17 = arith.constant dense<0.000000e+00> : vector<1x8xf32>
    %29 = vector.multi_reduction <add>, %28, %cst_17 [2] : vector<1x8x8xf32> to vector<1x8xf32>
    %30 = vector.shape_cast %29 : vector<1x8xf32> to vector<1x8x1xf32>
    "tpu.trace_start"() <{level = 10 : i32, message = "bqk,bke->bqe"}> : () -> ()
    %cst_18 = arith.constant dense<0.000000e+00> : vector<1x8x8xf32>
    %31 = tpu.matmul %28, %22, %cst_18 {dimension_numbers = #tpu.dot_dimension_numbers<[2], [1], [1], [2], [0, 0, 0, 1, 1, 2], [0], [0]>} : vector<1x8x8xf32>, vector<1x8x8xf32>, vector<1x8x8xf32> -> vector<1x8x8xf32>
    "tpu.trace_stop"() : () -> ()
    %32 = tpu.reciprocal %30 {approx = true} : vector<1x8x1xf32> -> vector<1x8x1xf32>
    %33 = vector.broadcast %32 : vector<1x8x1xf32> to vector<1x8x8xf32>
    %34 = arith.mulf %31, %33 : vector<1x8x8xf32>
    %35 = vector.shape_cast %34 : vector<1x8x8xf32> to vector<8x8xf32>
    %c0_19 = arith.constant 0 : index
    %c0_20 = arith.constant 0 : index
    %36 = vector.load %arg7[%c0_19, %c0_20] : memref<32x32xf32, #tpu.memory_space<vmem>>, vector<8x32xf32>
    %cst_21 = arith.constant dense<0.000000e+00> : vector<8x32xf32>
    %37 = tpu.matmul %35, %36, %cst_21 {dimension_numbers = #tpu.dot_dimension_numbers<[1], [0], [0], [1], [0, 0, 1, 1], [], []>} : vector<8x8xf32>, vector<8x32xf32>, vector<8x32xf32> -> vector<8x32xf32>
    %38 = arith.addf %19, %37 : vector<8x32xf32>
    %39 = vector.extract_strided_slice %14 {offsets = [0, 0, 8], sizes = [1, 8, 8], strides = [1, 1, 1]} : vector<1x8x32xf32> to vector<1x8x8xf32>
    %40 = vector.extract_strided_slice %16 {offsets = [0, 0, 8], sizes = [1, 8, 8], strides = [1, 1, 1]} : vector<1x8x32xf32> to vector<1x8x8xf32>
    %41 = vector.extract_strided_slice %18 {offsets = [0, 0, 8], sizes = [1, 8, 8], strides = [1, 1, 1]} : vector<1x8x32xf32> to vector<1x8x8xf32>
    "tpu.trace_start"() <{level = 10 : i32, message = "bqe,bke->bqk"}> : () -> ()
    %cst_22 = arith.constant dense<0.000000e+00> : vector<1x8x8xf32>
    %42 = tpu.matmul %39, %40, %cst_22 {dimension_numbers = #tpu.dot_dimension_numbers<[2], [2], [1], [1], [0, 0, 0, 1, 1, 1], [0], [0]>} : vector<1x8x8xf32>, vector<1x8x8xf32>, vector<1x8x8xf32> -> vector<1x8x8xf32>
    "tpu.trace_stop"() : () -> ()
    %cst_23 = arith.constant dense<0xFF800000> : vector<1x8xf32>
    %43 = vector.multi_reduction <maximumf>, %42, %cst_23 [2] : vector<1x8x8xf32> to vector<1x8xf32>
    %44 = vector.shape_cast %43 : vector<1x8xf32> to vector<1x8x1xf32>
    %45 = vector.broadcast %44 : vector<1x8x1xf32> to vector<1x8x8xf32>
    %46 = arith.subf %42, %45 : vector<1x8x8xf32>
    %47 = math.exp %46 : vector<1x8x8xf32>
    %cst_24 = arith.constant dense<0.000000e+00> : vector<1x8xf32>
    %48 = vector.multi_reduction <add>, %47, %cst_24 [2] : vector<1x8x8xf32> to vector<1x8xf32>
    %49 = vector.shape_cast %48 : vector<1x8xf32> to vector<1x8x1xf32>
    "tpu.trace_start"() <{level = 10 : i32, message = "bqk,bke->bqe"}> : () -> ()
    %cst_25 = arith.constant dense<0.000000e+00> : vector<1x8x8xf32>
    %50 = tpu.matmul %47, %41, %cst_25 {dimension_numbers = #tpu.dot_dimension_numbers<[2], [1], [1], [2], [0, 0, 0, 1, 1, 2], [0], [0]>} : vector<1x8x8xf32>, vector<1x8x8xf32>, vector<1x8x8xf32> -> vector<1x8x8xf32>
    "tpu.trace_stop"() : () -> ()
    %51 = tpu.reciprocal %49 {approx = true} : vector<1x8x1xf32> -> vector<1x8x1xf32>
    %52 = vector.broadcast %51 : vector<1x8x1xf32> to vector<1x8x8xf32>
    %53 = arith.mulf %50, %52 : vector<1x8x8xf32>
    %54 = vector.shape_cast %53 : vector<1x8x8xf32> to vector<8x8xf32>
    %c8 = arith.constant 8 : index
    %c0_26 = arith.constant 0 : index
    %55 = vector.load %arg7[%c8, %c0_26] : memref<32x32xf32, #tpu.memory_space<vmem>>, vector<8x32xf32>
    %cst_27 = arith.constant dense<0.000000e+00> : vector<8x32xf32>
    %56 = tpu.matmul %54, %55, %cst_27 {dimension_numbers = #tpu.dot_dimension_numbers<[1], [0], [0], [1], [0, 0, 1, 1], [], []>} : vector<8x8xf32>, vector<8x32xf32>, vector<8x32xf32> -> vector<8x32xf32>
    %57 = arith.addf %38, %56 : vector<8x32xf32>
    %58 = vector.extract_strided_slice %14 {offsets = [0, 0, 16], sizes = [1, 8, 8], strides = [1, 1, 1]} : vector<1x8x32xf32> to vector<1x8x8xf32>
    %59 = vector.extract_strided_slice %16 {offsets = [0, 0, 16], sizes = [1, 8, 8], strides = [1, 1, 1]} : vector<1x8x32xf32> to vector<1x8x8xf32>
    %60 = vector.extract_strided_slice %18 {offsets = [0, 0, 16], sizes = [1, 8, 8], strides = [1, 1, 1]} : vector<1x8x32xf32> to vector<1x8x8xf32>
    "tpu.trace_start"() <{level = 10 : i32, message = "bqe,bke->bqk"}> : () -> ()
    %cst_28 = arith.constant dense<0.000000e+00> : vector<1x8x8xf32>
    %61 = tpu.matmul %58, %59, %cst_28 {dimension_numbers = #tpu.dot_dimension_numbers<[2], [2], [1], [1], [0, 0, 0, 1, 1, 1], [0], [0]>} : vector<1x8x8xf32>, vector<1x8x8xf32>, vector<1x8x8xf32> -> vector<1x8x8xf32>
    "tpu.trace_stop"() : () -> ()
    %cst_29 = arith.constant dense<0xFF800000> : vector<1x8xf32>
    %62 = vector.multi_reduction <maximumf>, %61, %cst_29 [2] : vector<1x8x8xf32> to vector<1x8xf32>
    %63 = vector.shape_cast %62 : vector<1x8xf32> to vector<1x8x1xf32>
    %64 = vector.broadcast %63 : vector<1x8x1xf32> to vector<1x8x8xf32>
    %65 = arith.subf %61, %64 : vector<1x8x8xf32>
    %66 = math.exp %65 : vector<1x8x8xf32>
    %cst_30 = arith.constant dense<0.000000e+00> : vector<1x8xf32>
    %67 = vector.multi_reduction <add>, %66, %cst_30 [2] : vector<1x8x8xf32> to vector<1x8xf32>
    %68 = vector.shape_cast %67 : vector<1x8xf32> to vector<1x8x1xf32>
    "tpu.trace_start"() <{level = 10 : i32, message = "bqk,bke->bqe"}> : () -> ()
    %cst_31 = arith.constant dense<0.000000e+00> : vector<1x8x8xf32>
    %69 = tpu.matmul %66, %60, %cst_31 {dimension_numbers = #tpu.dot_dimension_numbers<[2], [1], [1], [2], [0, 0, 0, 1, 1, 2], [0], [0]>} : vector<1x8x8xf32>, vector<1x8x8xf32>, vector<1x8x8xf32> -> vector<1x8x8xf32>
    "tpu.trace_stop"() : () -> ()
    %70 = tpu.reciprocal %68 {approx = true} : vector<1x8x1xf32> -> vector<1x8x1xf32>
    %71 = vector.broadcast %70 : vector<1x8x1xf32> to vector<1x8x8xf32>
    %72 = arith.mulf %69, %71 : vector<1x8x8xf32>
    %73 = vector.shape_cast %72 : vector<1x8x8xf32> to vector<8x8xf32>
    %c16 = arith.constant 16 : index
    %c0_32 = arith.constant 0 : index
    %74 = vector.load %arg7[%c16, %c0_32] : memref<32x32xf32, #tpu.memory_space<vmem>>, vector<8x32xf32>
    %cst_33 = arith.constant dense<0.000000e+00> : vector<8x32xf32>
    %75 = tpu.matmul %73, %74, %cst_33 {dimension_numbers = #tpu.dot_dimension_numbers<[1], [0], [0], [1], [0, 0, 1, 1], [], []>} : vector<8x8xf32>, vector<8x32xf32>, vector<8x32xf32> -> vector<8x32xf32>
    %76 = arith.addf %57, %75 : vector<8x32xf32>
    %77 = vector.extract_strided_slice %14 {offsets = [0, 0, 24], sizes = [1, 8, 8], strides = [1, 1, 1]} : vector<1x8x32xf32> to vector<1x8x8xf32>
    %78 = vector.extract_strided_slice %16 {offsets = [0, 0, 24], sizes = [1, 8, 8], strides = [1, 1, 1]} : vector<1x8x32xf32> to vector<1x8x8xf32>
    %79 = vector.extract_strided_slice %18 {offsets = [0, 0, 24], sizes = [1, 8, 8], strides = [1, 1, 1]} : vector<1x8x32xf32> to vector<1x8x8xf32>
    "tpu.trace_start"() <{level = 10 : i32, message = "bqe,bke->bqk"}> : () -> ()
    %cst_34 = arith.constant dense<0.000000e+00> : vector<1x8x8xf32>
    %80 = tpu.matmul %77, %78, %cst_34 {dimension_numbers = #tpu.dot_dimension_numbers<[2], [2], [1], [1], [0, 0, 0, 1, 1, 1], [0], [0]>} : vector<1x8x8xf32>, vector<1x8x8xf32>, vector<1x8x8xf32> -> vector<1x8x8xf32>
    "tpu.trace_stop"() : () -> ()
    %cst_35 = arith.constant dense<0xFF800000> : vector<1x8xf32>
    %81 = vector.multi_reduction <maximumf>, %80, %cst_35 [2] : vector<1x8x8xf32> to vector<1x8xf32>
    %82 = vector.shape_cast %81 : vector<1x8xf32> to vector<1x8x1xf32>
    %83 = vector.broadcast %82 : vector<1x8x1xf32> to vector<1x8x8xf32>
    %84 = arith.subf %80, %83 : vector<1x8x8xf32>
    %85 = math.exp %84 : vector<1x8x8xf32>
    %cst_36 = arith.constant dense<0.000000e+00> : vector<1x8xf32>
    %86 = vector.multi_reduction <add>, %85, %cst_36 [2] : vector<1x8x8xf32> to vector<1x8xf32>
    %87 = vector.shape_cast %86 : vector<1x8xf32> to vector<1x8x1xf32>
    "tpu.trace_start"() <{level = 10 : i32, message = "bqk,bke->bqe"}> : () -> ()
    %cst_37 = arith.constant dense<0.000000e+00> : vector<1x8x8xf32>
    %88 = tpu.matmul %85, %79, %cst_37 {dimension_numbers = #tpu.dot_dimension_numbers<[2], [1], [1], [2], [0, 0, 0, 1, 1, 2], [0], [0]>} : vector<1x8x8xf32>, vector<1x8x8xf32>, vector<1x8x8xf32> -> vector<1x8x8xf32>
    "tpu.trace_stop"() : () -> ()
    %89 = tpu.reciprocal %87 {approx = true} : vector<1x8x1xf32> -> vector<1x8x1xf32>
    %90 = vector.broadcast %89 : vector<1x8x1xf32> to vector<1x8x8xf32>
    %91 = arith.mulf %88, %90 : vector<1x8x8xf32>
    %92 = vector.shape_cast %91 : vector<1x8x8xf32> to vector<8x8xf32>
    %c24 = arith.constant 24 : index
    %c0_38 = arith.constant 0 : index
    %93 = vector.load %arg7[%c24, %c0_38] : memref<32x32xf32, #tpu.memory_space<vmem>>, vector<8x32xf32>
    %cst_39 = arith.constant dense<0.000000e+00> : vector<8x32xf32>
    %94 = tpu.matmul %92, %93, %cst_39 {dimension_numbers = #tpu.dot_dimension_numbers<[1], [0], [0], [1], [0, 0, 1, 1], [], []>} : vector<8x8xf32>, vector<8x32xf32>, vector<8x32xf32> -> vector<8x32xf32>
    %95 = arith.addf %76, %94 : vector<8x32xf32>
    %c0_40 = arith.constant 0 : index
    %c0_41 = arith.constant 0 : index
    %96 = vector.load %arg8[%c0_40, %c0_41] : memref<1x32xf32, #tpu.memory_space<vmem>>, vector<1x32xf32>
    %97 = vector.broadcast %96 : vector<1x32xf32> to vector<8x32xf32>
    %98 = arith.addf %95, %97 : vector<8x32xf32>
    %99 = vector.shape_cast %98 : vector<8x32xf32> to vector<1x8x32xf32>
    %c0_42 = arith.constant 0 : index
    %c0_43 = arith.constant 0 : index
    %c0_44 = arith.constant 0 : index
    %100 = vector.load %arg9[%c0_42, %c0_43, %c0_44] : memref<1x8x32xf32, #tpu.memory_space<vmem>>, vector<1x8x32xf32>
    tpu.vector_store %arg9[%c0_42, %c0_43, %c0_44], %99 {strides = array<i32>} : memref<1x8x32xf32, #tpu.memory_space<vmem>>, vector<1x8x32xf32>,
    return
  }
  func.func @transform_0(%arg0: i32) -> (i32, i32, i32) {
    %c0_i32 = arith.constant 0 : i32
    %c0_i32_0 = arith.constant 0 : i32
    %c0_i32_1 = arith.constant 0 : i32
    return %arg0, %c0_i32, %c0_i32_0 : i32, i32, i32
  }
  func.func @transform_1(%arg0: i32) -> (i32, i32, i32) {
    %c0_i32 = arith.constant 0 : i32
    %c0_i32_0 = arith.constant 0 : i32
    %c0_i32_1 = arith.constant 0 : i32
    return %arg0, %c0_i32, %c0_i32_0 : i32, i32, i32
  }
  func.func @transform_2(%arg0: i32) -> (i32, i32) {
    %c0_i32 = arith.constant 0 : i32
    %c0_i32_0 = arith.constant 0 : i32
    %c0_i32_1 = arith.constant 0 : i32
    return %c0_i32, %c0_i32_0 : i32, i32
  }
  func.func @transform_3(%arg0: i32) -> (i32, i32) {
    %c0_i32 = arith.constant 0 : i32
    %c0_i32_0 = arith.constant 0 : i32
    %c0_i32_1 = arith.constant 0 : i32
    return %c0_i32, %c0_i32_0 : i32, i32
  }
  func.func @transform_4(%arg0: i32) -> (i32, i32) {
    %c0_i32 = arith.constant 0 : i32
    %c0_i32_0 = arith.constant 0 : i32
    %c0_i32_1 = arith.constant 0 : i32
    return %c0_i32, %c0_i32_0 : i32, i32
  }
  func.func @transform_5(%arg0: i32) -> (i32, i32) {
    %c0_i32 = arith.constant 0 : i32
    %c0_i32_0 = arith.constant 0 : i32
    %c0_i32_1 = arith.constant 0 : i32
    return %c0_i32, %c0_i32_0 : i32, i32
  }
  func.func @transform_6(%arg0: i32) -> (i32, i32) {
    %c0_i32 = arith.constant 0 : i32
    %c0_i32_0 = arith.constant 0 : i32
    %c0_i32_1 = arith.constant 0 : i32
    return %c0_i32, %c0_i32_0 : i32, i32
  }
  func.func @transform_7(%arg0: i32) -> (i32, i32) {
    %c0_i32 = arith.constant 0 : i32
    %c0_i32_0 = arith.constant 0 : i32
    %c0_i32_1 = arith.constant 0 : i32
    return %c0_i32, %c0_i32_0 : i32, i32
  }
  func.func @transform_8(%arg0: i32) -> (i32, i32, i32) {
    %c0_i32 = arith.constant 0 : i32
    %c0_i32_0 = arith.constant 0 : i32
    %c0_i32_1 = arith.constant 0 : i32
    return %arg0, %c0_i32, %c0_i32_0 : i32, i32, i32
  }
}

</mosaic_0001>

<llo_original>
// kernel: tpu_custom_call.1
$region0: #{tpu_custom_call.1}
  #allocation0 [shape = 'u32[]', space=smem, size = 0x4, offset = 0x4, fixed_abs, tag = 'smem constant byte address 0x4 - core index']
  #allocation1 [shape = 'u32[144,128]{1,0:T(1,128)}', space=vmem, size = 0x12000, scoped, tag = 'internal scratch']
  %s0 = inlined_call_operand.hbm [shape: f32[2,8,32], index: 0, kind: input, shape index: {}]
  %s1 = inlined_call_operand.hbm [shape: f32[2,8,32], index: 1, kind: input, shape index: {}]
  %s2 = inlined_call_operand.hbm [shape: f32[32,32], index: 2, kind: input, shape index: {}]
  %s3 = inlined_call_operand.vmem [shape: f32[1,32], index: 3, kind: input, shape index: {}]
  %s4 = inlined_call_operand.hbm [shape: f32[32,64], index: 4, kind: input, shape index: {}]
  %s5 = inlined_call_operand.vmem [shape: f32[1,64], index: 5, kind: input, shape index: {}]
  %s6 = inlined_call_operand.hbm [shape: f32[32,32], index: 6, kind: input, shape index: {}]
  %s7 = inlined_call_operand.vmem [shape: f32[1,32], index: 7, kind: input, shape index: {}]
  %s8 = inlined_call_operand.hbm [shape: f32[2,8,32], index: 8, kind: output, shape index: {}]
  %s9 = sld [smem:[#allocation0]]
  $region85: #{tpu_custom_call.1} parent=0
    _
  %s11 = ssub.s32 1, %s9
  %s12 = scalar_select 0, %s11, %s9
  $region1: #{tpu_custom_call.1} parent=0
    #allocation2 [shape = 'u8[8192]{0}', space=vmem, size = 0x2000, scoped, tag = 'input window, operand 0']
    #allocation3 [shape = 's32[2]{0}', space=sflag, size = 0x8, scoped, tag = 'scoped memory for tpu_custom_call.1']
    #allocation4 [shape = 's32[2]{0}', space=sflag, size = 0x8, scoped, tag = 'scoped memory for tpu_custom_call.1']
    #allocation5 [shape = 'u8[8192]{0}', space=vmem, size = 0x2000, scoped, tag = 'input window, operand 1']
    #allocation6 [shape = 's32[2]{0}', space=sflag, size = 0x8, scoped, tag = 'scoped memory for tpu_custom_call.1']
    #allocation7 [shape = 'u8[16384]{0}', space=vmem, size = 0x4000, scoped, tag = 'input window, operand 2, single buffered']
    #allocation8 [shape = 'u8[16384]{0}', space=vmem, size = 0x4000, scoped, tag = 'input window, operand 4, single buffered']
    #allocation9 [shape = 's32[1]{0}', space=sflag, size = 0x4, scoped, tag = 'scoped memory for tpu_custom_call.1']
    #allocation10 [shape = 'u8[16384]{0}', space=vmem, size = 0x4000, scoped, tag = 'input window, operand 6, single buffered']
    #allocation11 [shape = 'u8[8192]{0}', space=vmem, size = 0x2000, scoped, tag = 'output window, operand 0']
    %13 = vsyncpa [#allocation3], 0
    %s14 = scalar_lea.sflag [#allocation3], 1
    %15 = vsyncpa %s14, 0
    %16 = vsyncpa [#allocation6], 0
    %s17 = scalar_lea.sflag [#allocation6], 1
    %18 = vsyncpa %s17, 0
    %19 = vsyncpa [#allocation9], 0
    %20 = vsyncpa [#allocation4], 0
    %s21 = scalar_lea.sflag [#allocation4], 1
    %22 = vsyncpa %s21, 0
    loop: start=0, step=1, limit=4
    $region2: #{tpu_custom_call.1} parent=1 // loop_pre_header
      _
    $region3: #{tpu_custom_call.1} parent=1 // loop_header
      %s24 = sphi 0, %s28
      %p25 = scmp.ge.s32.totalorder %s24, 4
      %s34 = sphi 0, %s36
      %s37 = sphi 0, %s34
      %s38 = sphi 0, %s37
      %s54 = sphi 0, %s38
      %s60 = sphi 0, %s62
      %s63 = sphi 0, %s60
      %s64 = sphi 0, %s63
      %s80 = sphi 0, %s64
      %s84 = sphi 0, %s84
      %s86 = sphi 0, %s84
      %s87 = sphi 0, %s86
      %s101 = sphi 0, %s87
      %s105 = sphi 0, %s105
      %s107 = sphi 0, %s105
      %s108 = sphi 0, %s107
      %s122 = sphi 0, %s108
      %s126 = sphi 0, %s126
      %s128 = sphi 0, %s126
      %s129 = sphi 0, %s128
      %s143 = sphi 0, %s129
      %s147 = sphi 0, %s147
      %s149 = sphi 0, %s147
      %s150 = sphi 0, %s149
      %s164 = sphi 0, %s150
      %s168 = sphi 0, %s168
      %s170 = sphi 0, %s168
      %s171 = sphi 0, %s170
      %s185 = sphi 0, %s171
      %s189 = sphi 0, %s189
      %s191 = sphi 0, %s189
      %s192 = sphi 0, %s191
      %s206 = sphi 0, %s192
      %s212 = sphi 0, %s214
      %s215 = sphi 0, %s212
      %s216 = sphi 0, %s215
      %s232 = sphi 0, %s216
    $region4: #{tpu_custom_call.1} parent=1 // loop_header_branch
      %27 = sbr.rel (%p25) target = $region8
    $region5: #{tpu_custom_call.1} parent=1 // loop_body
      %s29 = ssub.s32 %s24, 1
      %s30 = ssub.s32 %s24, 2
      %s31 = sadd.s32 %s24, 1
      %s32 = ssub.s32 %s24, %s31
      %p33 = scmp.eq.s32.totalorder %s32, 0
      %s35 = sadd.s32 %s34, 1
      %s36 = scalar_select %p33, %s34, %s35
      %p39 = pneg %p33
      %p40 = scmp.eq.s32.totalorder %s24, 1
      %p41 = por %p39, %p40
      %p42 = scmp.ne.s32.totalorder %s34, %s37
      %p43 = scmp.eq.s32.totalorder %s24, 0
      %p44 = por %p42, %p43
      %p45 = scmp.ne.s32.totalorder %s34, %s37
      %p46 = scmp.eq.s32.totalorder %s29, 1
      %p47 = por %p45, %p46
      %p48 = scmp.ne.s32.totalorder %s37, %s38
      %p49 = scmp.eq.s32.totalorder %s29, 0
      %p50 = por %p48, %p49
      %p51 = scmp.ne.s32.totalorder %s37, %s38
      %p52 = scmp.eq.s32.totalorder %s30, 1
      %p53 = por %p51, %p52
      %p55 = scmp.ne.s32.totalorder %s38, %s54
      %p56 = scmp.eq.s32.totalorder %s30, 0
      %p57 = por %p55, %p56
      %s58 = ssub.s32 %s24, %s31
      %p59 = scmp.eq.s32.totalorder %s58, 0
      %s61 = sadd.s32 %s60, 1
      %s62 = scalar_select %p59, %s60, %s61
      %p65 = pneg %p59
      %p66 = scmp.eq.s32.totalorder %s24, 1
      %p67 = por %p65, %p66
      %p68 = scmp.ne.s32.totalorder %s60, %s63
      %p69 = scmp.eq.s32.totalorder %s24, 0
      %p70 = por %p68, %p69
      %p71 = scmp.ne.s32.totalorder %s60, %s63
      %p72 = scmp.eq.s32.totalorder %s29, 1
      %p73 = por %p71, %p72
      %p74 = scmp.ne.s32.totalorder %s63, %s64
      %p75 = scmp.eq.s32.totalorder %s29, 0
      %p76 = por %p74, %p75
      %p77 = scmp.ne.s32.totalorder %s63, %s64
      %p78 = scmp.eq.s32.totalorder %s30, 1
      %p79 = por %p77, %p78
      %p81 = scmp.ne.s32.totalorder %s64, %s80
      %p82 = scmp.eq.s32.totalorder %s30, 0
      %p83 = por %p81, %p82
      %s85 = sadd.s32 %s84, 1
      %p88 = scmp.eq.s32.totalorder %s24, 1
      %p89 = scmp.ne.s32.totalorder %s84, %s86
      %p90 = scmp.eq.s32.totalorder %s24, 0
      %p91 = por %p89, %p90
      %p92 = scmp.ne.s32.totalorder %s84, %s86
      %p93 = scmp.eq.s32.totalorder %s29, 1
      %p94 = por %p92, %p93
      %p95 = scmp.ne.s32.totalorder %s86, %s87
      %p96 = scmp.eq.s32.totalorder %s29, 0
      %p97 = por %p95, %p96
      %p98 = scmp.ne.s32.totalorder %s86, %s87
      %p99 = scmp.eq.s32.totalorder %s30, 1
      %p100 = por %p98, %p99
      %p102 = scmp.ne.s32.totalorder %s87, %s101
      %p103 = scmp.eq.s32.totalorder %s30, 0
      %p104 = por %p102, %p103
      %s106 = sadd.s32 %s105, 1
      %p109 = scmp.eq.s32.totalorder %s24, 1
      %p110 = scmp.ne.s32.totalorder %s105, %s107
      %p111 = scmp.eq.s32.totalorder %s24, 0
      %p112 = por %p110, %p111
      %p113 = scmp.ne.s32.totalorder %s105, %s107
      %p114 = scmp.eq.s32.totalorder %s29, 1
      %p115 = por %p113, %p114
      %p116 = scmp.ne.s32.totalorder %s107, %s108
      %p117 = scmp.eq.s32.totalorder %s29, 0
      %p118 = por %p116, %p117
      %p119 = scmp.ne.s32.totalorder %s107, %s108
      %p120 = scmp.eq.s32.totalorder %s30, 1
      %p121 = por %p119, %p120
      %p123 = scmp.ne.s32.totalorder %s108, %s122
      %p124 = scmp.eq.s32.totalorder %s30, 0
      %p125 = por %p123, %p124
      %s127 = sadd.s32 %s126, 1
      %p130 = scmp.eq.s32.totalorder %s24, 1
      %p131 = scmp.ne.s32.totalorder %s126, %s128
      %p132 = scmp.eq.s32.totalorder %s24, 0
      %p133 = por %p131, %p132
      %p134 = scmp.ne.s32.totalorder %s126, %s128
      %p135 = scmp.eq.s32.totalorder %s29, 1
      %p136 = por %p134, %p135
      %p137 = scmp.ne.s32.totalorder %s128, %s129
      %p138 = scmp.eq.s32.totalorder %s29, 0
      %p139 = por %p137, %p138
      %p140 = scmp.ne.s32.totalorder %s128, %s129
      %p141 = scmp.eq.s32.totalorder %s30, 1
      %p142 = por %p140, %p141
      %p144 = scmp.ne.s32.totalorder %s129, %s143
      %p145 = scmp.eq.s32.totalorder %s30, 0
      %p146 = por %p144, %p145
      %s148 = sadd.s32 %s147, 1
      %p151 = scmp.eq.s32.totalorder %s24, 1
      %p152 = scmp.ne.s32.totalorder %s147, %s149
      %p153 = scmp.eq.s32.totalorder %s24, 0
      %p154 = por %p152, %p153
      %p155 = scmp.ne.s32.totalorder %s147, %s149
      %p156 = scmp.eq.s32.totalorder %s29, 1
      %p157 = por %p155, %p156
      %p158 = scmp.ne.s32.totalorder %s149, %s150
      %p159 = scmp.eq.s32.totalorder %s29, 0
      %p160 = por %p158, %p159
      %p161 = scmp.ne.s32.totalorder %s149, %s150
      %p162 = scmp.eq.s32.totalorder %s30, 1
      %p163 = por %p161, %p162
      %p165 = scmp.ne.s32.totalorder %s150, %s164
      %p166 = scmp.eq.s32.totalorder %s30, 0
      %p167 = por %p165, %p166
      %s169 = sadd.s32 %s168, 1
      %p172 = scmp.eq.s32.totalorder %s24, 1
      %p173 = scmp.ne.s32.totalorder %s168, %s170
      %p174 = scmp.eq.s32.totalorder %s24, 0
      %p175 = por %p173, %p174
      %p176 = scmp.ne.s32.totalorder %s168, %s170
      %p177 = scmp.eq.s32.totalorder %s29, 1
      %p178 = por %p176, %p177
      %p179 = scmp.ne.s32.totalorder %s170, %s171
      %p180 = scmp.eq.s32.totalorder %s29, 0
      %p181 = por %p179, %p180
      %p182 = scmp.ne.s32.totalorder %s170, %s171
      %p183 = scmp.eq.s32.totalorder %s30, 1
      %p184 = por %p182, %p183
      %p186 = scmp.ne.s32.totalorder %s171, %s185
      %p187 = scmp.eq.s32.totalorder %s30, 0
      %p188 = por %p186, %p187
      %s190 = sadd.s32 %s189, 1
      %p193 = scmp.eq.s32.totalorder %s24, 1
      %p194 = scmp.ne.s32.totalorder %s189, %s191
      %p195 = scmp.eq.s32.totalorder %s24, 0
      %p196 = por %p194, %p195
      %p197 = scmp.ne.s32.totalorder %s189, %s191
      %p198 = scmp.eq.s32.totalorder %s29, 1
      %p199 = por %p197, %p198
      %p200 = scmp.ne.s32.totalorder %s191, %s192
      %p201 = scmp.eq.s32.totalorder %s29, 0
      %p202 = por %p200, %p201
      %p203 = scmp.ne.s32.totalorder %s191, %s192
      %p204 = scmp.eq.s32.totalorder %s30, 1
      %p205 = por %p203, %p204
      %p207 = scmp.ne.s32.totalorder %s192, %s206
      %p208 = scmp.eq.s32.totalorder %s30, 0
      %p209 = por %p207, %p208
      %s210 = ssub.s32 %s24, %s31
      %p211 = scmp.eq.s32.totalorder %s210, 0
      %s213 = sadd.s32 %s212, 1
      %s214 = scalar_select %p211, %s212, %s213
      %p217 = pneg %p211
      %p218 = scmp.eq.s32.totalorder %s24, 1
      %p219 = por %p217, %p218
      %p220 = scmp.ne.s32.totalorder %s212, %s215
      %p221 = scmp.eq.s32.totalorder %s24, 0
      %p222 = por %p220, %p221
      %p223 = scmp.ne.s32.totalorder %s212, %s215
      %p224 = scmp.eq.s32.totalorder %s29, 1
      %p225 = por %p223, %p224
      %p226 = scmp.ne.s32.totalorder %s215, %s216
      %p227 = scmp.eq.s32.totalorder %s29, 0
      %p228 = por %p226, %p227
      %p229 = scmp.ne.s32.totalorder %s215, %s216
      %p230 = scmp.eq.s32.totalorder %s30, 1
      %p231 = por %p229, %p230
      %p233 = scmp.ne.s32.totalorder %s216, %s232
      %p234 = scmp.eq.s32.totalorder %s30, 0
      %p235 = por %p233, %p234
      %p236 = scmp.le.s32.totalorder 1, %s24
      %p237 = scmp.lt.s32.totalorder %s24, 3
      %p238 = pnand %p236, %p237
      %p239 = pneg %p238
      // Predicated region
      $region9: #{tpu_custom_call.1} parent=5 // pred_check
        _
      $region10: #{tpu_custom_call.1} parent=5 // pred_check_branch
        %241 = sbr.rel (%p238) target = $region12
      $region11: #{tpu_custom_call.1} parent=5 // pred_region
        %s242 = ssub.s32 %s24, 1
        // Predicated region
        $region13: #{tpu_custom_call.1} parent=11 // pred_check
          %p243 = pneg %p97
        $region14: #{tpu_custom_call.1} parent=11 // pred_check_branch
          %245 = sbr.rel (%p243) target = $region16
        $region15: #{tpu_custom_call.1} parent=11 // pred_region
          %s247 = ssub.s32 512, 512
          %248 = vsyncadd [#allocation6], %s247
          %s249 = sshll.u32 [#allocation7], 4
          %s250 = int_to_ptr.vmem [resolvable:$true] %s249
          %255 = dma.hbm_to_vmem [thread:$0]  %s2, 512, %s250, [#allocation6], 128, 128, 8
        $region16: #{tpu_custom_call.1} parent=11 // pred_fallthru
          _
        // Predicated region
        $region17: #{tpu_custom_call.1} parent=11 // pred_check
          %p256 = pneg %p118
        $region18: #{tpu_custom_call.1} parent=11 // pred_check_branch
          %258 = sbr.rel (%p256) target = $region20
        $region19: #{tpu_custom_call.1} parent=11 // pred_region
          _
        $region20: #{tpu_custom_call.1} parent=11 // pred_fallthru
          _
        // Predicated region
        $region21: #{tpu_custom_call.1} parent=11 // pred_check
          %p259 = pneg %p139
        $region22: #{tpu_custom_call.1} parent=11 // pred_check_branch
          %261 = sbr.rel (%p259) target = $region24
        $region23: #{tpu_custom_call.1} parent=11 // pred_region
          %s263 = ssub.s32 512, 512
          %264 = vsyncadd [#allocation9], %s263
          %s265 = sshll.u32 [#allocation8], 4
          %s266 = int_to_ptr.vmem [resolvable:$true] %s265
          %271 = dma.hbm_to_vmem [thread:$0]  %s4, 512, %s266, [#allocation9], 128, 128, 8
        $region24: #{tpu_custom_call.1} parent=11 // pred_fallthru
          _
        // Predicated region
        $region25: #{tpu_custom_call.1} parent=11 // pred_check
          %p272 = pneg %p160
        $region26: #{tpu_custom_call.1} parent=11 // pred_check_branch
          %274 = sbr.rel (%p272) target = $region28
        $region27: #{tpu_custom_call.1} parent=11 // pred_region
          _
        $region28: #{tpu_custom_call.1} parent=11 // pred_fallthru
          _
        // Predicated region
        $region29: #{tpu_custom_call.1} parent=11 // pred_check
          %p275 = pneg %p181
        $region30: #{tpu_custom_call.1} parent=11 // pred_check_branch
          %277 = sbr.rel (%p275) target = $region32
        $region31: #{tpu_custom_call.1} parent=11 // pred_region
          %s279 = ssub.s32 512, 512
          %280 = vsyncadd [#allocation9], %s279
          %s281 = sshll.u32 [#allocation10], 4
          %s282 = int_to_ptr.vmem [resolvable:$true] %s281
          %287 = dma.hbm_to_vmem [thread:$0]  %s6, 512, %s282, [#allocation9], 128, 128, 8
        $region32: #{tpu_custom_call.1} parent=11 // pred_fallthru
          _
        // Predicated region
        $region33: #{tpu_custom_call.1} parent=11 // pred_check
          %p288 = pneg %p202
        $region34: #{tpu_custom_call.1} parent=11 // pred_check_branch
          %290 = sbr.rel (%p288) target = $region36
        $region35: #{tpu_custom_call.1} parent=11 // pred_region
          _
        $region36: #{tpu_custom_call.1} parent=11 // pred_fallthru
          _
      $region12: #{tpu_custom_call.1} parent=5 // pred_fallthru
        _
      %p291 = scmp.lt.s32.totalorder %s24, 2
      // Predicated region
      $region37: #{tpu_custom_call.1} parent=5 // pred_check
        %p292 = pneg %p291
      $region38: #{tpu_custom_call.1} parent=5 // pred_check_branch
        %294 = sbr.rel (%p292) target = $region40
      $region39: #{tpu_custom_call.1} parent=5 // pred_region
        // Predicated region
        $region41: #{tpu_custom_call.1} parent=39 // pred_check
          %p295 = pneg %p44
        $region42: #{tpu_custom_call.1} parent=39 // pred_check_branch
          %297 = sbr.rel (%p295) target = $region44
        $region43: #{tpu_custom_call.1} parent=39 // pred_region
          %s298 = sand.u32 %s34, 1
          %s299 = scalar_lea.sflag [#allocation3], %s298
          %s300 = sand.u32 %s34, 1
          %s301 = smul.addr %s300, 8
          %s302 = scalar_lea.vmem [#allocation2], %s301
          %s304 = ssub.s32 128, 128
          %305 = vsyncadd %s299, %s304
          %s306 = smul.addr %s24, 128
          %s307 = scalar_lea.hbm %s0, %s306
          %s309 = sshll.u32 %s302, 4
          %s310 = int_to_ptr.vmem [resolvable:$true] %s309
          %312 = dma.hbm_to_vmem [thread:$0]  %s307, 128, %s310, %s299
        $region44: #{tpu_custom_call.1} parent=39 // pred_fallthru
          _
        // Predicated region
        $region45: #{tpu_custom_call.1} parent=39 // pred_check
          %p313 = pneg %p70
        $region46: #{tpu_custom_call.1} parent=39 // pred_check_branch
          %315 = sbr.rel (%p313) target = $region48
        $region47: #{tpu_custom_call.1} parent=39 // pred_region
          %s316 = sand.u32 %s24, 1
          %s317 = scalar_lea.sflag [#allocation6], %s316
          %s318 = sand.u32 %s60, 1
          %s319 = smul.addr %s318, 8
          %s320 = scalar_lea.vmem [#allocation5], %s319
          %s322 = ssub.s32 128, 128
          %323 = vsyncadd %s317, %s322
          %s324 = smul.addr %s24, 128
          %s325 = scalar_lea.hbm %s1, %s324
          %s327 = sshll.u32 %s320, 4
          %s328 = int_to_ptr.vmem [resolvable:$true] %s327
          %330 = dma.hbm_to_vmem [thread:$0]  %s325, 128, %s328, %s317
        $region48: #{tpu_custom_call.1} parent=39 // pred_fallthru
          _
      $region40: #{tpu_custom_call.1} parent=5 // pred_fallthru
        _
      %p331 = scmp.le.s32.totalorder 1, %s24
      %p332 = scmp.lt.s32.totalorder %s24, 3
      %p333 = pnand %p331, %p332
      %p334 = pneg %p333
      // Predicated region
      $region49: #{tpu_custom_call.1} parent=5 // pred_check
        _
      $region50: #{tpu_custom_call.1} parent=5 // pred_check_branch
        %336 = sbr.rel (%p333) target = $region52
      $region51: #{tpu_custom_call.1} parent=5 // pred_region
        %s337 = ssub.s32 %s24, 1
        %s338 = sand.u32 %s37, 1
        %s339 = scalar_lea.sflag [#allocation3], %s338
        %s340 = sand.u32 %s37, 1
        %s341 = smul.addr %s340, 8
        %s342 = scalar_lea.vmem [#allocation2], %s341
        // Predicated region
        $region53: #{tpu_custom_call.1} parent=51 // pred_check
          %p343 = pneg %p50
        $region54: #{tpu_custom_call.1} parent=51 // pred_check_branch
          %345 = sbr.rel (%p343) target = $region56
        $region55: #{tpu_custom_call.1} parent=51 // pred_region
          %346 = dma.done %s339, 128
        $region56: #{tpu_custom_call.1} parent=51 // pred_fallthru
          _
        %s347 = sand.u32 %s29, 1
        %s348 = scalar_lea.sflag [#allocation6], %s347
        %s349 = sand.u32 %s63, 1
        %s350 = smul.addr %s349, 8
        %s351 = scalar_lea.vmem [#allocation5], %s350
        // Predicated region
        $region57: #{tpu_custom_call.1} parent=51 // pred_check
          %p352 = pneg %p76
        $region58: #{tpu_custom_call.1} parent=51 // pred_check_branch
          %354 = sbr.rel (%p352) target = $region60
        $region59: #{tpu_custom_call.1} parent=51 // pred_region
          %355 = dma.done %s348, 128
        $region60: #{tpu_custom_call.1} parent=51 // pred_fallthru
          _
        // Predicated region
        $region61: #{tpu_custom_call.1} parent=51 // pred_check
          %p356 = pneg %p97
        $region62: #{tpu_custom_call.1} parent=51 // pred_check_branch
          %358 = sbr.rel (%p356) target = $region64
        $region63: #{tpu_custom_call.1} parent=51 // pred_region
          %359 = dma.done [#allocation6], 512
        $region64: #{tpu_custom_call.1} parent=51 // pred_fallthru
          _
        // Predicated region
        $region65: #{tpu_custom_call.1} parent=51 // pred_check
          %p360 = pneg %p139
        $region66: #{tpu_custom_call.1} parent=51 // pred_check_branch
          %362 = sbr.rel (%p360) target = $region68
        $region67: #{tpu_custom_call.1} parent=51 // pred_region
          %363 = dma.done [#allocation9], 512
        $region68: #{tpu_custom_call.1} parent=51 // pred_fallthru
          _
        // Predicated region
        $region69: #{tpu_custom_call.1} parent=51 // pred_check
          %p364 = pneg %p181
        $region70: #{tpu_custom_call.1} parent=51 // pred_check_branch
          %366 = sbr.rel (%p364) target = $region72
        $region71: #{tpu_custom_call.1} parent=51 // pred_region
          %367 = dma.done [#allocation9], 512
        $region72: #{tpu_custom_call.1} parent=51 // pred_fallthru
          _
        %s368 = sand.u32 %s37, 1
        %s369 = scalar_lea.sflag [#allocation3], %s368
        %s370 = sand.u32 %s37, 1
        %s371 = smul.addr %s370, 8
        %s372 = scalar_lea.vmem [#allocation2], %s371
        %p373 = pneg %p50
        %p374 = pneg %p47
        %s375 = sand.u32 %s29, 1
        %s376 = scalar_lea.sflag [#allocation6], %s375
        %s377 = sand.u32 %s63, 1
        %s378 = smul.addr %s377, 8
        %s379 = scalar_lea.vmem [#allocation5], %s378
        %p380 = pneg %p76
        %p381 = pneg %p73
        %p382 = pneg %p97
        %p383 = pneg %p94
        %p384 = pneg %p118
        %p385 = pneg %p115
        %p386 = pneg %p139
        %p387 = pneg %p136
        %p388 = pneg %p160
        %p389 = pneg %p157
        %p390 = pneg %p181
        %p391 = pneg %p178
        %p392 = pneg %p202
        %p393 = pneg %p199
        %p394 = pneg %p228
        %p395 = pneg %p225
        %s396 = sand.u32 %s215, 1
        %s397 = scalar_lea.sflag [#allocation4], %s396
        %s398 = sand.u32 %s215, 1
        %s399 = smul.addr %s398, 8
        %s400 = scalar_lea.vmem [#allocation11], %s399
        %v401 = vld [vmem:[%s342] sm:$0xff]
        %v402 = vld [vmem:[%s351] sm:$0xff]
        %v403 = vld [vmem:[#allocation7] sm:$0xff]
        %v404 = vld [vmem:[#allocation7 + $0x8] sm:$0xff]
        %v405 = vld [vmem:[#allocation7 + $0x10] sm:$0xff]
        %v406 = vld [vmem:[#allocation7 + $0x18] sm:$0xff]
        %v407 = vld [vmem:[%s3] sm:$0x1]
        %v409 = vlaneseq
        %v410 = vshrl.u32 %v409, 7
        %v411 = vsub.s32 0, %v410
        %v412 = vrot.slane %v407, %v411
        %vm414 = vcmask 261120
        %v416 = vsel %vm414, %v401, 0
        %418 = vmatprep.subr.mxu0 0.0
        %419 = vmatpush1.msra.mxu0 0.0
        %420 = vmatprep.subr.mxu0 0.0
        %421 = vmatpush1.msra.mxu0 0.0
        %422 = vmatprep.subr.mxu0 0.0
        %423 = vmatpush1.msra.mxu0 0.0
        %424 = vmatprep.subr.mxu0 0.0
        %425 = vmatpush1.msra.mxu0 0.0
        %426 = vmatprep.subr.mxu0 0.0
        %427 = vmatpush1.msra.mxu0 0.0
        %428 = vmatprep.subr.mxu0 0.0
        %429 = vmatpush1.msra.mxu0 0.0
        %430 = vmatprep.subr.mxu0 0.0
        %431 = vmatpush1.msra.mxu0 0.0
        %432 = vmatprep.subr.mxu0 0.0
        %433 = vmatpush1.msra.mxu0 0.0
        %434 = vmatprep.subr.mxu0 0.0
        %435 = vmatpush1.msra.mxu0 0.0
        %436 = vmatprep.subr.mxu0 0.0
        %437 = vmatpush1.msra.mxu0 0.0
        %438 = vmatprep.subr.mxu0 0.0
        %439 = vmatpush1.msra.mxu0 0.0
        %440 = vmatprep.subr.mxu0 0.0
        %441 = vmatpush1.msra.mxu0 0.0
        %442 = vmatprep.subr.mxu0 0.0
        %443 = vmatpush1.msra.mxu0 %v406
        %444 = vmatprep.subr.mxu0 0.0
        %445 = vmatpush1.msra.mxu0 %v405
        %446 = vmatprep.subr.mxu0 0.0
        %447 = vmatpush1.msra.mxu0 %v404
        %448 = vmatprep.subr.mxu0 0.0
        %449 = vmatpush1.msra.mxu0 %v403
        %450 = vmatprep.subr.mxu0 0.0
        %451 = vmatpush2.msra.mxu0 0.0
        %452 = vmatprep.subr.mxu0 0.0
        %453 = vmatpush2.msra.mxu0 0.0
        %454 = vmatprep.subr.mxu0 0.0
        %455 = vmatpush2.msra.mxu0 0.0
        %456 = vmatprep.subr.mxu0 0.0
        %457 = vmatpush2.msra.mxu0 0.0
        %458 = vmatprep.subr.mxu0 0.0
        %459 = vmatpush2.msra.mxu0 0.0
        %460 = vmatprep.subr.mxu0 0.0
        %461 = vmatpush2.msra.mxu0 0.0
        %462 = vmatprep.subr.mxu0 0.0
        %463 = vmatpush2.msra.mxu0 0.0
        %464 = vmatprep.subr.mxu0 0.0
        %465 = vmatpush2.msra.mxu0 0.0
        %466 = vmatprep.subr.mxu0 0.0
        %467 = vmatpush2.msra.mxu0 0.0
        %468 = vmatprep.subr.mxu0 0.0
        %469 = vmatpush2.msra.mxu0 0.0
        %470 = vmatprep.subr.mxu0 0.0
        %471 = vmatpush2.msra.mxu0 0.0
        %472 = vmatprep.subr.mxu0 0.0
        %473 = vmatpush2.msra.mxu0 0.0
        %474 = vmatprep.subr.mxu0 0.0
        %475 = vmatpush2.msra.mxu0 0.0
        %476 = vmatprep.subr.mxu0 0.0
        %477 = vmatpush2.msra.mxu0 0.0
        %478 = vmatprep.subr.mxu0 0.0
        %479 = vmatpush2.msra.mxu0 0.0
        %480 = vmatprep.subr.mxu0 0.0
        %481 = vmatpush2.msra.mxu0 0.0
        %482 = vmatprep.mubr.f32.mxu0 0.0
        %483 = vmatmul.mubr.f32.gmra.mxu0 %v416
        %v484 = vpop.f32.mrf.mxu0
        %v485 = vadd.f32 %v412, %v484
        %v486 = vpop.f32.mrf.mxu0
        %487 = vdwg.mxu0
        %v488 = vld [vmem:[#allocation8] sm:$0xff]
        %v489 = vld [vmem:[#allocation8 + $0x8] sm:$0xff]
        %v490 = vld [vmem:[#allocation8 + $0x10] sm:$0xff]
        %v491 = vld [vmem:[#allocation8 + $0x18] sm:$0xff]
        %v492 = vld [vmem:[%s5] sm:$0x1]
        %v494 = vlaneseq
        %v495 = vshrl.u32 %v494, 7
        %v496 = vsub.s32 0, %v495
        %v497 = vrot.slane %v492, %v496
        %v500 = vsel %vm414, %v402, 0
        %502 = vmatprep.subr.mxu0 0.0
        %503 = vmatpush1.msra.mxu0 0.0
        %504 = vmatprep.subr.mxu0 0.0
        %505 = vmatpush1.msra.mxu0 0.0
        %506 = vmatprep.subr.mxu0 0.0
        %507 = vmatpush1.msra.mxu0 0.0
        %508 = vmatprep.subr.mxu0 0.0
        %509 = vmatpush1.msra.mxu0 0.0
        %510 = vmatprep.subr.mxu0 0.0
        %511 = vmatpush1.msra.mxu0 0.0
        %512 = vmatprep.subr.mxu0 0.0
        %513 = vmatpush1.msra.mxu0 0.0
        %514 = vmatprep.subr.mxu0 0.0
        %515 = vmatpush1.msra.mxu0 0.0
        %516 = vmatprep.subr.mxu0 0.0
        %517 = vmatpush1.msra.mxu0 0.0
        %518 = vmatprep.subr.mxu0 0.0
        %519 = vmatpush1.msra.mxu0 0.0
        %520 = vmatprep.subr.mxu0 0.0
        %521 = vmatpush1.msra.mxu0 0.0
        %522 = vmatprep.subr.mxu0 0.0
        %523 = vmatpush1.msra.mxu0 0.0
        %524 = vmatprep.subr.mxu0 0.0
        %525 = vmatpush1.msra.mxu0 0.0
        %526 = vmatprep.subr.mxu0 0.0
        %527 = vmatpush1.msra.mxu0 %v491
        %528 = vmatprep.subr.mxu0 0.0
        %529 = vmatpush1.msra.mxu0 %v490
        %530 = vmatprep.subr.mxu0 0.0
        %531 = vmatpush1.msra.mxu0 %v489
        %532 = vmatprep.subr.mxu0 0.0
        %533 = vmatpush1.msra.mxu0 %v488
        %534 = vmatprep.subr.mxu0 0.0
        %535 = vmatpush2.msra.mxu0 0.0
        %536 = vmatprep.subr.mxu0 0.0
        %537 = vmatpush2.msra.mxu0 0.0
        %538 = vmatprep.subr.mxu0 0.0
        %539 = vmatpush2.msra.mxu0 0.0
        %540 = vmatprep.subr.mxu0 0.0
        %541 = vmatpush2.msra.mxu0 0.0
        %542 = vmatprep.subr.mxu0 0.0
        %543 = vmatpush2.msra.mxu0 0.0
        %544 = vmatprep.subr.mxu0 0.0
        %545 = vmatpush2.msra.mxu0 0.0
        %546 = vmatprep.subr.mxu0 0.0
        %547 = vmatpush2.msra.mxu0 0.0
        %548 = vmatprep.subr.mxu0 0.0
        %549 = vmatpush2.msra.mxu0 0.0
        %550 = vmatprep.subr.mxu0 0.0
        %551 = vmatpush2.msra.mxu0 0.0
        %552 = vmatprep.subr.mxu0 0.0
        %553 = vmatpush2.msra.mxu0 0.0
        %554 = vmatprep.subr.mxu0 0.0
        %555 = vmatpush2.msra.mxu0 0.0
        %556 = vmatprep.subr.mxu0 0.0
        %557 = vmatpush2.msra.mxu0 0.0
        %558 = vmatprep.subr.mxu0 0.0
        %559 = vmatpush2.msra.mxu0 0.0
        %560 = vmatprep.subr.mxu0 0.0
        %561 = vmatpush2.msra.mxu0 0.0
        %562 = vmatprep.subr.mxu0 0.0
        %563 = vmatpush2.msra.mxu0 0.0
        %564 = vmatprep.subr.mxu0 0.0
        %565 = vmatpush2.msra.mxu0 0.0
        %566 = vmatprep.mubr.f32.mxu0 0.0
        %567 = vmatmul.mubr.f32.gmra.mxu0 %v500
        %v568 = vpop.f32.mrf.mxu0
        %v569 = vadd.f32 %v497, %v568
        %v570 = vpop.f32.mrf.mxu0
        %571 = vdwg.mxu0
        %vm572 = vcmask 64512
        %v574 = vsel %vm572, %v485, 0
        %v577 = vsel %vm572, %v569, 0
        %579 = vmatprep.subr.mxu0 0.0
        %580 = vmatpush1.xpose.msra.mxu0 0.0
        %581 = vmatprep.subr.mxu0 0.0
        %582 = vmatpush1.xpose.msra.mxu0 0.0
        %583 = vmatprep.subr.mxu0 0.0
        %584 = vmatpush1.xpose.msra.mxu0 0.0
        %585 = vmatprep.subr.mxu0 0.0
        %586 = vmatpush1.xpose.msra.mxu0 0.0
        %587 = vmatprep.subr.mxu0 0.0
        %588 = vmatpush1.xpose.msra.mxu0 0.0
        %589 = vmatprep.subr.mxu0 0.0
        %590 = vmatpush1.xpose.msra.mxu0 0.0
        %591 = vmatprep.subr.mxu0 0.0
        %592 = vmatpush1.xpose.msra.mxu0 0.0
        %593 = vmatprep.subr.mxu0 0.0
        %594 = vmatpush1.xpose.msra.mxu0 0.0
        %595 = vmatprep.subr.mxu0 0.0
        %596 = vmatpush1.xpose.msra.mxu0 0.0
        %597 = vmatprep.subr.mxu0 0.0
        %598 = vmatpush1.xpose.msra.mxu0 0.0
        %599 = vmatprep.subr.mxu0 0.0
        %600 = vmatpush1.xpose.msra.mxu0 0.0
        %601 = vmatprep.subr.mxu0 0.0
        %602 = vmatpush1.xpose.msra.mxu0 0.0
        %603 = vmatprep.subr.mxu0 0.0
        %604 = vmatpush1.xpose.msra.mxu0 0.0
        %605 = vmatprep.subr.mxu0 0.0
        %606 = vmatpush1.xpose.msra.mxu0 0.0
        %607 = vmatprep.subr.mxu0 0.0
        %608 = vmatpush1.xpose.msra.mxu0 0.0
        %609 = vmatprep.subr.mxu0 0.0
        %610 = vmatpush1.xpose.msra.mxu0 %v577
        %611 = vmatprep.subr.mxu0 0.0
        %612 = vmatpush2.xpose.msra.mxu0 0.0
        %613 = vmatprep.subr.mxu0 0.0
        %614 = vmatpush2.xpose.msra.mxu0 0.0
        %615 = vmatprep.subr.mxu0 0.0
        %616 = vmatpush2.xpose.msra.mxu0 0.0
        %617 = vmatprep.subr.mxu0 0.0
        %618 = vmatpush2.xpose.msra.mxu0 0.0
        %619 = vmatprep.subr.mxu0 0.0
        %620 = vmatpush2.xpose.msra.mxu0 0.0
        %621 = vmatprep.subr.mxu0 0.0
        %622 = vmatpush2.xpose.msra.mxu0 0.0
        %623 = vmatprep.subr.mxu0 0.0
        %624 = vmatpush2.xpose.msra.mxu0 0.0
        %625 = vmatprep.subr.mxu0 0.0
        %626 = vmatpush2.xpose.msra.mxu0 0.0
        %627 = vmatprep.subr.mxu0 0.0
        %628 = vmatpush2.xpose.msra.mxu0 0.0
        %629 = vmatprep.subr.mxu0 0.0
        %630 = vmatpush2.xpose.msra.mxu0 0.0
        %631 = vmatprep.subr.mxu0 0.0
        %632 = vmatpush2.xpose.msra.mxu0 0.0
        %633 = vmatprep.subr.mxu0 0.0
        %634 = vmatpush2.xpose.msra.mxu0 0.0
        %635 = vmatprep.subr.mxu0 0.0
        %636 = vmatpush2.xpose.msra.mxu0 0.0
        %637 = vmatprep.subr.mxu0 0.0
        %638 = vmatpush2.xpose.msra.mxu0 0.0
        %639 = vmatprep.subr.mxu0 0.0
        %640 = vmatpush2.xpose.msra.mxu0 0.0
        %641 = vmatprep.subr.mxu0 0.0
        %642 = vmatpush2.xpose.msra.mxu0 0.0
        %643 = vmatprep.mubr.f32.mxu0 0.0
        %644 = vmatmul.mubr.f32.gmra.mxu0 %v574
        %v645 = vpop.f32.mrf.mxu0
        %v646 = vadd.f32 0.0, %v645
        %v647 = vpop.f32.mrf.mxu0
        %648 = vdwg.mxu0
        %v649 = vsel %vm572, %v646, -inf
        %650 = vmax.xlane.f32.xlu0 %v649
        %v651 = vpop.xlane.xlu0 %650
        %v652 = vsub.f32 %v646, %v651
        %v653 = vmul.f32 %v652, 1.442695
        %v654 = vpow.pop %v653
        %v655 = vsel %vm572, %v654, 0.0
        %656 = vadd.xlane.f32.xlu0 %v655
        %v657 = vpop.xlane.xlu0 %656
        %658 = vrot.lane.b32.xlu0 %v569, 96
        %v659 = vpop.permute.xlu0 %658
        %v662 = vsel %vm572, %v654, 0
        %664 = vmatprep.subr.mxu0 0.0
        %665 = vmatpush1.msra.mxu0 0.0
        %666 = vmatprep.subr.mxu0 0.0
        %667 = vmatpush1.msra.mxu0 0.0
        %668 = vmatprep.subr.mxu0 0.0
        %669 = vmatpush1.msra.mxu0 0.0
        %670 = vmatprep.subr.mxu0 0.0
        %671 = vmatpush1.msra.mxu0 0.0
        %672 = vmatprep.subr.mxu0 0.0
        %673 = vmatpush1.msra.mxu0 0.0
        %674 = vmatprep.subr.mxu0 0.0
        %675 = vmatpush1.msra.mxu0 0.0
        %676 = vmatprep.subr.mxu0 0.0
        %677 = vmatpush1.msra.mxu0 0.0
        %678 = vmatprep.subr.mxu0 0.0
        %679 = vmatpush1.msra.mxu0 0.0
        %680 = vmatprep.subr.mxu0 0.0
        %681 = vmatpush1.msra.mxu0 0.0
        %682 = vmatprep.subr.mxu0 0.0
        %683 = vmatpush1.msra.mxu0 0.0
        %684 = vmatprep.subr.mxu0 0.0
        %685 = vmatpush1.msra.mxu0 0.0
        %686 = vmatprep.subr.mxu0 0.0
        %687 = vmatpush1.msra.mxu0 0.0
        %688 = vmatprep.subr.mxu0 0.0
        %689 = vmatpush1.msra.mxu0 0.0
        %690 = vmatprep.subr.mxu0 0.0
        %691 = vmatpush1.msra.mxu0 0.0
        %692 = vmatprep.subr.mxu0 0.0
        %693 = vmatpush1.msra.mxu0 0.0
        %694 = vmatprep.subr.mxu0 0.0
        %695 = vmatpush1.msra.mxu0 %v659
        %696 = vmatprep.subr.mxu0 0.0
        %697 = vmatpush2.msra.mxu0 0.0
        %698 = vmatprep.subr.mxu0 0.0
        %699 = vmatpush2.msra.mxu0 0.0
        %700 = vmatprep.subr.mxu0 0.0
        %701 = vmatpush2.msra.mxu0 0.0
        %702 = vmatprep.subr.mxu0 0.0
        %703 = vmatpush2.msra.mxu0 0.0
        %704 = vmatprep.subr.mxu0 0.0
        %705 = vmatpush2.msra.mxu0 0.0
        %706 = vmatprep.subr.mxu0 0.0
        %707 = vmatpush2.msra.mxu0 0.0
        %708 = vmatprep.subr.mxu0 0.0
        %709 = vmatpush2.msra.mxu0 0.0
        %710 = vmatprep.subr.mxu0 0.0
        %711 = vmatpush2.msra.mxu0 0.0
        %712 = vmatprep.subr.mxu0 0.0
        %713 = vmatpush2.msra.mxu0 0.0
        %714 = vmatprep.subr.mxu0 0.0
        %715 = vmatpush2.msra.mxu0 0.0
        %716 = vmatprep.subr.mxu0 0.0
        %717 = vmatpush2.msra.mxu0 0.0
        %718 = vmatprep.subr.mxu0 0.0
        %719 = vmatpush2.msra.mxu0 0.0
        %720 = vmatprep.subr.mxu0 0.0
        %721 = vmatpush2.msra.mxu0 0.0
        %722 = vmatprep.subr.mxu0 0.0
        %723 = vmatpush2.msra.mxu0 0.0
        %724 = vmatprep.subr.mxu0 0.0
        %725 = vmatpush2.msra.mxu0 0.0
        %726 = vmatprep.subr.mxu0 0.0
        %727 = vmatpush2.msra.mxu0 0.0
        %728 = vmatprep.mubr.f32.mxu0 0.0
        %729 = vmatmul.mubr.f32.gmra.mxu0 %v662
        %v730 = vpop.f32.mrf.mxu0
        %v731 = vadd.f32 0.0, %v730
        %v732 = vpop.f32.mrf.mxu0
        %733 = vdwg.mxu0
        %v734 = vrcp.pop %v657
        %v735 = vmul.f32 %v731, %v734
        %v736 = vld [vmem:[#allocation10] sm:$0xff]
        %737 = vrot.lane.b32.xlu0 %v485, 120
        %v738 = vpop.permute.xlu0 %737
        %739 = vrot.lane.b32.xlu0 %v569, 120
        %v740 = vpop.permute.xlu0 %739
        %v741 = vsel %vm572, %v738, 0
        %v743 = vsel %vm572, %v740, 0
        %745 = vmatprep.subr.mxu0 0.0
        %746 = vmatpush1.xpose.msra.mxu0 0.0
        %747 = vmatprep.subr.mxu0 0.0
        %748 = vmatpush1.xpose.msra.mxu0 0.0
        %749 = vmatprep.subr.mxu0 0.0
        %750 = vmatpush1.xpose.msra.mxu0 0.0
        %751 = vmatprep.subr.mxu0 0.0
        %752 = vmatpush1.xpose.msra.mxu0 0.0
        %753 = vmatprep.subr.mxu0 0.0
        %754 = vmatpush1.xpose.msra.mxu0 0.0
        %755 = vmatprep.subr.mxu0 0.0
        %756 = vmatpush1.xpose.msra.mxu0 0.0
        %757 = vmatprep.subr.mxu0 0.0
        %758 = vmatpush1.xpose.msra.mxu0 0.0
        %759 = vmatprep.subr.mxu0 0.0
        %760 = vmatpush1.xpose.msra.mxu0 0.0
        %761 = vmatprep.subr.mxu0 0.0
        %762 = vmatpush1.xpose.msra.mxu0 0.0
        %763 = vmatprep.subr.mxu0 0.0
        %764 = vmatpush1.xpose.msra.mxu0 0.0
        %765 = vmatprep.subr.mxu0 0.0
        %766 = vmatpush1.xpose.msra.mxu0 0.0
        %767 = vmatprep.subr.mxu0 0.0
        %768 = vmatpush1.xpose.msra.mxu0 0.0
        %769 = vmatprep.subr.mxu0 0.0
        %770 = vmatpush1.xpose.msra.mxu0 0.0
        %771 = vmatprep.subr.mxu0 0.0
        %772 = vmatpush1.xpose.msra.mxu0 0.0
        %773 = vmatprep.subr.mxu0 0.0
        %774 = vmatpush1.xpose.msra.mxu0 0.0
        %775 = vmatprep.subr.mxu0 0.0
        %776 = vmatpush1.xpose.msra.mxu0 %v743
        %777 = vmatprep.subr.mxu0 0.0
        %778 = vmatpush2.xpose.msra.mxu0 0.0
        %779 = vmatprep.subr.mxu0 0.0
        %780 = vmatpush2.xpose.msra.mxu0 0.0
        %781 = vmatprep.subr.mxu0 0.0
        %782 = vmatpush2.xpose.msra.mxu0 0.0
        %783 = vmatprep.subr.mxu0 0.0
        %784 = vmatpush2.xpose.msra.mxu0 0.0
        %785 = vmatprep.subr.mxu0 0.0
        %786 = vmatpush2.xpose.msra.mxu0 0.0
        %787 = vmatprep.subr.mxu0 0.0
        %788 = vmatpush2.xpose.msra.mxu0 0.0
        %789 = vmatprep.subr.mxu0 0.0
        %790 = vmatpush2.xpose.msra.mxu0 0.0
        %791 = vmatprep.subr.mxu0 0.0
        %792 = vmatpush2.xpose.msra.mxu0 0.0
        %793 = vmatprep.subr.mxu0 0.0
        %794 = vmatpush2.xpose.msra.mxu0 0.0
        %795 = vmatprep.subr.mxu0 0.0
        %796 = vmatpush2.xpose.msra.mxu0 0.0
        %797 = vmatprep.subr.mxu0 0.0
        %798 = vmatpush2.xpose.msra.mxu0 0.0
        %799 = vmatprep.subr.mxu0 0.0
        %800 = vmatpush2.xpose.msra.mxu0 0.0
        %801 = vmatprep.subr.mxu0 0.0
        %802 = vmatpush2.xpose.msra.mxu0 0.0
        %803 = vmatprep.subr.mxu0 0.0
        %804 = vmatpush2.xpose.msra.mxu0 0.0
        %805 = vmatprep.subr.mxu0 0.0
        %806 = vmatpush2.xpose.msra.mxu0 0.0
        %807 = vmatprep.subr.mxu0 0.0
        %808 = vmatpush2.xpose.msra.mxu0 0.0
        %809 = vmatprep.mubr.f32.mxu0 0.0
        %810 = vmatmul.mubr.f32.gmra.mxu0 %v741
        %v811 = vpop.f32.mrf.mxu0
        %v812 = vadd.f32 0.0, %v811
        %v813 = vpop.f32.mrf.mxu0
        %814 = vdwg.mxu0
        %v815 = vsel %vm572, %v812, -inf
        %816 = vmax.xlane.f32.xlu0 %v815
        %v817 = vpop.xlane.xlu0 %816
        %v818 = vsub.f32 %v812, %v817
        %v819 = vmul.f32 %v818, 1.442695
        %v820 = vpow.pop %v819
        %v821 = vsel %vm572, %v820, 0.0
        %822 = vadd.xlane.f32.xlu0 %v821
        %v823 = vpop.xlane.xlu0 %822
        %824 = vrot.lane.b32.xlu0 %v569, 88
        %v825 = vpop.permute.xlu0 %824
        %v828 = vsel %vm572, %v820, 0
        %830 = vmatprep.subr.mxu0 0.0
        %831 = vmatpush1.msra.mxu0 0.0
        %832 = vmatprep.subr.mxu0 0.0
        %833 = vmatpush1.msra.mxu0 0.0
        %834 = vmatprep.subr.mxu0 0.0
        %835 = vmatpush1.msra.mxu0 0.0
        %836 = vmatprep.subr.mxu0 0.0
        %837 = vmatpush1.msra.mxu0 0.0
        %838 = vmatprep.subr.mxu0 0.0
        %839 = vmatpush1.msra.mxu0 0.0
        %840 = vmatprep.subr.mxu0 0.0
        %841 = vmatpush1.msra.mxu0 0.0
        %842 = vmatprep.subr.mxu0 0.0
        %843 = vmatpush1.msra.mxu0 0.0
        %844 = vmatprep.subr.mxu0 0.0
        %845 = vmatpush1.msra.mxu0 0.0
        %846 = vmatprep.subr.mxu0 0.0
        %847 = vmatpush1.msra.mxu0 0.0
        %848 = vmatprep.subr.mxu0 0.0
        %849 = vmatpush1.msra.mxu0 0.0
        %850 = vmatprep.subr.mxu0 0.0
        %851 = vmatpush1.msra.mxu0 0.0
        %852 = vmatprep.subr.mxu0 0.0
        %853 = vmatpush1.msra.mxu0 0.0
        %854 = vmatprep.subr.mxu0 0.0
        %855 = vmatpush1.msra.mxu0 0.0
        %856 = vmatprep.subr.mxu0 0.0
        %857 = vmatpush1.msra.mxu0 0.0
        %858 = vmatprep.subr.mxu0 0.0
        %859 = vmatpush1.msra.mxu0 0.0
        %860 = vmatprep.subr.mxu0 0.0
        %861 = vmatpush1.msra.mxu0 %v825
        %862 = vmatprep.subr.mxu0 0.0
        %863 = vmatpush2.msra.mxu0 0.0
        %864 = vmatprep.subr.mxu0 0.0
        %865 = vmatpush2.msra.mxu0 0.0
        %866 = vmatprep.subr.mxu0 0.0
        %867 = vmatpush2.msra.mxu0 0.0
        %868 = vmatprep.subr.mxu0 0.0
        %869 = vmatpush2.msra.mxu0 0.0
        %870 = vmatprep.subr.mxu0 0.0
        %871 = vmatpush2.msra.mxu0 0.0
        %872 = vmatprep.subr.mxu0 0.0
        %873 = vmatpush2.msra.mxu0 0.0
        %874 = vmatprep.subr.mxu0 0.0
        %875 = vmatpush2.msra.mxu0 0.0
        %876 = vmatprep.subr.mxu0 0.0
        %877 = vmatpush2.msra.mxu0 0.0
        %878 = vmatprep.subr.mxu0 0.0
        %879 = vmatpush2.msra.mxu0 0.0
        %880 = vmatprep.subr.mxu0 0.0
        %881 = vmatpush2.msra.mxu0 0.0
        %882 = vmatprep.subr.mxu0 0.0
        %883 = vmatpush2.msra.mxu0 0.0
        %884 = vmatprep.subr.mxu0 0.0
        %885 = vmatpush2.msra.mxu0 0.0
        %886 = vmatprep.subr.mxu0 0.0
        %887 = vmatpush2.msra.mxu0 0.0
        %888 = vmatprep.subr.mxu0 0.0
        %889 = vmatpush2.msra.mxu0 0.0
        %890 = vmatprep.subr.mxu0 0.0
        %891 = vmatpush2.msra.mxu0 0.0
        %892 = vmatprep.subr.mxu0 0.0
        %893 = vmatpush2.msra.mxu0 0.0
        %894 = vmatprep.mubr.f32.mxu0 0.0
        %895 = vmatmul.mubr.f32.gmra.mxu0 %v828
        %v896 = vpop.f32.mrf.mxu0
        %v897 = vadd.f32 0.0, %v896
        %v898 = vpop.f32.mrf.mxu0
        %899 = vdwg.mxu0
        %v900 = vrcp.pop %v823
        %v901 = vmul.f32 %v897, %v900
        %v902 = vld [vmem:[#allocation10 + $0x8] sm:$0xff]
        %v904 = vsel %vm572, %v901, 0
        %906 = vmatprep.subr.mxu0 0.0
        %907 = vmatpush1.msra.mxu0 0.0
        %908 = vmatprep.subr.mxu0 0.0
        %909 = vmatpush1.msra.mxu0 0.0
        %910 = vmatprep.subr.mxu0 0.0
        %911 = vmatpush1.msra.mxu0 0.0
        %912 = vmatprep.subr.mxu0 0.0
        %913 = vmatpush1.msra.mxu0 0.0
        %914 = vmatprep.subr.mxu0 0.0
        %915 = vmatpush1.msra.mxu0 0.0
        %916 = vmatprep.subr.mxu0 0.0
        %917 = vmatpush1.msra.mxu0 0.0
        %918 = vmatprep.subr.mxu0 0.0
        %919 = vmatpush1.msra.mxu0 0.0
        %920 = vmatprep.subr.mxu0 0.0
        %921 = vmatpush1.msra.mxu0 0.0
        %922 = vmatprep.subr.mxu0 0.0
        %923 = vmatpush1.msra.mxu0 0.0
        %924 = vmatprep.subr.mxu0 0.0
        %925 = vmatpush1.msra.mxu0 0.0
        %926 = vmatprep.subr.mxu0 0.0
        %927 = vmatpush1.msra.mxu0 0.0
        %928 = vmatprep.subr.mxu0 0.0
        %929 = vmatpush1.msra.mxu0 0.0
        %930 = vmatprep.subr.mxu0 0.0
        %931 = vmatpush1.msra.mxu0 0.0
        %932 = vmatprep.subr.mxu0 0.0
        %933 = vmatpush1.msra.mxu0 0.0
        %934 = vmatprep.subr.mxu0 0.0
        %935 = vmatpush1.msra.mxu0 0.0
        %936 = vmatprep.subr.mxu0 0.0
        %937 = vmatpush1.msra.mxu0 %v902
        %938 = vmatprep.subr.mxu0 0.0
        %939 = vmatpush2.msra.mxu0 0.0
        %940 = vmatprep.subr.mxu0 0.0
        %941 = vmatpush2.msra.mxu0 0.0
        %942 = vmatprep.subr.mxu0 0.0
        %943 = vmatpush2.msra.mxu0 0.0
        %944 = vmatprep.subr.mxu0 0.0
        %945 = vmatpush2.msra.mxu0 0.0
        %946 = vmatprep.subr.mxu0 0.0
        %947 = vmatpush2.msra.mxu0 0.0
        %948 = vmatprep.subr.mxu0 0.0
        %949 = vmatpush2.msra.mxu0 0.0
        %950 = vmatprep.subr.mxu0 0.0
        %951 = vmatpush2.msra.mxu0 0.0
        %952 = vmatprep.subr.mxu0 0.0
        %953 = vmatpush2.msra.mxu0 0.0
        %954 = vmatprep.subr.mxu0 0.0
        %955 = vmatpush2.msra.mxu0 0.0
        %956 = vmatprep.subr.mxu0 0.0
        %957 = vmatpush2.msra.mxu0 0.0
        %958 = vmatprep.subr.mxu0 0.0
        %959 = vmatpush2.msra.mxu0 0.0
        %960 = vmatprep.subr.mxu0 0.0
        %961 = vmatpush2.msra.mxu0 0.0
        %962 = vmatprep.subr.mxu0 0.0
        %963 = vmatpush2.msra.mxu0 0.0
        %964 = vmatprep.subr.mxu0 0.0
        %965 = vmatpush2.msra.mxu0 0.0
        %966 = vmatprep.subr.mxu0 0.0
        %967 = vmatpush2.msra.mxu0 0.0
        %968 = vmatprep.subr.mxu0 0.0
        %969 = vmatpush2.msra.mxu0 0.0
        %970 = vmatprep.mubr.f32.mxu0 0.0
        %971 = vmatmul.mubr.f32.gmra.mxu0 %v904
        %v972 = vpop.f32.mrf.mxu0
        %v973 = vadd.f32 0.0, %v972
        %v974 = vpop.f32.mrf.mxu0
        %975 = vdwg.mxu0
        %v977 = vsel %vm572, %v735, 0
        %979 = vmatprep.subr.mxu0 0.0
        %980 = vmatpush1.msra.mxu0 0.0
        %981 = vmatprep.subr.mxu0 0.0
        %982 = vmatpush1.msra.mxu0 0.0
        %983 = vmatprep.subr.mxu0 0.0
        %984 = vmatpush1.msra.mxu0 0.0
        %985 = vmatprep.subr.mxu0 0.0
        %986 = vmatpush1.msra.mxu0 0.0
        %987 = vmatprep.subr.mxu0 0.0
        %988 = vmatpush1.msra.mxu0 0.0
        %989 = vmatprep.subr.mxu0 0.0
        %990 = vmatpush1.msra.mxu0 0.0
        %991 = vmatprep.subr.mxu0 0.0
        %992 = vmatpush1.msra.mxu0 0.0
        %993 = vmatprep.subr.mxu0 0.0
        %994 = vmatpush1.msra.mxu0 0.0
        %995 = vmatprep.subr.mxu0 0.0
        %996 = vmatpush1.msra.mxu0 0.0
        %997 = vmatprep.subr.mxu0 0.0
        %998 = vmatpush1.msra.mxu0 0.0
        %999 = vmatprep.subr.mxu0 0.0
        %1000 = vmatpush1.msra.mxu0 0.0
        %1001 = vmatprep.subr.mxu0 0.0
        %1002 = vmatpush1.msra.mxu0 0.0
        %1003 = vmatprep.subr.mxu0 0.0
        %1004 = vmatpush1.msra.mxu0 0.0
        %1005 = vmatprep.subr.mxu0 0.0
        %1006 = vmatpush1.msra.mxu0 0.0
        %1007 = vmatprep.subr.mxu0 0.0
        %1008 = vmatpush1.msra.mxu0 0.0
        %1009 = vmatprep.subr.mxu0 0.0
        %1010 = vmatpush1.msra.mxu0 %v736
        %1011 = vmatprep.subr.mxu0 0.0
        %1012 = vmatpush2.msra.mxu0 0.0
        %1013 = vmatprep.subr.mxu0 0.0
        %1014 = vmatpush2.msra.mxu0 0.0
        %1015 = vmatprep.subr.mxu0 0.0
        %1016 = vmatpush2.msra.mxu0 0.0
        %1017 = vmatprep.subr.mxu0 0.0
        %1018 = vmatpush2.msra.mxu0 0.0
        %1019 = vmatprep.subr.mxu0 0.0
        %1020 = vmatpush2.msra.mxu0 0.0
        %1021 = vmatprep.subr.mxu0 0.0
        %1022 = vmatpush2.msra.mxu0 0.0
        %1023 = vmatprep.subr.mxu0 0.0
        %1024 = vmatpush2.msra.mxu0 0.0
        %1025 = vmatprep.subr.mxu0 0.0
        %1026 = vmatpush2.msra.mxu0 0.0
        %1027 = vmatprep.subr.mxu0 0.0
        %1028 = vmatpush2.msra.mxu0 0.0
        %1029 = vmatprep.subr.mxu0 0.0
        %1030 = vmatpush2.msra.mxu0 0.0
        %1031 = vmatprep.subr.mxu0 0.0
        %1032 = vmatpush2.msra.mxu0 0.0
        %1033 = vmatprep.subr.mxu0 0.0
        %1034 = vmatpush2.msra.mxu0 0.0
        %1035 = vmatprep.subr.mxu0 0.0
        %1036 = vmatpush2.msra.mxu0 0.0
        %1037 = vmatprep.subr.mxu0 0.0
        %1038 = vmatpush2.msra.mxu0 0.0
        %1039 = vmatprep.subr.mxu0 0.0
        %1040 = vmatpush2.msra.mxu0 0.0
        %1041 = vmatprep.subr.mxu0 0.0
        %1042 = vmatpush2.msra.mxu0 0.0
        %1043 = vmatprep.mubr.f32.mxu0 0.0
        %1044 = vmatmul.mubr.f32.gmra.mxu0 %v977
        %v1045 = vpop.f32.mrf.mxu0
        %v1046 = vadd.f32 %v973, %v1045
        %v1047 = vpop.f32.mrf.mxu0
        %1048 = vdwg.mxu0
        %1049 = vrot.lane.b32.xlu0 %v485, 112
        %v1050 = vpop.permute.xlu0 %1049
        %1051 = vrot.lane.b32.xlu0 %v569, 112
        %v1052 = vpop.permute.xlu0 %1051
        %v1053 = vsel %vm572, %v1050, 0
        %v1055 = vsel %vm572, %v1052, 0
        %1057 = vmatprep.subr.mxu0 0.0
        %1058 = vmatpush1.xpose.msra.mxu0 0.0
        %1059 = vmatprep.subr.mxu0 0.0
        %1060 = vmatpush1.xpose.msra.mxu0 0.0
        %1061 = vmatprep.subr.mxu0 0.0
        %1062 = vmatpush1.xpose.msra.mxu0 0.0
        %1063 = vmatprep.subr.mxu0 0.0
        %1064 = vmatpush1.xpose.msra.mxu0 0.0
        %1065 = vmatprep.subr.mxu0 0.0
        %1066 = vmatpush1.xpose.msra.mxu0 0.0
        %1067 = vmatprep.subr.mxu0 0.0
        %1068 = vmatpush1.xpose.msra.mxu0 0.0
        %1069 = vmatprep.subr.mxu0 0.0
        %1070 = vmatpush1.xpose.msra.mxu0 0.0
        %1071 = vmatprep.subr.mxu0 0.0
        %1072 = vmatpush1.xpose.msra.mxu0 0.0
        %1073 = vmatprep.subr.mxu0 0.0
        %1074 = vmatpush1.xpose.msra.mxu0 0.0
        %1075 = vmatprep.subr.mxu0 0.0
        %1076 = vmatpush1.xpose.msra.mxu0 0.0
        %1077 = vmatprep.subr.mxu0 0.0
        %1078 = vmatpush1.xpose.msra.mxu0 0.0
        %1079 = vmatprep.subr.mxu0 0.0
        %1080 = vmatpush1.xpose.msra.mxu0 0.0
        %1081 = vmatprep.subr.mxu0 0.0
        %1082 = vmatpush1.xpose.msra.mxu0 0.0
        %1083 = vmatprep.subr.mxu0 0.0
        %1084 = vmatpush1.xpose.msra.mxu0 0.0
        %1085 = vmatprep.subr.mxu0 0.0
        %1086 = vmatpush1.xpose.msra.mxu0 0.0
        %1087 = vmatprep.subr.mxu0 0.0
        %1088 = vmatpush1.xpose.msra.mxu0 %v1055
        %1089 = vmatprep.subr.mxu0 0.0
        %1090 = vmatpush2.xpose.msra.mxu0 0.0
        %1091 = vmatprep.subr.mxu0 0.0
        %1092 = vmatpush2.xpose.msra.mxu0 0.0
        %1093 = vmatprep.subr.mxu0 0.0
        %1094 = vmatpush2.xpose.msra.mxu0 0.0
        %1095 = vmatprep.subr.mxu0 0.0
        %1096 = vmatpush2.xpose.msra.mxu0 0.0
        %1097 = vmatprep.subr.mxu0 0.0
        %1098 = vmatpush2.xpose.msra.mxu0 0.0
        %1099 = vmatprep.subr.mxu0 0.0
        %1100 = vmatpush2.xpose.msra.mxu0 0.0
        %1101 = vmatprep.subr.mxu0 0.0
        %1102 = vmatpush2.xpose.msra.mxu0 0.0
        %1103 = vmatprep.subr.mxu0 0.0
        %1104 = vmatpush2.xpose.msra.mxu0 0.0
        %1105 = vmatprep.subr.mxu0 0.0
        %1106 = vmatpush2.xpose.msra.mxu0 0.0
        %1107 = vmatprep.subr.mxu0 0.0
        %1108 = vmatpush2.xpose.msra.mxu0 0.0
        %1109 = vmatprep.subr.mxu0 0.0
        %1110 = vmatpush2.xpose.msra.mxu0 0.0
        %1111 = vmatprep.subr.mxu0 0.0
        %1112 = vmatpush2.xpose.msra.mxu0 0.0
        %1113 = vmatprep.subr.mxu0 0.0
        %1114 = vmatpush2.xpose.msra.mxu0 0.0
        %1115 = vmatprep.subr.mxu0 0.0
        %1116 = vmatpush2.xpose.msra.mxu0 0.0
        %1117 = vmatprep.subr.mxu0 0.0
        %1118 = vmatpush2.xpose.msra.mxu0 0.0
        %1119 = vmatprep.subr.mxu0 0.0
        %1120 = vmatpush2.xpose.msra.mxu0 0.0
        %1121 = vmatprep.mubr.f32.mxu0 0.0
        %1122 = vmatmul.mubr.f32.gmra.mxu0 %v1053
        %v1123 = vpop.f32.mrf.mxu0
        %v1124 = vadd.f32 0.0, %v1123
        %v1125 = vpop.f32.mrf.mxu0
        %1126 = vdwg.mxu0
        %v1127 = vsel %vm572, %v1124, -inf
        %1128 = vmax.xlane.f32.xlu0 %v1127
        %v1129 = vpop.xlane.xlu0 %1128
        %v1130 = vsub.f32 %v1124, %v1129
        %v1131 = vmul.f32 %v1130, 1.442695
        %v1132 = vpow.pop %v1131
        %v1133 = vsel %vm572, %v1132, 0.0
        %1134 = vadd.xlane.f32.xlu0 %v1133
        %v1135 = vpop.xlane.xlu0 %1134
        %1136 = vrot.lane.b32.xlu0 %v569, 80
        %v1137 = vpop.permute.xlu0 %1136
        %v1140 = vsel %vm572, %v1132, 0
        %1142 = vmatprep.subr.mxu0 0.0
        %1143 = vmatpush1.msra.mxu0 0.0
        %1144 = vmatprep.subr.mxu0 0.0
        %1145 = vmatpush1.msra.mxu0 0.0
        %1146 = vmatprep.subr.mxu0 0.0
        %1147 = vmatpush1.msra.mxu0 0.0
        %1148 = vmatprep.subr.mxu0 0.0
        %1149 = vmatpush1.msra.mxu0 0.0
        %1150 = vmatprep.subr.mxu0 0.0
        %1151 = vmatpush1.msra.mxu0 0.0
        %1152 = vmatprep.subr.mxu0 0.0
        %1153 = vmatpush1.msra.mxu0 0.0
        %1154 = vmatprep.subr.mxu0 0.0
        %1155 = vmatpush1.msra.mxu0 0.0
        %1156 = vmatprep.subr.mxu0 0.0
        %1157 = vmatpush1.msra.mxu0 0.0
        %1158 = vmatprep.subr.mxu0 0.0
        %1159 = vmatpush1.msra.mxu0 0.0
        %1160 = vmatprep.subr.mxu0 0.0
        %1161 = vmatpush1.msra.mxu0 0.0
        %1162 = vmatprep.subr.mxu0 0.0
        %1163 = vmatpush1.msra.mxu0 0.0
        %1164 = vmatprep.subr.mxu0 0.0
        %1165 = vmatpush1.msra.mxu0 0.0
        %1166 = vmatprep.subr.mxu0 0.0
        %1167 = vmatpush1.msra.mxu0 0.0
        %1168 = vmatprep.subr.mxu0 0.0
        %1169 = vmatpush1.msra.mxu0 0.0
        %1170 = vmatprep.subr.mxu0 0.0
        %1171 = vmatpush1.msra.mxu0 0.0
        %1172 = vmatprep.subr.mxu0 0.0
        %1173 = vmatpush1.msra.mxu0 %v1137
        %1174 = vmatprep.subr.mxu0 0.0
        %1175 = vmatpush2.msra.mxu0 0.0
        %1176 = vmatprep.subr.mxu0 0.0
        %1177 = vmatpush2.msra.mxu0 0.0
        %1178 = vmatprep.subr.mxu0 0.0
        %1179 = vmatpush2.msra.mxu0 0.0
        %1180 = vmatprep.subr.mxu0 0.0
        %1181 = vmatpush2.msra.mxu0 0.0
        %1182 = vmatprep.subr.mxu0 0.0
        %1183 = vmatpush2.msra.mxu0 0.0
        %1184 = vmatprep.subr.mxu0 0.0
        %1185 = vmatpush2.msra.mxu0 0.0
        %1186 = vmatprep.subr.mxu0 0.0
        %1187 = vmatpush2.msra.mxu0 0.0
        %1188 = vmatprep.subr.mxu0 0.0
        %1189 = vmatpush2.msra.mxu0 0.0
        %1190 = vmatprep.subr.mxu0 0.0
        %1191 = vmatpush2.msra.mxu0 0.0
        %1192 = vmatprep.subr.mxu0 0.0
        %1193 = vmatpush2.msra.mxu0 0.0
        %1194 = vmatprep.subr.mxu0 0.0
        %1195 = vmatpush2.msra.mxu0 0.0
        %1196 = vmatprep.subr.mxu0 0.0
        %1197 = vmatpush2.msra.mxu0 0.0
        %1198 = vmatprep.subr.mxu0 0.0
        %1199 = vmatpush2.msra.mxu0 0.0
        %1200 = vmatprep.subr.mxu0 0.0
        %1201 = vmatpush2.msra.mxu0 0.0
        %1202 = vmatprep.subr.mxu0 0.0
        %1203 = vmatpush2.msra.mxu0 0.0
        %1204 = vmatprep.subr.mxu0 0.0
        %1205 = vmatpush2.msra.mxu0 0.0
        %1206 = vmatprep.mubr.f32.mxu0 0.0
        %1207 = vmatmul.mubr.f32.gmra.mxu0 %v1140
        %v1208 = vpop.f32.mrf.mxu0
        %v1209 = vadd.f32 0.0, %v1208
        %v1210 = vpop.f32.mrf.mxu0
        %1211 = vdwg.mxu0
        %v1212 = vrcp.pop %v1135
        %v1213 = vmul.f32 %v1209, %v1212
        %v1214 = vld [vmem:[#allocation10 + $0x10] sm:$0xff]
        %v1216 = vsel %vm572, %v1213, 0
        %1218 = vmatprep.subr.mxu0 0.0
        %1219 = vmatpush1.msra.mxu0 0.0
        %1220 = vmatprep.subr.mxu0 0.0
        %1221 = vmatpush1.msra.mxu0 0.0
        %1222 = vmatprep.subr.mxu0 0.0
        %1223 = vmatpush1.msra.mxu0 0.0
        %1224 = vmatprep.subr.mxu0 0.0
        %1225 = vmatpush1.msra.mxu0 0.0
        %1226 = vmatprep.subr.mxu0 0.0
        %1227 = vmatpush1.msra.mxu0 0.0
        %1228 = vmatprep.subr.mxu0 0.0
        %1229 = vmatpush1.msra.mxu0 0.0
        %1230 = vmatprep.subr.mxu0 0.0
        %1231 = vmatpush1.msra.mxu0 0.0
        %1232 = vmatprep.subr.mxu0 0.0
        %1233 = vmatpush1.msra.mxu0 0.0
        %1234 = vmatprep.subr.mxu0 0.0
        %1235 = vmatpush1.msra.mxu0 0.0
        %1236 = vmatprep.subr.mxu0 0.0
        %1237 = vmatpush1.msra.mxu0 0.0
        %1238 = vmatprep.subr.mxu0 0.0
        %1239 = vmatpush1.msra.mxu0 0.0
        %1240 = vmatprep.subr.mxu0 0.0
        %1241 = vmatpush1.msra.mxu0 0.0
        %1242 = vmatprep.subr.mxu0 0.0
        %1243 = vmatpush1.msra.mxu0 0.0
        %1244 = vmatprep.subr.mxu0 0.0
        %1245 = vmatpush1.msra.mxu0 0.0
        %1246 = vmatprep.subr.mxu0 0.0
        %1247 = vmatpush1.msra.mxu0 0.0
        %1248 = vmatprep.subr.mxu0 0.0
        %1249 = vmatpush1.msra.mxu0 %v1214
        %1250 = vmatprep.subr.mxu0 0.0
        %1251 = vmatpush2.msra.mxu0 0.0
        %1252 = vmatprep.subr.mxu0 0.0
        %1253 = vmatpush2.msra.mxu0 0.0
        %1254 = vmatprep.subr.mxu0 0.0
        %1255 = vmatpush2.msra.mxu0 0.0
        %1256 = vmatprep.subr.mxu0 0.0
        %1257 = vmatpush2.msra.mxu0 0.0
        %1258 = vmatprep.subr.mxu0 0.0
        %1259 = vmatpush2.msra.mxu0 0.0
        %1260 = vmatprep.subr.mxu0 0.0
        %1261 = vmatpush2.msra.mxu0 0.0
        %1262 = vmatprep.subr.mxu0 0.0
        %1263 = vmatpush2.msra.mxu0 0.0
        %1264 = vmatprep.subr.mxu0 0.0
        %1265 = vmatpush2.msra.mxu0 0.0
        %1266 = vmatprep.subr.mxu0 0.0
        %1267 = vmatpush2.msra.mxu0 0.0
        %1268 = vmatprep.subr.mxu0 0.0
        %1269 = vmatpush2.msra.mxu0 0.0
        %1270 = vmatprep.subr.mxu0 0.0
        %1271 = vmatpush2.msra.mxu0 0.0
        %1272 = vmatprep.subr.mxu0 0.0
        %1273 = vmatpush2.msra.mxu0 0.0
        %1274 = vmatprep.subr.mxu0 0.0
        %1275 = vmatpush2.msra.mxu0 0.0
        %1276 = vmatprep.subr.mxu0 0.0
        %1277 = vmatpush2.msra.mxu0 0.0
        %1278 = vmatprep.subr.mxu0 0.0
        %1279 = vmatpush2.msra.mxu0 0.0
        %1280 = vmatprep.subr.mxu0 0.0
        %1281 = vmatpush2.msra.mxu0 0.0
        %1282 = vmatprep.mubr.f32.mxu0 0.0
        %1283 = vmatmul.mubr.f32.gmra.mxu0 %v1216
        %v1284 = vpop.f32.mrf.mxu0
        %v1285 = vadd.f32 0.0, %v1284
        %v1286 = vpop.f32.mrf.mxu0
        %1287 = vdwg.mxu0
        %v1288 = vadd.f32 %v1046, %v1285
        %1289 = vrot.lane.b32.xlu0 %v485, 104
        %v1290 = vpop.permute.xlu0 %1289
        %1291 = vrot.lane.b32.xlu0 %v569, 104
        %v1292 = vpop.permute.xlu0 %1291
        %v1293 = vsel %vm572, %v1290, 0
        %v1295 = vsel %vm572, %v1292, 0
        %1297 = vmatprep.subr.mxu0 0.0
        %1298 = vmatpush1.xpose.msra.mxu0 0.0
        %1299 = vmatprep.subr.mxu0 0.0
        %1300 = vmatpush1.xpose.msra.mxu0 0.0
        %1301 = vmatprep.subr.mxu0 0.0
        %1302 = vmatpush1.xpose.msra.mxu0 0.0
        %1303 = vmatprep.subr.mxu0 0.0
        %1304 = vmatpush1.xpose.msra.mxu0 0.0
        %1305 = vmatprep.subr.mxu0 0.0
        %1306 = vmatpush1.xpose.msra.mxu0 0.0
        %1307 = vmatprep.subr.mxu0 0.0
        %1308 = vmatpush1.xpose.msra.mxu0 0.0
        %1309 = vmatprep.subr.mxu0 0.0
        %1310 = vmatpush1.xpose.msra.mxu0 0.0
        %1311 = vmatprep.subr.mxu0 0.0
        %1312 = vmatpush1.xpose.msra.mxu0 0.0
        %1313 = vmatprep.subr.mxu0 0.0
        %1314 = vmatpush1.xpose.msra.mxu0 0.0
        %1315 = vmatprep.subr.mxu0 0.0
        %1316 = vmatpush1.xpose.msra.mxu0 0.0
        %1317 = vmatprep.subr.mxu0 0.0
        %1318 = vmatpush1.xpose.msra.mxu0 0.0
        %1319 = vmatprep.subr.mxu0 0.0
        %1320 = vmatpush1.xpose.msra.mxu0 0.0
        %1321 = vmatprep.subr.mxu0 0.0
        %1322 = vmatpush1.xpose.msra.mxu0 0.0
        %1323 = vmatprep.subr.mxu0 0.0
        %1324 = vmatpush1.xpose.msra.mxu0 0.0
        %1325 = vmatprep.subr.mxu0 0.0
        %1326 = vmatpush1.xpose.msra.mxu0 0.0
        %1327 = vmatprep.subr.mxu0 0.0
        %1328 = vmatpush1.xpose.msra.mxu0 %v1295
        %1329 = vmatprep.subr.mxu0 0.0
        %1330 = vmatpush2.xpose.msra.mxu0 0.0
        %1331 = vmatprep.subr.mxu0 0.0
        %1332 = vmatpush2.xpose.msra.mxu0 0.0
        %1333 = vmatprep.subr.mxu0 0.0
        %1334 = vmatpush2.xpose.msra.mxu0 0.0
        %1335 = vmatprep.subr.mxu0 0.0
        %1336 = vmatpush2.xpose.msra.mxu0 0.0
        %1337 = vmatprep.subr.mxu0 0.0
        %1338 = vmatpush2.xpose.msra.mxu0 0.0
        %1339 = vmatprep.subr.mxu0 0.0
        %1340 = vmatpush2.xpose.msra.mxu0 0.0
        %1341 = vmatprep.subr.mxu0 0.0
        %1342 = vmatpush2.xpose.msra.mxu0 0.0
        %1343 = vmatprep.subr.mxu0 0.0
        %1344 = vmatpush2.xpose.msra.mxu0 0.0
        %1345 = vmatprep.subr.mxu0 0.0
        %1346 = vmatpush2.xpose.msra.mxu0 0.0
        %1347 = vmatprep.subr.mxu0 0.0
        %1348 = vmatpush2.xpose.msra.mxu0 0.0
        %1349 = vmatprep.subr.mxu0 0.0
        %1350 = vmatpush2.xpose.msra.mxu0 0.0
        %1351 = vmatprep.subr.mxu0 0.0
        %1352 = vmatpush2.xpose.msra.mxu0 0.0
        %1353 = vmatprep.subr.mxu0 0.0
        %1354 = vmatpush2.xpose.msra.mxu0 0.0
        %1355 = vmatprep.subr.mxu0 0.0
        %1356 = vmatpush2.xpose.msra.mxu0 0.0
        %1357 = vmatprep.subr.mxu0 0.0
        %1358 = vmatpush2.xpose.msra.mxu0 0.0
        %1359 = vmatprep.subr.mxu0 0.0
        %1360 = vmatpush2.xpose.msra.mxu0 0.0
        %1361 = vmatprep.mubr.f32.mxu0 0.0
        %1362 = vmatmul.mubr.f32.gmra.mxu0 %v1293
        %v1363 = vpop.f32.mrf.mxu0
        %v1364 = vadd.f32 0.0, %v1363
        %v1365 = vpop.f32.mrf.mxu0
        %1366 = vdwg.mxu0
        %v1367 = vsel %vm572, %v1364, -inf
        %1368 = vmax.xlane.f32.xlu0 %v1367
        %v1369 = vpop.xlane.xlu0 %1368
        %v1370 = vsub.f32 %v1364, %v1369
        %v1371 = vmul.f32 %v1370, 1.442695
        %v1372 = vpow.pop %v1371
        %v1373 = vsel %vm572, %v1372, 0.0
        %1374 = vadd.xlane.f32.xlu0 %v1373
        %v1375 = vpop.xlane.xlu0 %1374
        %1376 = vrot.lane.b32.xlu0 %v569, 72
        %v1377 = vpop.permute.xlu0 %1376
        %v1380 = vsel %vm572, %v1372, 0
        %1382 = vmatprep.subr.mxu0 0.0
        %1383 = vmatpush1.msra.mxu0 0.0
        %1384 = vmatprep.subr.mxu0 0.0
        %1385 = vmatpush1.msra.mxu0 0.0
        %1386 = vmatprep.subr.mxu0 0.0
        %1387 = vmatpush1.msra.mxu0 0.0
        %1388 = vmatprep.subr.mxu0 0.0
        %1389 = vmatpush1.msra.mxu0 0.0
        %1390 = vmatprep.subr.mxu0 0.0
        %1391 = vmatpush1.msra.mxu0 0.0
        %1392 = vmatprep.subr.mxu0 0.0
        %1393 = vmatpush1.msra.mxu0 0.0
        %1394 = vmatprep.subr.mxu0 0.0
        %1395 = vmatpush1.msra.mxu0 0.0
        %1396 = vmatprep.subr.mxu0 0.0
        %1397 = vmatpush1.msra.mxu0 0.0
        %1398 = vmatprep.subr.mxu0 0.0
        %1399 = vmatpush1.msra.mxu0 0.0
        %1400 = vmatprep.subr.mxu0 0.0
        %1401 = vmatpush1.msra.mxu0 0.0
        %1402 = vmatprep.subr.mxu0 0.0
        %1403 = vmatpush1.msra.mxu0 0.0
        %1404 = vmatprep.subr.mxu0 0.0
        %1405 = vmatpush1.msra.mxu0 0.0
        %1406 = vmatprep.subr.mxu0 0.0
        %1407 = vmatpush1.msra.mxu0 0.0
        %1408 = vmatprep.subr.mxu0 0.0
        %1409 = vmatpush1.msra.mxu0 0.0
        %1410 = vmatprep.subr.mxu0 0.0
        %1411 = vmatpush1.msra.mxu0 0.0
        %1412 = vmatprep.subr.mxu0 0.0
        %1413 = vmatpush1.msra.mxu0 %v1377
        %1414 = vmatprep.subr.mxu0 0.0
        %1415 = vmatpush2.msra.mxu0 0.0
        %1416 = vmatprep.subr.mxu0 0.0
        %1417 = vmatpush2.msra.mxu0 0.0
        %1418 = vmatprep.subr.mxu0 0.0
        %1419 = vmatpush2.msra.mxu0 0.0
        %1420 = vmatprep.subr.mxu0 0.0
        %1421 = vmatpush2.msra.mxu0 0.0
        %1422 = vmatprep.subr.mxu0 0.0
        %1423 = vmatpush2.msra.mxu0 0.0
        %1424 = vmatprep.subr.mxu0 0.0
        %1425 = vmatpush2.msra.mxu0 0.0
        %1426 = vmatprep.subr.mxu0 0.0
        %1427 = vmatpush2.msra.mxu0 0.0
        %1428 = vmatprep.subr.mxu0 0.0
        %1429 = vmatpush2.msra.mxu0 0.0
        %1430 = vmatprep.subr.mxu0 0.0
        %1431 = vmatpush2.msra.mxu0 0.0
        %1432 = vmatprep.subr.mxu0 0.0
        %1433 = vmatpush2.msra.mxu0 0.0
        %1434 = vmatprep.subr.mxu0 0.0
        %1435 = vmatpush2.msra.mxu0 0.0
        %1436 = vmatprep.subr.mxu0 0.0
        %1437 = vmatpush2.msra.mxu0 0.0
        %1438 = vmatprep.subr.mxu0 0.0
        %1439 = vmatpush2.msra.mxu0 0.0
        %1440 = vmatprep.subr.mxu0 0.0
        %1441 = vmatpush2.msra.mxu0 0.0
        %1442 = vmatprep.subr.mxu0 0.0
        %1443 = vmatpush2.msra.mxu0 0.0
        %1444 = vmatprep.subr.mxu0 0.0
        %1445 = vmatpush2.msra.mxu0 0.0
        %1446 = vmatprep.mubr.f32.mxu0 0.0
        %1447 = vmatmul.mubr.f32.gmra.mxu0 %v1380
        %v1448 = vpop.f32.mrf.mxu0
        %v1449 = vadd.f32 0.0, %v1448
        %v1450 = vpop.f32.mrf.mxu0
        %1451 = vdwg.mxu0
        %v1452 = vrcp.pop %v1375
        %v1453 = vmul.f32 %v1449, %v1452
        %v1454 = vld [vmem:[#allocation10 + $0x18] sm:$0xff]
        %v1456 = vsel %vm572, %v1453, 0
        %1458 = vmatprep.subr.mxu0 0.0
        %1459 = vmatpush1.msra.mxu0 0.0
        %1460 = vmatprep.subr.mxu0 0.0
        %1461 = vmatpush1.msra.mxu0 0.0
        %1462 = vmatprep.subr.mxu0 0.0
        %1463 = vmatpush1.msra.mxu0 0.0
        %1464 = vmatprep.subr.mxu0 0.0
        %1465 = vmatpush1.msra.mxu0 0.0
        %1466 = vmatprep.subr.mxu0 0.0
        %1467 = vmatpush1.msra.mxu0 0.0
        %1468 = vmatprep.subr.mxu0 0.0
        %1469 = vmatpush1.msra.mxu0 0.0
        %1470 = vmatprep.subr.mxu0 0.0
        %1471 = vmatpush1.msra.mxu0 0.0
        %1472 = vmatprep.subr.mxu0 0.0
        %1473 = vmatpush1.msra.mxu0 0.0
        %1474 = vmatprep.subr.mxu0 0.0
        %1475 = vmatpush1.msra.mxu0 0.0
        %1476 = vmatprep.subr.mxu0 0.0
        %1477 = vmatpush1.msra.mxu0 0.0
        %1478 = vmatprep.subr.mxu0 0.0
        %1479 = vmatpush1.msra.mxu0 0.0
        %1480 = vmatprep.subr.mxu0 0.0
        %1481 = vmatpush1.msra.mxu0 0.0
        %1482 = vmatprep.subr.mxu0 0.0
        %1483 = vmatpush1.msra.mxu0 0.0
        %1484 = vmatprep.subr.mxu0 0.0
        %1485 = vmatpush1.msra.mxu0 0.0
        %1486 = vmatprep.subr.mxu0 0.0
        %1487 = vmatpush1.msra.mxu0 0.0
        %1488 = vmatprep.subr.mxu0 0.0
        %1489 = vmatpush1.msra.mxu0 %v1454
        %1490 = vmatprep.subr.mxu0 0.0
        %1491 = vmatpush2.msra.mxu0 0.0
        %1492 = vmatprep.subr.mxu0 0.0
        %1493 = vmatpush2.msra.mxu0 0.0
        %1494 = vmatprep.subr.mxu0 0.0
        %1495 = vmatpush2.msra.mxu0 0.0
        %1496 = vmatprep.subr.mxu0 0.0
        %1497 = vmatpush2.msra.mxu0 0.0
        %1498 = vmatprep.subr.mxu0 0.0
        %1499 = vmatpush2.msra.mxu0 0.0
        %1500 = vmatprep.subr.mxu0 0.0
        %1501 = vmatpush2.msra.mxu0 0.0
        %1502 = vmatprep.subr.mxu0 0.0
        %1503 = vmatpush2.msra.mxu0 0.0
        %1504 = vmatprep.subr.mxu0 0.0
        %1505 = vmatpush2.msra.mxu0 0.0
        %1506 = vmatprep.subr.mxu0 0.0
        %1507 = vmatpush2.msra.mxu0 0.0
        %1508 = vmatprep.subr.mxu0 0.0
        %1509 = vmatpush2.msra.mxu0 0.0
        %1510 = vmatprep.subr.mxu0 0.0
        %1511 = vmatpush2.msra.mxu0 0.0
        %1512 = vmatprep.subr.mxu0 0.0
        %1513 = vmatpush2.msra.mxu0 0.0
        %1514 = vmatprep.subr.mxu0 0.0
        %1515 = vmatpush2.msra.mxu0 0.0
        %1516 = vmatprep.subr.mxu0 0.0
        %1517 = vmatpush2.msra.mxu0 0.0
        %1518 = vmatprep.subr.mxu0 0.0
        %1519 = vmatpush2.msra.mxu0 0.0
        %1520 = vmatprep.subr.mxu0 0.0
        %1521 = vmatpush2.msra.mxu0 0.0
        %1522 = vmatprep.mubr.f32.mxu0 0.0
        %1523 = vmatmul.mubr.f32.gmra.mxu0 %v1456
        %v1524 = vpop.f32.mrf.mxu0
        %v1525 = vadd.f32 0.0, %v1524
        %v1526 = vpop.f32.mrf.mxu0
        %1527 = vdwg.mxu0
        %v1528 = vadd.f32 %v1288, %v1525
        %v1529 = vld [vmem:[%s7] sm:$0x1]
        %v1531 = vlaneseq
        %v1532 = vshrl.u32 %v1531, 7
        %v1533 = vsub.s32 0, %v1532
        %v1534 = vrot.slane %v1529, %v1533
        %v1536 = vadd.f32 %v1528, %v1534
        %1537 = vst.msk [vmem:[%s400] sm:$0xff] %vm414, %v1536
        %s1538 = sand.u32 %s215, 1
        %s1539 = scalar_lea.sflag [#allocation4], %s1538
        %s1540 = sand.u32 %s215, 1
        %s1541 = smul.addr %s1540, 8
        %s1542 = scalar_lea.vmem [#allocation11], %s1541
        // Predicated region
        $region73: #{tpu_custom_call.1} parent=51 // pred_check
          %p1543 = pneg %p225
        $region74: #{tpu_custom_call.1} parent=51 // pred_check_branch
          %1545 = sbr.rel (%p1543) target = $region76
        $region75: #{tpu_custom_call.1} parent=51 // pred_region
          %s1547 = ssub.s32 128, 128
          %1548 = vsyncadd %s1539, %s1547
          %s1549 = smul.addr %s29, 128
          %s1550 = scalar_lea.hbm %s8, %s1549
          %s1552 = sshll.u32 %s1542, 4
          %s1553 = int_to_ptr.vmem [resolvable:$true] %s1552
          %1555 = dma.vmem_to_hbm [thread:$0]  %s1553, 128, %s1550, %s1539
        $region76: #{tpu_custom_call.1} parent=51 // pred_fallthru
          _
      $region52: #{tpu_custom_call.1} parent=5 // pred_fallthru
        _
      %p1556 = scmp.le.s32.totalorder 2, %s24
      // Predicated region
      $region77: #{tpu_custom_call.1} parent=5 // pred_check
        %p1557 = pneg %p1556
      $region78: #{tpu_custom_call.1} parent=5 // pred_check_branch
        %1559 = sbr.rel (%p1557) target = $region80
      $region79: #{tpu_custom_call.1} parent=5 // pred_region
        %s1560 = ssub.s32 %s24, 2
        // Predicated region
        $region81: #{tpu_custom_call.1} parent=79 // pred_check
          %p1561 = pneg %p231
        $region82: #{tpu_custom_call.1} parent=79 // pred_check_branch
          %1563 = sbr.rel (%p1561) target = $region84
        $region83: #{tpu_custom_call.1} parent=79 // pred_region
          %s1564 = sand.u32 %s216, 1
          %s1565 = scalar_lea.sflag [#allocation4], %s1564
          %s1566 = sand.u32 %s216, 1
          %s1567 = smul.addr %s1566, 8
          %s1568 = scalar_lea.vmem [#allocation11], %s1567
          %1569 = dma.done %s1565, 128
        $region84: #{tpu_custom_call.1} parent=79 // pred_fallthru
          _
      $region80: #{tpu_custom_call.1} parent=5 // pred_fallthru
        _
    $region6: #{tpu_custom_call.1} parent=1 // loop_footer
      %s28 = sadd.s32 1, %s24
    $region7: #{tpu_custom_call.1} parent=1 // loop_footer_branch
      %23 = sbr.rel target = $region3
    $region8: #{tpu_custom_call.1} parent=1 // loop_exit
      _
    %1570 = vsyncpa [#allocation3], 1
    %s1571 = scalar_lea.sflag [#allocation3], 1
    %1572 = vsyncpa %s1571, 1
    %1573 = vsyncpa [#allocation6], 1
    %s1574 = scalar_lea.sflag [#allocation6], 1
    %1575 = vsyncpa %s1574, 1
    %1576 = vsyncpa [#allocation9], 1
    %1577 = vsyncpa [#allocation4], 1
    %s1578 = scalar_lea.sflag [#allocation4], 1
    %1579 = vsyncpa %s1578, 1

// kernel: tpu_custom_call.1
$region0: #{tpu_custom_call.1}
  #allocation0 [shape = 'u32[]', space=smem, size = 0x4, offset = 0x4, fixed_abs, tag = 'smem constant byte address 0x4 - core index']
  #allocation1 [shape = 'u32[144,128]{1,0:T(1,128)}', space=vmem, size = 0x12000, scoped, tag = 'internal scratch']
  %s0 = inlined_call_operand.hbm [shape: f32[2,8,32], index: 0, kind: input, shape index: {}]
  %s1 = inlined_call_operand.hbm [shape: f32[2,8,32], index: 1, kind: input, shape index: {}]
  %s2 = inlined_call_operand.hbm [shape: f32[32,32], index: 2, kind: input, shape index: {}]
  %s3 = inlined_call_operand.vmem [shape: f32[1,32], index: 3, kind: input, shape index: {}]
  %s4 = inlined_call_operand.hbm [shape: f32[32,64], index: 4, kind: input, shape index: {}]
  %s5 = inlined_call_operand.vmem [shape: f32[1,64], index: 5, kind: input, shape index: {}]
  %s6 = inlined_call_operand.hbm [shape: f32[32,32], index: 6, kind: input, shape index: {}]
  %s7 = inlined_call_operand.vmem [shape: f32[1,32], index: 7, kind: input, shape index: {}]
  %s8 = inlined_call_operand.hbm [shape: f32[2,8,32], index: 8, kind: output, shape index: {}]
  %s9 = sld [smem:[#allocation0]]
  $region85: #{tpu_custom_call.1} parent=0
    _
  %s11 = ssub.s32 1, %s9
  %s12 = scalar_select 0, %s11, %s9
  $region1: #{tpu_custom_call.1} parent=0
    #allocation2 [shape = 'u8[8192]{0}', space=vmem, size = 0x2000, scoped, tag = 'input window, operand 0']
    #allocation3 [shape = 's32[2]{0}', space=sflag, size = 0x8, scoped, tag = 'scoped memory for tpu_custom_call.1']
    #allocation4 [shape = 's32[2]{0}', space=sflag, size = 0x8, scoped, tag = 'scoped memory for tpu_custom_call.1']
    #allocation5 [shape = 'u8[8192]{0}', space=vmem, size = 0x2000, scoped, tag = 'input window, operand 1']
    #allocation6 [shape = 's32[2]{0}', space=sflag, size = 0x8, scoped, tag = 'scoped memory for tpu_custom_call.1']
    #allocation7 [shape = 'u8[16384]{0}', space=vmem, size = 0x4000, scoped, tag = 'input window, operand 2, single buffered']
    #allocation8 [shape = 'u8[16384]{0}', space=vmem, size = 0x4000, scoped, tag = 'input window, operand 4, single buffered']
    #allocation9 [shape = 's32[1]{0}', space=sflag, size = 0x4, scoped, tag = 'scoped memory for tpu_custom_call.1']
    #allocation10 [shape = 'u8[16384]{0}', space=vmem, size = 0x4000, scoped, tag = 'input window, operand 6, single buffered']
    #allocation11 [shape = 'u8[8192]{0}', space=vmem, size = 0x2000, scoped, tag = 'output window, operand 0']
    %13 = vsyncpa [#allocation3], 0
    %s14 = scalar_lea.sflag [#allocation3], 1
    %15 = vsyncpa %s14, 0
    %16 = vsyncpa [#allocation6], 0
    %s17 = scalar_lea.sflag [#allocation6], 1
    %18 = vsyncpa %s17, 0
    %19 = vsyncpa [#allocation9], 0
    %20 = vsyncpa [#allocation4], 0
    %s21 = scalar_lea.sflag [#allocation4], 1
    %22 = vsyncpa %s21, 0
    loop: start=0, step=1, limit=4
    $region2: #{tpu_custom_call.1} parent=1 // loop_pre_header
      _
    $region3: #{tpu_custom_call.1} parent=1 // loop_header
      %s24 = sphi 0, %s28
      %p25 = scmp.ge.s32.totalorder %s24, 4
      %s34 = sphi 0, %s36
      %s37 = sphi 0, %s34
      %s38 = sphi 0, %s37
      %s54 = sphi 0, %s38
      %s60 = sphi 0, %s62
      %s63 = sphi 0, %s60
      %s64 = sphi 0, %s63
      %s80 = sphi 0, %s64
      %s84 = sphi 0, %s84
      %s86 = sphi 0, %s84
      %s87 = sphi 0, %s86
      %s101 = sphi 0, %s87
      %s105 = sphi 0, %s105
      %s107 = sphi 0, %s105
      %s108 = sphi 0, %s107
      %s122 = sphi 0, %s108
      %s126 = sphi 0, %s126
      %s128 = sphi 0, %s126
      %s129 = sphi 0, %s128
      %s143 = sphi 0, %s129
      %s147 = sphi 0, %s147
      %s149 = sphi 0, %s147
      %s150 = sphi 0, %s149
      %s164 = sphi 0, %s150
      %s168 = sphi 0, %s168
      %s170 = sphi 0, %s168
      %s171 = sphi 0, %s170
      %s185 = sphi 0, %s171
      %s189 = sphi 0, %s189
      %s191 = sphi 0, %s189
      %s192 = sphi 0, %s191
      %s206 = sphi 0, %s192
      %s212 = sphi 0, %s214
      %s215 = sphi 0, %s212
      %s216 = sphi 0, %s215
      %s232 = sphi 0, %s216
    $region4: #{tpu_custom_call.1} parent=1 // loop_header_branch
      %27 = sbr.rel (%p25) target = $region8
    $region5: #{tpu_custom_call.1} parent=1 // loop_body
      %s29 = ssub.s32 %s24, 1
      %s30 = ssub.s32 %s24, 2
      %s31 = sadd.s32 %s24, 1
      %s32 = ssub.s32 %s24, %s31
      %p33 = scmp.eq.s32.totalorder %s32, 0
      %s35 = sadd.s32 %s34, 1
      %s36 = scalar_select %p33, %s34, %s35
      %p39 = pneg %p33
      %p40 = scmp.eq.s32.totalorder %s24, 1
      %p41 = por %p39, %p40
      %p42 = scmp.ne.s32.totalorder %s34, %s37
      %p43 = scmp.eq.s32.totalorder %s24, 0
      %p44 = por %p42, %p43
      %p45 = scmp.ne.s32.totalorder %s34, %s37
      %p46 = scmp.eq.s32.totalorder %s29, 1
      %p47 = por %p45, %p46
      %p48 = scmp.ne.s32.totalorder %s37, %s38
      %p49 = scmp.eq.s32.totalorder %s29, 0
      %p50 = por %p48, %p49
      %p51 = scmp.ne.s32.totalorder %s37, %s38
      %p52 = scmp.eq.s32.totalorder %s30, 1
      %p53 = por %p51, %p52
      %p55 = scmp.ne.s32.totalorder %s38, %s54
      %p56 = scmp.eq.s32.totalorder %s30, 0
      %p57 = por %p55, %p56
      %s58 = ssub.s32 %s24, %s31
      %p59 = scmp.eq.s32.totalorder %s58, 0
      %s61 = sadd.s32 %s60, 1
      %s62 = scalar_select %p59, %s60, %s61
      %p65 = pneg %p59
      %p66 = scmp.eq.s32.totalorder %s24, 1
      %p67 = por %p65, %p66
      %p68 = scmp.ne.s32.totalorder %s60, %s63
      %p69 = scmp.eq.s32.totalorder %s24, 0
      %p70 = por %p68, %p69
      %p71 = scmp.ne.s32.totalorder %s60, %s63
      %p72 = scmp.eq.s32.totalorder %s29, 1
      %p73 = por %p71, %p72
      %p74 = scmp.ne.s32.totalorder %s63, %s64
      %p75 = scmp.eq.s32.totalorder %s29, 0
      %p76 = por %p74, %p75
      %p77 = scmp.ne.s32.totalorder %s63, %s64
      %p78 = scmp.eq.s32.totalorder %s30, 1
      %p79 = por %p77, %p78
      %p81 = scmp.ne.s32.totalorder %s64, %s80
      %p82 = scmp.eq.s32.totalorder %s30, 0
      %p83 = por %p81, %p82
      %s85 = sadd.s32 %s84, 1
      %p88 = scmp.eq.s32.totalorder %s24, 1
      %p89 = scmp.ne.s32.totalorder %s84, %s86
      %p90 = scmp.eq.s32.totalorder %s24, 0
      %p91 = por %p89, %p90
      %p92 = scmp.ne.s32.totalorder %s84, %s86
      %p93 = scmp.eq.s32.totalorder %s29, 1
      %p94 = por %p92, %p93
      %p95 = scmp.ne.s32.totalorder %s86, %s87
      %p96 = scmp.eq.s32.totalorder %s29, 0
      %p97 = por %p95, %p96
      %p98 = scmp.ne.s32.totalorder %s86, %s87
      %p99 = scmp.eq.s32.totalorder %s30, 1
      %p100 = por %p98, %p99
      %p102 = scmp.ne.s32.totalorder %s87, %s101
      %p103 = scmp.eq.s32.totalorder %s30, 0
      %p104 = por %p102, %p103
      %s106 = sadd.s32 %s105, 1
      %p109 = scmp.eq.s32.totalorder %s24, 1
      %p110 = scmp.ne.s32.totalorder %s105, %s107
      %p111 = scmp.eq.s32.totalorder %s24, 0
      %p112 = por %p110, %p111
      %p113 = scmp.ne.s32.totalorder %s105, %s107
      %p114 = scmp.eq.s32.totalorder %s29, 1
      %p115 = por %p113, %p114
      %p116 = scmp.ne.s32.totalorder %s107, %s108
      %p117 = scmp.eq.s32.totalorder %s29, 0
      %p118 = por %p116, %p117
      %p119 = scmp.ne.s32.totalorder %s107, %s108
      %p120 = scmp.eq.s32.totalorder %s30, 1
      %p121 = por %p119, %p120
      %p123 = scmp.ne.s32.totalorder %s108, %s122
      %p124 = scmp.eq.s32.totalorder %s30, 0
      %p125 = por %p123, %p124
      %s127 = sadd.s32 %s126, 1
      %p130 = scmp.eq.s32.totalorder %s24, 1
      %p131 = scmp.ne.s32.totalorder %s126, %s128
      %p132 = scmp.eq.s32.totalorder %s24, 0
      %p133 = por %p131, %p132
      %p134 = scmp.ne.s32.totalorder %s126, %s128
      %p135 = scmp.eq.s32.totalorder %s29, 1
      %p136 = por %p134, %p135
      %p137 = scmp.ne.s32.totalorder %s128, %s129
      %p138 = scmp.eq.s32.totalorder %s29, 0
      %p139 = por %p137, %p138
      %p140 = scmp.ne.s32.totalorder %s128, %s129
      %p141 = scmp.eq.s32.totalorder %s30, 1
      %p142 = por %p140, %p141
      %p144 = scmp.ne.s32.totalorder %s129, %s143
      %p145 = scmp.eq.s32.totalorder %s30, 0
      %p146 = por %p144, %p145
      %s148 = sadd.s32 %s147, 1
      %p151 = scmp.eq.s32.totalorder %s24, 1
      %p152 = scmp.ne.s32.totalorder %s147, %s149
      %p153 = scmp.eq.s32.totalorder %s24, 0
      %p154 = por %p152, %p153
      %p155 = scmp.ne.s32.totalorder %s147, %s149
      %p156 = scmp.eq.s32.totalorder %s29, 1
      %p157 = por %p155, %p156
      %p158 = scmp.ne.s32.totalorder %s149, %s150
      %p159 = scmp.eq.s32.totalorder %s29, 0
      %p160 = por %p158, %p159
      %p161 = scmp.ne.s32.totalorder %s149, %s150
      %p162 = scmp.eq.s32.totalorder %s30, 1
      %p163 = por %p161, %p162
      %p165 = scmp.ne.s32.totalorder %s150, %s164
      %p166 = scmp.eq.s32.totalorder %s30, 0
      %p167 = por %p165, %p166
      %s169 = sadd.s32 %s168, 1
      %p172 = scmp.eq.s32.totalorder %s24, 1
      %p173 = scmp.ne.s32.totalorder %s168, %s170
      %p174 = scmp.eq.s32.totalorder %s24, 0
      %p175 = por %p173, %p174
      %p176 = scmp.ne.s32.totalorder %s168, %s170
      %p177 = scmp.eq.s32.totalorder %s29, 1
      %p178 = por %p176, %p177
      %p179 = scmp.ne.s32.totalorder %s170, %s171
      %p180 = scmp.eq.s32.totalorder %s29, 0
      %p181 = por %p179, %p180
      %p182 = scmp.ne.s32.totalorder %s170, %s171
      %p183 = scmp.eq.s32.totalorder %s30, 1
      %p184 = por %p182, %p183
      %p186 = scmp.ne.s32.totalorder %s171, %s185
      %p187 = scmp.eq.s32.totalorder %s30, 0
      %p188 = por %p186, %p187
      %s190 = sadd.s32 %s189, 1
      %p193 = scmp.eq.s32.totalorder %s24, 1
      %p194 = scmp.ne.s32.totalorder %s189, %s191
      %p195 = scmp.eq.s32.totalorder %s24, 0
      %p196 = por %p194, %p195
      %p197 = scmp.ne.s32.totalorder %s189, %s191
      %p198 = scmp.eq.s32.totalorder %s29, 1
      %p199 = por %p197, %p198
      %p200 = scmp.ne.s32.totalorder %s191, %s192
      %p201 = scmp.eq.s32.totalorder %s29, 0
      %p202 = por %p200, %p201
      %p203 = scmp.ne.s32.totalorder %s191, %s192
      %p204 = scmp.eq.s32.totalorder %s30, 1
      %p205 = por %p203, %p204
      %p207 = scmp.ne.s32.totalorder %s192, %s206
      %p208 = scmp.eq.s32.totalorder %s30, 0
      %p209 = por %p207, %p208
      %s210 = ssub.s32 %s24, %s31
      %p211 = scmp.eq.s32.totalorder %s210, 0
      %s213 = sadd.s32 %s212, 1
      %s214 = scalar_select %p211, %s212, %s213
      %p217 = pneg %p211
      %p218 = scmp.eq.s32.totalorder %s24, 1
      %p219 = por %p217, %p218
      %p220 = scmp.ne.s32.totalorder %s212, %s215
      %p221 = scmp.eq.s32.totalorder %s24, 0
      %p222 = por %p220, %p221
      %p223 = scmp.ne.s32.totalorder %s212, %s215
      %p224 = scmp.eq.s32.totalorder %s29, 1
      %p225 = por %p223, %p224
      %p226 = scmp.ne.s32.totalorder %s215, %s216
      %p227 = scmp.eq.s32.totalorder %s29, 0
      %p228 = por %p226, %p227
      %p229 = scmp.ne.s32.totalorder %s215, %s216
      %p230 = scmp.eq.s32.totalorder %s30, 1
      %p231 = por %p229, %p230
      %p233 = scmp.ne.s32.totalorder %s216, %s232
      %p234 = scmp.eq.s32.totalorder %s30, 0
      %p235 = por %p233, %p234
      %p236 = scmp.le.s32.totalorder 1, %s24
      %p237 = scmp.lt.s32.totalorder %s24, 3
      %p238 = pnand %p236, %p237
      %p239 = pneg %p238
      // Predicated region
      $region9: #{tpu_custom_call.1} parent=5 // pred_check
        _
      $region10: #{tpu_custom_call.1} parent=5 // pred_check_branch
        %241 = sbr.rel (%p238) target = $region12
      $region11: #{tpu_custom_call.1} parent=5 // pred_region
        %s242 = ssub.s32 %s24, 1
        // Predicated region
        $region13: #{tpu_custom_call.1} parent=11 // pred_check
          %p243 = pneg %p97
        $region14: #{tpu_custom_call.1} parent=11 // pred_check_branch
          %245 = sbr.rel (%p243) target = $region16
        $region15: #{tpu_custom_call.1} parent=11 // pred_region
          %s247 = ssub.s32 512, 512
          %248 = vsyncadd [#allocation6], %s247
          %s249 = sshll.u32 [#allocation7], 4
          %s250 = int_to_ptr.vmem [resolvable:$true] %s249
          %255 = dma.hbm_to_vmem [thread:$0]  %s2, 512, %s250, [#allocation6], 128, 128, 8
        $region16: #{tpu_custom_call.1} parent=11 // pred_fallthru
          _
        // Predicated region
        $region17: #{tpu_custom_call.1} parent=11 // pred_check
          %p256 = pneg %p118
        $region18: #{tpu_custom_call.1} parent=11 // pred_check_branch
          %258 = sbr.rel (%p256) target = $region20
        $region19: #{tpu_custom_call.1} parent=11 // pred_region
          _
        $region20: #{tpu_custom_call.1} parent=11 // pred_fallthru
          _
        // Predicated region
        $region21: #{tpu_custom_call.1} parent=11 // pred_check
          %p259 = pneg %p139
        $region22: #{tpu_custom_call.1} parent=11 // pred_check_branch
          %261 = sbr.rel (%p259) target = $region24
        $region23: #{tpu_custom_call.1} parent=11 // pred_region
          %s263 = ssub.s32 512, 512
          %264 = vsyncadd [#allocation9], %s263
          %s265 = sshll.u32 [#allocation8], 4
          %s266 = int_to_ptr.vmem [resolvable:$true] %s265
          %271 = dma.hbm_to_vmem [thread:$0]  %s4, 512, %s266, [#allocation9], 128, 128, 8
        $region24: #{tpu_custom_call.1} parent=11 // pred_fallthru
          _
        // Predicated region
        $region25: #{tpu_custom_call.1} parent=11 // pred_check
          %p272 = pneg %p160
        $region26: #{tpu_custom_call.1} parent=11 // pred_check_branch
          %274 = sbr.rel (%p272) target = $region28
        $region27: #{tpu_custom_call.1} parent=11 // pred_region
          _
        $region28: #{tpu_custom_call.1} parent=11 // pred_fallthru
          _
        // Predicated region
        $region29: #{tpu_custom_call.1} parent=11 // pred_check
          %p275 = pneg %p181
        $region30: #{tpu_custom_call.1} parent=11 // pred_check_branch
          %277 = sbr.rel (%p275) target = $region32
        $region31: #{tpu_custom_call.1} parent=11 // pred_region
          %s279 = ssub.s32 512, 512
          %280 = vsyncadd [#allocation9], %s279
          %s281 = sshll.u32 [#allocation10], 4
          %s282 = int_to_ptr.vmem [resolvable:$true] %s281
          %287 = dma.hbm_to_vmem [thread:$0]  %s6, 512, %s282, [#allocation9], 128, 128, 8
        $region32: #{tpu_custom_call.1} parent=11 // pred_fallthru
          _
        // Predicated region
        $region33: #{tpu_custom_call.1} parent=11 // pred_check
          %p288 = pneg %p202
        $region34: #{tpu_custom_call.1} parent=11 // pred_check_branch
          %290 = sbr.rel (%p288) target = $region36
        $region35: #{tpu_custom_call.1} parent=11 // pred_region
          _
        $region36: #{tpu_custom_call.1} parent=11 // pred_fallthru
          _
      $region12: #{tpu_custom_call.1} parent=5 // pred_fallthru
        _
      %p291 = scmp.lt.s32.totalorder %s24, 2
      // Predicated region
      $region37: #{tpu_custom_call.1} parent=5 // pred_check
        %p292 = pneg %p291
      $region38: #{tpu_custom_call.1} parent=5 // pred_check_branch
        %294 = sbr.rel (%p292) target = $region40
      $region39: #{tpu_custom_call.1} parent=5 // pred_region
        // Predicated region
        $region41: #{tpu_custom_call.1} parent=39 // pred_check
          %p295 = pneg %p44
        $region42: #{tpu_custom_call.1} parent=39 // pred_check_branch
          %297 = sbr.rel (%p295) target = $region44
        $region43: #{tpu_custom_call.1} parent=39 // pred_region
          %s298 = sand.u32 %s34, 1
          %s299 = scalar_lea.sflag [#allocation3], %s298
          %s300 = sand.u32 %s34, 1
          %s301 = smul.addr %s300, 8
          %s302 = scalar_lea.vmem [#allocation2], %s301
          %s304 = ssub.s32 128, 128
          %305 = vsyncadd %s299, %s304
          %s306 = smul.addr %s24, 128
          %s307 = scalar_lea.hbm %s0, %s306
          %s309 = sshll.u32 %s302, 4
          %s310 = int_to_ptr.vmem [resolvable:$true] %s309
          %312 = dma.hbm_to_vmem [thread:$0]  %s307, 128, %s310, %s299
        $region44: #{tpu_custom_call.1} parent=39 // pred_fallthru
          _
        // Predicated region
        $region45: #{tpu_custom_call.1} parent=39 // pred_check
          %p313 = pneg %p70
        $region46: #{tpu_custom_call.1} parent=39 // pred_check_branch
          %315 = sbr.rel (%p313) target = $region48
        $region47: #{tpu_custom_call.1} parent=39 // pred_region
          %s316 = sand.u32 %s24, 1
          %s317 = scalar_lea.sflag [#allocation6], %s316
          %s318 = sand.u32 %s60, 1
          %s319 = smul.addr %s318, 8
          %s320 = scalar_lea.vmem [#allocation5], %s319
          %s322 = ssub.s32 128, 128
          %323 = vsyncadd %s317, %s322
          %s324 = smul.addr %s24, 128
          %s325 = scalar_lea.hbm %s1, %s324
          %s327 = sshll.u32 %s320, 4
          %s328 = int_to_ptr.vmem [resolvable:$true] %s327
          %330 = dma.hbm_to_vmem [thread:$0]  %s325, 128, %s328, %s317
        $region48: #{tpu_custom_call.1} parent=39 // pred_fallthru
          _
      $region40: #{tpu_custom_call.1} parent=5 // pred_fallthru
        _
      %p331 = scmp.le.s32.totalorder 1, %s24
      %p332 = scmp.lt.s32.totalorder %s24, 3
      %p333 = pnand %p331, %p332
      %p334 = pneg %p333
      // Predicated region
      $region49: #{tpu_custom_call.1} parent=5 // pred_check
        _
      $region50: #{tpu_custom_call.1} parent=5 // pred_check_branch
        %336 = sbr.rel (%p333) target = $region52
      $region51: #{tpu_custom_call.1} parent=5 // pred_region
        %s337 = ssub.s32 %s24, 1
        %s338 = sand.u32 %s37, 1
        %s339 = scalar_lea.sflag [#allocation3], %s338
        %s340 = sand.u32 %s37, 1
        %s341 = smul.addr %s340, 8
        %s342 = scalar_lea.vmem [#allocation2], %s341
        // Predicated region
        $region53: #{tpu_custom_call.1} parent=51 // pred_check
          %p343 = pneg %p50
        $region54: #{tpu_custom_call.1} parent=51 // pred_check_branch
          %345 = sbr.rel (%p343) target = $region56
        $region55: #{tpu_custom_call.1} parent=51 // pred_region
          %346 = dma.done %s339, 128
        $region56: #{tpu_custom_call.1} parent=51 // pred_fallthru
          _
        %s347 = sand.u32 %s29, 1
        %s348 = scalar_lea.sflag [#allocation6], %s347
        %s349 = sand.u32 %s63, 1
        %s350 = smul.addr %s349, 8
        %s351 = scalar_lea.vmem [#allocation5], %s350
        // Predicated region
        $region57: #{tpu_custom_call.1} parent=51 // pred_check
          %p352 = pneg %p76
        $region58: #{tpu_custom_call.1} parent=51 // pred_check_branch
          %354 = sbr.rel (%p352) target = $region60
        $region59: #{tpu_custom_call.1} parent=51 // pred_region
          %355 = dma.done %s348, 128
        $region60: #{tpu_custom_call.1} parent=51 // pred_fallthru
          _
        // Predicated region
        $region61: #{tpu_custom_call.1} parent=51 // pred_check
          %p356 = pneg %p97
        $region62: #{tpu_custom_call.1} parent=51 // pred_check_branch
          %358 = sbr.rel (%p356) target = $region64
        $region63: #{tpu_custom_call.1} parent=51 // pred_region
          %359 = dma.done [#allocation6], 512
        $region64: #{tpu_custom_call.1} parent=51 // pred_fallthru
          _
        // Predicated region
        $region65: #{tpu_custom_call.1} parent=51 // pred_check
          %p360 = pneg %p139
        $region66: #{tpu_custom_call.1} parent=51 // pred_check_branch
          %362 = sbr.rel (%p360) target = $region68
        $region67: #{tpu_custom_call.1} parent=51 // pred_region
          %363 = dma.done [#allocation9], 512
        $region68: #{tpu_custom_call.1} parent=51 // pred_fallthru
          _
        // Predicated region
        $region69: #{tpu_custom_call.1} parent=51 // pred_check
          %p364 = pneg %p181
        $region70: #{tpu_custom_call.1} parent=51 // pred_check_branch
          %366 = sbr.rel (%p364) target = $region72
        $region71: #{tpu_custom_call.1} parent=51 // pred_region
          %367 = dma.done [#allocation9], 512
        $region72: #{tpu_custom_call.1} parent=51 // pred_fallthru
          _
        %s368 = sand.u32 %s37, 1
        %s369 = scalar_lea.sflag [#allocation3], %s368
        %s370 = sand.u32 %s37, 1
        %s371 = smul.addr %s370, 8
        %s372 = scalar_lea.vmem [#allocation2], %s371
        %p373 = pneg %p50
        %p374 = pneg %p47
        %s375 = sand.u32 %s29, 1
        %s376 = scalar_lea.sflag [#allocation6], %s375
        %s377 = sand.u32 %s63, 1
        %s378 = smul.addr %s377, 8
        %s379 = scalar_lea.vmem [#allocation5], %s378
        %p380 = pneg %p76
        %p381 = pneg %p73
        %p382 = pneg %p97
        %p383 = pneg %p94
        %p384 = pneg %p118
        %p385 = pneg %p115
        %p386 = pneg %p139
        %p387 = pneg %p136
        %p388 = pneg %p160
        %p389 = pneg %p157
        %p390 = pneg %p181
        %p391 = pneg %p178
        %p392 = pneg %p202
        %p393 = pneg %p199
        %p394 = pneg %p228
        %p395 = pneg %p225
        %s396 = sand.u32 %s215, 1
        %s397 = scalar_lea.sflag [#allocation4], %s396
        %s398 = sand.u32 %s215, 1
        %s399 = smul.addr %s398, 8
        %s400 = scalar_lea.vmem [#allocation11], %s399
        %v401 = vld [vmem:[%s342] sm:$0xff]
        %v402 = vld [vmem:[%s351] sm:$0xff]
        %v403 = vld [vmem:[#allocation7] sm:$0xff]
        %v404 = vld [vmem:[#allocation7 + $0x8] sm:$0xff]
        %v405 = vld [vmem:[#allocation7 + $0x10] sm:$0xff]
        %v406 = vld [vmem:[#allocation7 + $0x18] sm:$0xff]
        %v407 = vld [vmem:[%s3] sm:$0x1]
        %v409 = vlaneseq
        %v410 = vshrl.u32 %v409, 7
        %v411 = vsub.s32 0, %v410
        %v412 = vrot.slane %v407, %v411
        %vm414 = vcmask 261120
        %v416 = vsel %vm414, %v401, 0
        %418 = vmatprep.subr.mxu0 0.0
        %419 = vmatpush1.msra.mxu0 0.0
        %420 = vmatprep.subr.mxu0 0.0
        %421 = vmatpush1.msra.mxu0 0.0
        %422 = vmatprep.subr.mxu0 0.0
        %423 = vmatpush1.msra.mxu0 0.0
        %424 = vmatprep.subr.mxu0 0.0
        %425 = vmatpush1.msra.mxu0 0.0
        %426 = vmatprep.subr.mxu0 0.0
        %427 = vmatpush1.msra.mxu0 0.0
        %428 = vmatprep.subr.mxu0 0.0
        %429 = vmatpush1.msra.mxu0 0.0
        %430 = vmatprep.subr.mxu0 0.0
        %431 = vmatpush1.msra.mxu0 0.0
        %432 = vmatprep.subr.mxu0 0.0
        %433 = vmatpush1.msra.mxu0 0.0
        %434 = vmatprep.subr.mxu0 0.0
        %435 = vmatpush1.msra.mxu0 0.0
        %436 = vmatprep.subr.mxu0 0.0
        %437 = vmatpush1.msra.mxu0 0.0
        %438 = vmatprep.subr.mxu0 0.0
        %439 = vmatpush1.msra.mxu0 0.0
        %440 = vmatprep.subr.mxu0 0.0
        %441 = vmatpush1.msra.mxu0 0.0
        %442 = vmatprep.subr.mxu0 0.0
        %443 = vmatpush1.msra.mxu0 %v406
        %444 = vmatprep.subr.mxu0 0.0
        %445 = vmatpush1.msra.mxu0 %v405
        %446 = vmatprep.subr.mxu0 0.0
        %447 = vmatpush1.msra.mxu0 %v404
        %448 = vmatprep.subr.mxu0 0.0
        %449 = vmatpush1.msra.mxu0 %v403
        %450 = vmatprep.subr.mxu0 0.0
        %451 = vmatpush2.msra.mxu0 0.0
        %452 = vmatprep.subr.mxu0 0.0
        %453 = vmatpush2.msra.mxu0 0.0
        %454 = vmatprep.subr.mxu0 0.0
        %455 = vmatpush2.msra.mxu0 0.0
        %456 = vmatprep.subr.mxu0 0.0
        %457 = vmatpush2.msra.mxu0 0.0
        %458 = vmatprep.subr.mxu0 0.0
        %459 = vmatpush2.msra.mxu0 0.0
        %460 = vmatprep.subr.mxu0 0.0
        %461 = vmatpush2.msra.mxu0 0.0
        %462 = vmatprep.subr.mxu0 0.0
        %463 = vmatpush2.msra.mxu0 0.0
        %464 = vmatprep.subr.mxu0 0.0
        %465 = vmatpush2.msra.mxu0 0.0
        %466 = vmatprep.subr.mxu0 0.0
        %467 = vmatpush2.msra.mxu0 0.0
        %468 = vmatprep.subr.mxu0 0.0
        %469 = vmatpush2.msra.mxu0 0.0
        %470 = vmatprep.subr.mxu0 0.0
        %471 = vmatpush2.msra.mxu0 0.0
        %472 = vmatprep.subr.mxu0 0.0
        %473 = vmatpush2.msra.mxu0 0.0
        %474 = vmatprep.subr.mxu0 0.0
        %475 = vmatpush2.msra.mxu0 0.0
        %476 = vmatprep.subr.mxu0 0.0
        %477 = vmatpush2.msra.mxu0 0.0
        %478 = vmatprep.subr.mxu0 0.0
        %479 = vmatpush2.msra.mxu0 0.0
        %480 = vmatprep.subr.mxu0 0.0
        %481 = vmatpush2.msra.mxu0 0.0
        %482 = vmatprep.mubr.f32.mxu0 0.0
        %483 = vmatmul.mubr.f32.gmra.mxu0 %v416
        %v484 = vpop.f32.mrf.mxu0
        %v485 = vadd.f32 %v412, %v484
        %v486 = vpop.f32.mrf.mxu0
        %487 = vdwg.mxu0
        %v488 = vld [vmem:[#allocation8] sm:$0xff]
        %v489 = vld [vmem:[#allocation8 + $0x8] sm:$0xff]
        %v490 = vld [vmem:[#allocation8 + $0x10] sm:$0xff]
        %v491 = vld [vmem:[#allocation8 + $0x18] sm:$0xff]
        %v492 = vld [vmem:[%s5] sm:$0x1]
        %v494 = vlaneseq
        %v495 = vshrl.u32 %v494, 7
        %v496 = vsub.s32 0, %v495
        %v497 = vrot.slane %v492, %v496
        %v500 = vsel %vm414, %v402, 0
        %502 = vmatprep.subr.mxu0 0.0
        %503 = vmatpush1.msra.mxu0 0.0
        %504 = vmatprep.subr.mxu0 0.0
        %505 = vmatpush1.msra.mxu0 0.0
        %506 = vmatprep.subr.mxu0 0.0
        %507 = vmatpush1.msra.mxu0 0.0
        %508 = vmatprep.subr.mxu0 0.0
        %509 = vmatpush1.msra.mxu0 0.0
        %510 = vmatprep.subr.mxu0 0.0
        %511 = vmatpush1.msra.mxu0 0.0
        %512 = vmatprep.subr.mxu0 0.0
        %513 = vmatpush1.msra.mxu0 0.0
        %514 = vmatprep.subr.mxu0 0.0
        %515 = vmatpush1.msra.mxu0 0.0
        %516 = vmatprep.subr.mxu0 0.0
        %517 = vmatpush1.msra.mxu0 0.0
        %518 = vmatprep.subr.mxu0 0.0
        %519 = vmatpush1.msra.mxu0 0.0
        %520 = vmatprep.subr.mxu0 0.0
        %521 = vmatpush1.msra.mxu0 0.0
        %522 = vmatprep.subr.mxu0 0.0
        %523 = vmatpush1.msra.mxu0 0.0
        %524 = vmatprep.subr.mxu0 0.0
        %525 = vmatpush1.msra.mxu0 0.0
        %526 = vmatprep.subr.mxu0 0.0
        %527 = vmatpush1.msra.mxu0 %v491
        %528 = vmatprep.subr.mxu0 0.0
        %529 = vmatpush1.msra.mxu0 %v490
        %530 = vmatprep.subr.mxu0 0.0
        %531 = vmatpush1.msra.mxu0 %v489
        %532 = vmatprep.subr.mxu0 0.0
        %533 = vmatpush1.msra.mxu0 %v488
        %534 = vmatprep.subr.mxu0 0.0
        %535 = vmatpush2.msra.mxu0 0.0
        %536 = vmatprep.subr.mxu0 0.0
        %537 = vmatpush2.msra.mxu0 0.0
        %538 = vmatprep.subr.mxu0 0.0
        %539 = vmatpush2.msra.mxu0 0.0
        %540 = vmatprep.subr.mxu0 0.0
        %541 = vmatpush2.msra.mxu0 0.0
        %542 = vmatprep.subr.mxu0 0.0
        %543 = vmatpush2.msra.mxu0 0.0
        %544 = vmatprep.subr.mxu0 0.0
        %545 = vmatpush2.msra.mxu0 0.0
        %546 = vmatprep.subr.mxu0 0.0
        %547 = vmatpush2.msra.mxu0 0.0
        %548 = vmatprep.subr.mxu0 0.0
        %549 = vmatpush2.msra.mxu0 0.0
        %550 = vmatprep.subr.mxu0 0.0
        %551 = vmatpush2.msra.mxu0 0.0
        %552 = vmatprep.subr.mxu0 0.0
        %553 = vmatpush2.msra.mxu0 0.0
        %554 = vmatprep.subr.mxu0 0.0
        %555 = vmatpush2.msra.mxu0 0.0
        %556 = vmatprep.subr.mxu0 0.0
        %557 = vmatpush2.msra.mxu0 0.0
        %558 = vmatprep.subr.mxu0 0.0
        %559 = vmatpush2.msra.mxu0 0.0
        %560 = vmatprep.subr.mxu0 0.0
        %561 = vmatpush2.msra.mxu0 0.0
        %562 = vmatprep.subr.mxu0 0.0
        %563 = vmatpush2.msra.mxu0 0.0
        %564 = vmatprep.subr.mxu0 0.0
        %565 = vmatpush2.msra.mxu0 0.0
        %566 = vmatprep.mubr.f32.mxu0 0.0
        %567 = vmatmul.mubr.f32.gmra.mxu0 %v500
        %v568 = vpop.f32.mrf.mxu0
        %v569 = vadd.f32 %v497, %v568
        %v570 = vpop.f32.mrf.mxu0
        %571 = vdwg.mxu0
        %vm572 = vcmask 64512
        %v574 = vsel %vm572, %v485, 0
        %v577 = vsel %vm572, %v569, 0
        %579 = vmatprep.subr.mxu0 0.0
        %580 = vmatpush1.xpose.msra.mxu0 0.0
        %581 = vmatprep.subr.mxu0 0.0
        %582 = vmatpush1.xpose.msra.mxu0 0.0
        %583 = vmatprep.subr.mxu0 0.0
        %584 = vmatpush1.xpose.msra.mxu0 0.0
        %585 = vmatprep.subr.mxu0 0.0
        %586 = vmatpush1.xpose.msra.mxu0 0.0
        %587 = vmatprep.subr.mxu0 0.0
        %588 = vmatpush1.xpose.msra.mxu0 0.0
        %589 = vmatprep.subr.mxu0 0.0
        %590 = vmatpush1.xpose.msra.mxu0 0.0
        %591 = vmatprep.subr.mxu0 0.0
        %592 = vmatpush1.xpose.msra.mxu0 0.0
        %593 = vmatprep.subr.mxu0 0.0
        %594 = vmatpush1.xpose.msra.mxu0 0.0
        %595 = vmatprep.subr.mxu0 0.0
        %596 = vmatpush1.xpose.msra.mxu0 0.0
        %597 = vmatprep.subr.mxu0 0.0
        %598 = vmatpush1.xpose.msra.mxu0 0.0
        %599 = vmatprep.subr.mxu0 0.0
        %600 = vmatpush1.xpose.msra.mxu0 0.0
        %601 = vmatprep.subr.mxu0 0.0
        %602 = vmatpush1.xpose.msra.mxu0 0.0
        %603 = vmatprep.subr.mxu0 0.0
        %604 = vmatpush1.xpose.msra.mxu0 0.0
        %605 = vmatprep.subr.mxu0 0.0
        %606 = vmatpush1.xpose.msra.mxu0 0.0
        %607 = vmatprep.subr.mxu0 0.0
        %608 = vmatpush1.xpose.msra.mxu0 0.0
        %609 = vmatprep.subr.mxu0 0.0
        %610 = vmatpush1.xpose.msra.mxu0 %v577
        %611 = vmatprep.subr.mxu0 0.0
        %612 = vmatpush2.xpose.msra.mxu0 0.0
        %613 = vmatprep.subr.mxu0 0.0
        %614 = vmatpush2.xpose.msra.mxu0 0.0
        %615 = vmatprep.subr.mxu0 0.0
        %616 = vmatpush2.xpose.msra.mxu0 0.0
        %617 = vmatprep.subr.mxu0 0.0
        %618 = vmatpush2.xpose.msra.mxu0 0.0
        %619 = vmatprep.subr.mxu0 0.0
        %620 = vmatpush2.xpose.msra.mxu0 0.0
        %621 = vmatprep.subr.mxu0 0.0
        %622 = vmatpush2.xpose.msra.mxu0 0.0
        %623 = vmatprep.subr.mxu0 0.0
        %624 = vmatpush2.xpose.msra.mxu0 0.0
        %625 = vmatprep.subr.mxu0 0.0
        %626 = vmatpush2.xpose.msra.mxu0 0.0
        %627 = vmatprep.subr.mxu0 0.0
        %628 = vmatpush2.xpose.msra.mxu0 0.0
        %629 = vmatprep.subr.mxu0 0.0
        %630 = vmatpush2.xpose.msra.mxu0 0.0
        %631 = vmatprep.subr.mxu0 0.0
        %632 = vmatpush2.xpose.msra.mxu0 0.0
        %633 = vmatprep.subr.mxu0 0.0
        %634 = vmatpush2.xpose.msra.mxu0 0.0
        %635 = vmatprep.subr.mxu0 0.0
        %636 = vmatpush2.xpose.msra.mxu0 0.0
        %637 = vmatprep.subr.mxu0 0.0
        %638 = vmatpush2.xpose.msra.mxu0 0.0
        %639 = vmatprep.subr.mxu0 0.0
        %640 = vmatpush2.xpose.msra.mxu0 0.0
        %641 = vmatprep.subr.mxu0 0.0
        %642 = vmatpush2.xpose.msra.mxu0 0.0
        %643 = vmatprep.mubr.f32.mxu0 0.0
        %644 = vmatmul.mubr.f32.gmra.mxu0 %v574
        %v645 = vpop.f32.mrf.mxu0
        %v646 = vadd.f32 0.0, %v645
        %v647 = vpop.f32.mrf.mxu0
        %648 = vdwg.mxu0
        %v649 = vsel %vm572, %v646, -inf
        %650 = vmax.xlane.f32.xlu0 %v649
        %v651 = vpop.xlane.xlu0 %650
        %v652 = vsub.f32 %v646, %v651
        %v653 = vmul.f32 %v652, 1.442695
        %v654 = vpow.pop %v653
        %v655 = vsel %vm572, %v654, 0.0
        %656 = vadd.xlane.f32.xlu0 %v655
        %v657 = vpop.xlane.xlu0 %656
        %658 = vrot.lane.b32.xlu0 %v569, 96
        %v659 = vpop.permute.xlu0 %658
        %v662 = vsel %vm572, %v654, 0
        %664 = vmatprep.subr.mxu0 0.0
        %665 = vmatpush1.msra.mxu0 0.0
        %666 = vmatprep.subr.mxu0 0.0
        %667 = vmatpush1.msra.mxu0 0.0
        %668 = vmatprep.subr.mxu0 0.0
        %669 = vmatpush1.msra.mxu0 0.0
        %670 = vmatprep.subr.mxu0 0.0
        %671 = vmatpush1.msra.mxu0 0.0
        %672 = vmatprep.subr.mxu0 0.0
        %673 = vmatpush1.msra.mxu0 0.0
        %674 = vmatprep.subr.mxu0 0.0
        %675 = vmatpush1.msra.mxu0 0.0
        %676 = vmatprep.subr.mxu0 0.0
        %677 = vmatpush1.msra.mxu0 0.0
        %678 = vmatprep.subr.mxu0 0.0
        %679 = vmatpush1.msra.mxu0 0.0
        %680 = vmatprep.subr.mxu0 0.0
        %681 = vmatpush1.msra.mxu0 0.0
        %682 = vmatprep.subr.mxu0 0.0
        %683 = vmatpush1.msra.mxu0 0.0
        %684 = vmatprep.subr.mxu0 0.0
        %685 = vmatpush1.msra.mxu0 0.0
        %686 = vmatprep.subr.mxu0 0.0
        %687 = vmatpush1.msra.mxu0 0.0
        %688 = vmatprep.subr.mxu0 0.0
        %689 = vmatpush1.msra.mxu0 0.0
        %690 = vmatprep.subr.mxu0 0.0
        %691 = vmatpush1.msra.mxu0 0.0
        %692 = vmatprep.subr.mxu0 0.0
        %693 = vmatpush1.msra.mxu0 0.0
        %694 = vmatprep.subr.mxu0 0.0
        %695 = vmatpush1.msra.mxu0 %v659
        %696 = vmatprep.subr.mxu0 0.0
        %697 = vmatpush2.msra.mxu0 0.0
        %698 = vmatprep.subr.mxu0 0.0
        %699 = vmatpush2.msra.mxu0 0.0
        %700 = vmatprep.subr.mxu0 0.0
        %701 = vmatpush2.msra.mxu0 0.0
        %702 = vmatprep.subr.mxu0 0.0
        %703 = vmatpush2.msra.mxu0 0.0
        %704 = vmatprep.subr.mxu0 0.0
        %705 = vmatpush2.msra.mxu0 0.0
        %706 = vmatprep.subr.mxu0 0.0
        %707 = vmatpush2.msra.mxu0 0.0
        %708 = vmatprep.subr.mxu0 0.0
        %709 = vmatpush2.msra.mxu0 0.0
        %710 = vmatprep.subr.mxu0 0.0
        %711 = vmatpush2.msra.mxu0 0.0
        %712 = vmatprep.subr.mxu0 0.0
        %713 = vmatpush2.msra.mxu0 0.0
        %714 = vmatprep.subr.mxu0 0.0
        %715 = vmatpush2.msra.mxu0 0.0
        %716 = vmatprep.subr.mxu0 0.0
        %717 = vmatpush2.msra.mxu0 0.0
        %718 = vmatprep.subr.mxu0 0.0
        %719 = vmatpush2.msra.mxu0 0.0
        %720 = vmatprep.subr.mxu0 0.0
        %721 = vmatpush2.msra.mxu0 0.0
        %722 = vmatprep.subr.mxu0 0.0
        %723 = vmatpush2.msra.mxu0 0.0
        %724 = vmatprep.subr.mxu0 0.0
        %725 = vmatpush2.msra.mxu0 0.0
        %726 = vmatprep.subr.mxu0 0.0
        %727 = vmatpush2.msra.mxu0 0.0
        %728 = vmatprep.mubr.f32.mxu0 0.0
        %729 = vmatmul.mubr.f32.gmra.mxu0 %v662
        %v730 = vpop.f32.mrf.mxu0
        %v731 = vadd.f32 0.0, %v730
        %v732 = vpop.f32.mrf.mxu0
        %733 = vdwg.mxu0
        %v734 = vrcp.pop %v657
        %v735 = vmul.f32 %v731, %v734
        %v736 = vld [vmem:[#allocation10] sm:$0xff]
        %737 = vrot.lane.b32.xlu0 %v485, 120
        %v738 = vpop.permute.xlu0 %737
        %739 = vrot.lane.b32.xlu0 %v569, 120
        %v740 = vpop.permute.xlu0 %739
        %v741 = vsel %vm572, %v738, 0
        %v743 = vsel %vm572, %v740, 0
        %745 = vmatprep.subr.mxu0 0.0
        %746 = vmatpush1.xpose.msra.mxu0 0.0
        %747 = vmatprep.subr.mxu0 0.0
        %748 = vmatpush1.xpose.msra.mxu0 0.0
        %749 = vmatprep.subr.mxu0 0.0
        %750 = vmatpush1.xpose.msra.mxu0 0.0
        %751 = vmatprep.subr.mxu0 0.0
        %752 = vmatpush1.xpose.msra.mxu0 0.0
        %753 = vmatprep.subr.mxu0 0.0
        %754 = vmatpush1.xpose.msra.mxu0 0.0
        %755 = vmatprep.subr.mxu0 0.0
        %756 = vmatpush1.xpose.msra.mxu0 0.0
        %757 = vmatprep.subr.mxu0 0.0
        %758 = vmatpush1.xpose.msra.mxu0 0.0
        %759 = vmatprep.subr.mxu0 0.0
        %760 = vmatpush1.xpose.msra.mxu0 0.0
        %761 = vmatprep.subr.mxu0 0.0
        %762 = vmatpush1.xpose.msra.mxu0 0.0
        %763 = vmatprep.subr.mxu0 0.0
        %764 = vmatpush1.xpose.msra.mxu0 0.0
        %765 = vmatprep.subr.mxu0 0.0
        %766 = vmatpush1.xpose.msra.mxu0 0.0
        %767 = vmatprep.subr.mxu0 0.0
        %768 = vmatpush1.xpose.msra.mxu0 0.0
        %769 = vmatprep.subr.mxu0 0.0
        %770 = vmatpush1.xpose.msra.mxu0 0.0
        %771 = vmatprep.subr.mxu0 0.0
        %772 = vmatpush1.xpose.msra.mxu0 0.0
        %773 = vmatprep.subr.mxu0 0.0
        %774 = vmatpush1.xpose.msra.mxu0 0.0
        %775 = vmatprep.subr.mxu0 0.0
        %776 = vmatpush1.xpose.msra.mxu0 %v743
        %777 = vmatprep.subr.mxu0 0.0
        %778 = vmatpush2.xpose.msra.mxu0 0.0
        %779 = vmatprep.subr.mxu0 0.0
        %780 = vmatpush2.xpose.msra.mxu0 0.0
        %781 = vmatprep.subr.mxu0 0.0
        %782 = vmatpush2.xpose.msra.mxu0 0.0
        %783 = vmatprep.subr.mxu0 0.0
        %784 = vmatpush2.xpose.msra.mxu0 0.0
        %785 = vmatprep.subr.mxu0 0.0
        %786 = vmatpush2.xpose.msra.mxu0 0.0
        %787 = vmatprep.subr.mxu0 0.0
        %788 = vmatpush2.xpose.msra.mxu0 0.0
        %789 = vmatprep.subr.mxu0 0.0
        %790 = vmatpush2.xpose.msra.mxu0 0.0
        %791 = vmatprep.subr.mxu0 0.0
        %792 = vmatpush2.xpose.msra.mxu0 0.0
        %793 = vmatprep.subr.mxu0 0.0
        %794 = vmatpush2.xpose.msra.mxu0 0.0
        %795 = vmatprep.subr.mxu0 0.0
        %796 = vmatpush2.xpose.msra.mxu0 0.0
        %797 = vmatprep.subr.mxu0 0.0
        %798 = vmatpush2.xpose.msra.mxu0 0.0
        %799 = vmatprep.subr.mxu0 0.0
        %800 = vmatpush2.xpose.msra.mxu0 0.0
        %801 = vmatprep.subr.mxu0 0.0
        %802 = vmatpush2.xpose.msra.mxu0 0.0
        %803 = vmatprep.subr.mxu0 0.0
        %804 = vmatpush2.xpose.msra.mxu0 0.0
        %805 = vmatprep.subr.mxu0 0.0
        %806 = vmatpush2.xpose.msra.mxu0 0.0
        %807 = vmatprep.subr.mxu0 0.0
        %808 = vmatpush2.xpose.msra.mxu0 0.0
        %809 = vmatprep.mubr.f32.mxu0 0.0
        %810 = vmatmul.mubr.f32.gmra.mxu0 %v741
        %v811 = vpop.f32.mrf.mxu0
        %v812 = vadd.f32 0.0, %v811
        %v813 = vpop.f32.mrf.mxu0
        %814 = vdwg.mxu0
        %v815 = vsel %vm572, %v812, -inf
        %816 = vmax.xlane.f32.xlu0 %v815
        %v817 = vpop.xlane.xlu0 %816
        %v818 = vsub.f32 %v812, %v817
        %v819 = vmul.f32 %v818, 1.442695
        %v820 = vpow.pop %v819
        %v821 = vsel %vm572, %v820, 0.0
        %822 = vadd.xlane.f32.xlu0 %v821
        %v823 = vpop.xlane.xlu0 %822
        %824 = vrot.lane.b32.xlu0 %v569, 88
        %v825 = vpop.permute.xlu0 %824
        %v828 = vsel %vm572, %v820, 0
        %830 = vmatprep.subr.mxu0 0.0
        %831 = vmatpush1.msra.mxu0 0.0
        %832 = vmatprep.subr.mxu0 0.0
        %833 = vmatpush1.msra.mxu0 0.0
        %834 = vmatprep.subr.mxu0 0.0
        %835 = vmatpush1.msra.mxu0 0.0
        %836 = vmatprep.subr.mxu0 0.0
        %837 = vmatpush1.msra.mxu0 0.0
        %838 = vmatprep.subr.mxu0 0.0
        %839 = vmatpush1.msra.mxu0 0.0
        %840 = vmatprep.subr.mxu0 0.0
        %841 = vmatpush1.msra.mxu0 0.0
        %842 = vmatprep.subr.mxu0 0.0
        %843 = vmatpush1.msra.mxu0 0.0
        %844 = vmatprep.subr.mxu0 0.0
        %845 = vmatpush1.msra.mxu0 0.0
        %846 = vmatprep.subr.mxu0 0.0
        %847 = vmatpush1.msra.mxu0 0.0
        %848 = vmatprep.subr.mxu0 0.0
        %849 = vmatpush1.msra.mxu0 0.0
        %850 = vmatprep.subr.mxu0 0.0
        %851 = vmatpush1.msra.mxu0 0.0
        %852 = vmatprep.subr.mxu0 0.0
        %853 = vmatpush1.msra.mxu0 0.0
        %854 = vmatprep.subr.mxu0 0.0
        %855 = vmatpush1.msra.mxu0 0.0
        %856 = vmatprep.subr.mxu0 0.0
        %857 = vmatpush1.msra.mxu0 0.0
        %858 = vmatprep.subr.mxu0 0.0
        %859 = vmatpush1.msra.mxu0 0.0
        %860 = vmatprep.subr.mxu0 0.0
        %861 = vmatpush1.msra.mxu0 %v825
        %862 = vmatprep.subr.mxu0 0.0
        %863 = vmatpush2.msra.mxu0 0.0
        %864 = vmatprep.subr.mxu0 0.0
        %865 = vmatpush2.msra.mxu0 0.0
        %866 = vmatprep.subr.mxu0 0.0
        %867 = vmatpush2.msra.mxu0 0.0
        %868 = vmatprep.subr.mxu0 0.0
        %869 = vmatpush2.msra.mxu0 0.0
        %870 = vmatprep.subr.mxu0 0.0
        %871 = vmatpush2.msra.mxu0 0.0
        %872 = vmatprep.subr.mxu0 0.0
        %873 = vmatpush2.msra.mxu0 0.0
        %874 = vmatprep.subr.mxu0 0.0
        %875 = vmatpush2.msra.mxu0 0.0
        %876 = vmatprep.subr.mxu0 0.0
        %877 = vmatpush2.msra.mxu0 0.0
        %878 = vmatprep.subr.mxu0 0.0
        %879 = vmatpush2.msra.mxu0 0.0
        %880 = vmatprep.subr.mxu0 0.0
        %881 = vmatpush2.msra.mxu0 0.0
        %882 = vmatprep.subr.mxu0 0.0
        %883 = vmatpush2.msra.mxu0 0.0
        %884 = vmatprep.subr.mxu0 0.0
        %885 = vmatpush2.msra.mxu0 0.0
        %886 = vmatprep.subr.mxu0 0.0
        %887 = vmatpush2.msra.mxu0 0.0
        %888 = vmatprep.subr.mxu0 0.0
        %889 = vmatpush2.msra.mxu0 0.0
        %890 = vmatprep.subr.mxu0 0.0
        %891 = vmatpush2.msra.mxu0 0.0
        %892 = vmatprep.subr.mxu0 0.0
        %893 = vmatpush2.msra.mxu0 0.0
        %894 = vmatprep.mubr.f32.mxu0 0.0
        %895 = vmatmul.mubr.f32.gmra.mxu0 %v828
        %v896 = vpop.f32.mrf.mxu0
        %v897 = vadd.f32 0.0, %v896
        %v898 = vpop.f32.mrf.mxu0
        %899 = vdwg.mxu0
        %v900 = vrcp.pop %v823
        %v901 = vmul.f32 %v897, %v900
        %v902 = vld [vmem:[#allocation10 + $0x8] sm:$0xff]
        %v904 = vsel %vm572, %v901, 0
        %906 = vmatprep.subr.mxu0 0.0
        %907 = vmatpush1.msra.mxu0 0.0
        %908 = vmatprep.subr.mxu0 0.0
        %909 = vmatpush1.msra.mxu0 0.0
        %910 = vmatprep.subr.mxu0 0.0
        %911 = vmatpush1.msra.mxu0 0.0
        %912 = vmatprep.subr.mxu0 0.0
        %913 = vmatpush1.msra.mxu0 0.0
        %914 = vmatprep.subr.mxu0 0.0
        %915 = vmatpush1.msra.mxu0 0.0
        %916 = vmatprep.subr.mxu0 0.0
        %917 = vmatpush1.msra.mxu0 0.0
        %918 = vmatprep.subr.mxu0 0.0
        %919 = vmatpush1.msra.mxu0 0.0
        %920 = vmatprep.subr.mxu0 0.0
        %921 = vmatpush1.msra.mxu0 0.0
        %922 = vmatprep.subr.mxu0 0.0
        %923 = vmatpush1.msra.mxu0 0.0
        %924 = vmatprep.subr.mxu0 0.0
        %925 = vmatpush1.msra.mxu0 0.0
        %926 = vmatprep.subr.mxu0 0.0
        %927 = vmatpush1.msra.mxu0 0.0
        %928 = vmatprep.subr.mxu0 0.0
        %929 = vmatpush1.msra.mxu0 0.0
        %930 = vmatprep.subr.mxu0 0.0
        %931 = vmatpush1.msra.mxu0 0.0
        %932 = vmatprep.subr.mxu0 0.0
        %933 = vmatpush1.msra.mxu0 0.0
        %934 = vmatprep.subr.mxu0 0.0
        %935 = vmatpush1.msra.mxu0 0.0
        %936 = vmatprep.subr.mxu0 0.0
        %937 = vmatpush1.msra.mxu0 %v902
        %938 = vmatprep.subr.mxu0 0.0
        %939 = vmatpush2.msra.mxu0 0.0
        %940 = vmatprep.subr.mxu0 0.0
        %941 = vmatpush2.msra.mxu0 0.0
        %942 = vmatprep.subr.mxu0 0.0
        %943 = vmatpush2.msra.mxu0 0.0
        %944 = vmatprep.subr.mxu0 0.0
        %945 = vmatpush2.msra.mxu0 0.0
        %946 = vmatprep.subr.mxu0 0.0
        %947 = vmatpush2.msra.mxu0 0.0
        %948 = vmatprep.subr.mxu0 0.0
        %949 = vmatpush2.msra.mxu0 0.0
        %950 = vmatprep.subr.mxu0 0.0
        %951 = vmatpush2.msra.mxu0 0.0
        %952 = vmatprep.subr.mxu0 0.0
        %953 = vmatpush2.msra.mxu0 0.0
        %954 = vmatprep.subr.mxu0 0.0
        %955 = vmatpush2.msra.mxu0 0.0
        %956 = vmatprep.subr.mxu0 0.0
        %957 = vmatpush2.msra.mxu0 0.0
        %958 = vmatprep.subr.mxu0 0.0
        %959 = vmatpush2.msra.mxu0 0.0
        %960 = vmatprep.subr.mxu0 0.0
        %961 = vmatpush2.msra.mxu0 0.0
        %962 = vmatprep.subr.mxu0 0.0
        %963 = vmatpush2.msra.mxu0 0.0
        %964 = vmatprep.subr.mxu0 0.0
        %965 = vmatpush2.msra.mxu0 0.0
        %966 = vmatprep.subr.mxu0 0.0
        %967 = vmatpush2.msra.mxu0 0.0
        %968 = vmatprep.subr.mxu0 0.0
        %969 = vmatpush2.msra.mxu0 0.0
        %970 = vmatprep.mubr.f32.mxu0 0.0
        %971 = vmatmul.mubr.f32.gmra.mxu0 %v904
        %v972 = vpop.f32.mrf.mxu0
        %v973 = vadd.f32 0.0, %v972
        %v974 = vpop.f32.mrf.mxu0
        %975 = vdwg.mxu0
        %v977 = vsel %vm572, %v735, 0
        %979 = vmatprep.subr.mxu0 0.0
        %980 = vmatpush1.msra.mxu0 0.0
        %981 = vmatprep.subr.mxu0 0.0
        %982 = vmatpush1.msra.mxu0 0.0
        %983 = vmatprep.subr.mxu0 0.0
        %984 = vmatpush1.msra.mxu0 0.0
        %985 = vmatprep.subr.mxu0 0.0
        %986 = vmatpush1.msra.mxu0 0.0
        %987 = vmatprep.subr.mxu0 0.0
        %988 = vmatpush1.msra.mxu0 0.0
        %989 = vmatprep.subr.mxu0 0.0
        %990 = vmatpush1.msra.mxu0 0.0
        %991 = vmatprep.subr.mxu0 0.0
        %992 = vmatpush1.msra.mxu0 0.0
        %993 = vmatprep.subr.mxu0 0.0
        %994 = vmatpush1.msra.mxu0 0.0
        %995 = vmatprep.subr.mxu0 0.0
        %996 = vmatpush1.msra.mxu0 0.0
        %997 = vmatprep.subr.mxu0 0.0
        %998 = vmatpush1.msra.mxu0 0.0
        %999 = vmatprep.subr.mxu0 0.0
        %1000 = vmatpush1.msra.mxu0 0.0
        %1001 = vmatprep.subr.mxu0 0.0
        %1002 = vmatpush1.msra.mxu0 0.0
        %1003 = vmatprep.subr.mxu0 0.0
        %1004 = vmatpush1.msra.mxu0 0.0
        %1005 = vmatprep.subr.mxu0 0.0
        %1006 = vmatpush1.msra.mxu0 0.0
        %1007 = vmatprep.subr.mxu0 0.0
        %1008 = vmatpush1.msra.mxu0 0.0
        %1009 = vmatprep.subr.mxu0 0.0
        %1010 = vmatpush1.msra.mxu0 %v736
        %1011 = vmatprep.subr.mxu0 0.0
        %1012 = vmatpush2.msra.mxu0 0.0
        %1013 = vmatprep.subr.mxu0 0.0
        %1014 = vmatpush2.msra.mxu0 0.0
        %1015 = vmatprep.subr.mxu0 0.0
        %1016 = vmatpush2.msra.mxu0 0.0
        %1017 = vmatprep.subr.mxu0 0.0
        %1018 = vmatpush2.msra.mxu0 0.0
        %1019 = vmatprep.subr.mxu0 0.0
        %1020 = vmatpush2.msra.mxu0 0.0
        %1021 = vmatprep.subr.mxu0 0.0
        %1022 = vmatpush2.msra.mxu0 0.0
        %1023 = vmatprep.subr.mxu0 0.0
        %1024 = vmatpush2.msra.mxu0 0.0
        %1025 = vmatprep.subr.mxu0 0.0
        %1026 = vmatpush2.msra.mxu0 0.0
        %1027 = vmatprep.subr.mxu0 0.0
        %1028 = vmatpush2.msra.mxu0 0.0
        %1029 = vmatprep.subr.mxu0 0.0
        %1030 = vmatpush2.msra.mxu0 0.0
        %1031 = vmatprep.subr.mxu0 0.0
        %1032 = vmatpush2.msra.mxu0 0.0
        %1033 = vmatprep.subr.mxu0 0.0
        %1034 = vmatpush2.msra.mxu0 0.0
        %1035 = vmatprep.subr.mxu0 0.0
        %1036 = vmatpush2.msra.mxu0 0.0
        %1037 = vmatprep.subr.mxu0 0.0
        %1038 = vmatpush2.msra.mxu0 0.0
        %1039 = vmatprep.subr.mxu0 0.0
        %1040 = vmatpush2.msra.mxu0 0.0
        %1041 = vmatprep.subr.mxu0 0.0
        %1042 = vmatpush2.msra.mxu0 0.0
        %1043 = vmatprep.mubr.f32.mxu0 0.0
        %1044 = vmatmul.mubr.f32.gmra.mxu0 %v977
        %v1045 = vpop.f32.mrf.mxu0
        %v1046 = vadd.f32 %v973, %v1045
        %v1047 = vpop.f32.mrf.mxu0
        %1048 = vdwg.mxu0
        %1049 = vrot.lane.b32.xlu0 %v485, 112
        %v1050 = vpop.permute.xlu0 %1049
        %1051 = vrot.lane.b32.xlu0 %v569, 112
        %v1052 = vpop.permute.xlu0 %1051
        %v1053 = vsel %vm572, %v1050, 0
        %v1055 = vsel %vm572, %v1052, 0
        %1057 = vmatprep.subr.mxu0 0.0
        %1058 = vmatpush1.xpose.msra.mxu0 0.0
        %1059 = vmatprep.subr.mxu0 0.0
        %1060 = vmatpush1.xpose.msra.mxu0 0.0
        %1061 = vmatprep.subr.mxu0 0.0
        %1062 = vmatpush1.xpose.msra.mxu0 0.0
        %1063 = vmatprep.subr.mxu0 0.0
        %1064 = vmatpush1.xpose.msra.mxu0 0.0
        %1065 = vmatprep.subr.mxu0 0.0
        %1066 = vmatpush1.xpose.msra.mxu0 0.0
        %1067 = vmatprep.subr.mxu0 0.0
        %1068 = vmatpush1.xpose.msra.mxu0 0.0
        %1069 = vmatprep.subr.mxu0 0.0
        %1070 = vmatpush1.xpose.msra.mxu0 0.0
        %1071 = vmatprep.subr.mxu0 0.0
        %1072 = vmatpush1.xpose.msra.mxu0 0.0
        %1073 = vmatprep.subr.mxu0 0.0
        %1074 = vmatpush1.xpose.msra.mxu0 0.0
        %1075 = vmatprep.subr.mxu0 0.0
        %1076 = vmatpush1.xpose.msra.mxu0 0.0
        %1077 = vmatprep.subr.mxu0 0.0
        %1078 = vmatpush1.xpose.msra.mxu0 0.0
        %1079 = vmatprep.subr.mxu0 0.0
        %1080 = vmatpush1.xpose.msra.mxu0 0.0
        %1081 = vmatprep.subr.mxu0 0.0
        %1082 = vmatpush1.xpose.msra.mxu0 0.0
        %1083 = vmatprep.subr.mxu0 0.0
        %1084 = vmatpush1.xpose.msra.mxu0 0.0
        %1085 = vmatprep.subr.mxu0 0.0
        %1086 = vmatpush1.xpose.msra.mxu0 0.0
        %1087 = vmatprep.subr.mxu0 0.0
        %1088 = vmatpush1.xpose.msra.mxu0 %v1055
        %1089 = vmatprep.subr.mxu0 0.0
        %1090 = vmatpush2.xpose.msra.mxu0 0.0
        %1091 = vmatprep.subr.mxu0 0.0
        %1092 = vmatpush2.xpose.msra.mxu0 0.0
        %1093 = vmatprep.subr.mxu0 0.0
        %1094 = vmatpush2.xpose.msra.mxu0 0.0
        %1095 = vmatprep.subr.mxu0 0.0
        %1096 = vmatpush2.xpose.msra.mxu0 0.0
        %1097 = vmatprep.subr.mxu0 0.0
        %1098 = vmatpush2.xpose.msra.mxu0 0.0
        %1099 = vmatprep.subr.mxu0 0.0
        %1100 = vmatpush2.xpose.msra.mxu0 0.0
        %1101 = vmatprep.subr.mxu0 0.0
        %1102 = vmatpush2.xpose.msra.mxu0 0.0
        %1103 = vmatprep.subr.mxu0 0.0
        %1104 = vmatpush2.xpose.msra.mxu0 0.0
        %1105 = vmatprep.subr.mxu0 0.0
        %1106 = vmatpush2.xpose.msra.mxu0 0.0
        %1107 = vmatprep.subr.mxu0 0.0
        %1108 = vmatpush2.xpose.msra.mxu0 0.0
        %1109 = vmatprep.subr.mxu0 0.0
        %1110 = vmatpush2.xpose.msra.mxu0 0.0
        %1111 = vmatprep.subr.mxu0 0.0
        %1112 = vmatpush2.xpose.msra.mxu0 0.0
        %1113 = vmatprep.subr.mxu0 0.0
        %1114 = vmatpush2.xpose.msra.mxu0 0.0
        %1115 = vmatprep.subr.mxu0 0.0
        %1116 = vmatpush2.xpose.msra.mxu0 0.0
        %1117 = vmatprep.subr.mxu0 0.0
        %1118 = vmatpush2.xpose.msra.mxu0 0.0
        %1119 = vmatprep.subr.mxu0 0.0
        %1120 = vmatpush2.xpose.msra.mxu0 0.0
        %1121 = vmatprep.mubr.f32.mxu0 0.0
        %1122 = vmatmul.mubr.f32.gmra.mxu0 %v1053
        %v1123 = vpop.f32.mrf.mxu0
        %v1124 = vadd.f32 0.0, %v1123
        %v1125 = vpop.f32.mrf.mxu0
        %1126 = vdwg.mxu0
        %v1127 = vsel %vm572, %v1124, -inf
        %1128 = vmax.xlane.f32.xlu0 %v1127
        %v1129 = vpop.xlane.xlu0 %1128
        %v1130 = vsub.f32 %v1124, %v1129
        %v1131 = vmul.f32 %v1130, 1.442695
        %v1132 = vpow.pop %v1131
        %v1133 = vsel %vm572, %v1132, 0.0
        %1134 = vadd.xlane.f32.xlu0 %v1133
        %v1135 = vpop.xlane.xlu0 %1134
        %1136 = vrot.lane.b32.xlu0 %v569, 80
        %v1137 = vpop.permute.xlu0 %1136
        %v1140 = vsel %vm572, %v1132, 0
        %1142 = vmatprep.subr.mxu0 0.0
        %1143 = vmatpush1.msra.mxu0 0.0
        %1144 = vmatprep.subr.mxu0 0.0
        %1145 = vmatpush1.msra.mxu0 0.0
        %1146 = vmatprep.subr.mxu0 0.0
        %1147 = vmatpush1.msra.mxu0 0.0
        %1148 = vmatprep.subr.mxu0 0.0
        %1149 = vmatpush1.msra.mxu0 0.0
        %1150 = vmatprep.subr.mxu0 0.0
        %1151 = vmatpush1.msra.mxu0 0.0
        %1152 = vmatprep.subr.mxu0 0.0
        %1153 = vmatpush1.msra.mxu0 0.0
        %1154 = vmatprep.subr.mxu0 0.0
        %1155 = vmatpush1.msra.mxu0 0.0
        %1156 = vmatprep.subr.mxu0 0.0
        %1157 = vmatpush1.msra.mxu0 0.0
        %1158 = vmatprep.subr.mxu0 0.0
        %1159 = vmatpush1.msra.mxu0 0.0
        %1160 = vmatprep.subr.mxu0 0.0
        %1161 = vmatpush1.msra.mxu0 0.0
        %1162 = vmatprep.subr.mxu0 0.0
        %1163 = vmatpush1.msra.mxu0 0.0
        %1164 = vmatprep.subr.mxu0 0.0
        %1165 = vmatpush1.msra.mxu0 0.0
        %1166 = vmatprep.subr.mxu0 0.0
        %1167 = vmatpush1.msra.mxu0 0.0
        %1168 = vmatprep.subr.mxu0 0.0
        %1169 = vmatpush1.msra.mxu0 0.0
        %1170 = vmatprep.subr.mxu0 0.0
        %1171 = vmatpush1.msra.mxu0 0.0
        %1172 = vmatprep.subr.mxu0 0.0
        %1173 = vmatpush1.msra.mxu0 %v1137
        %1174 = vmatprep.subr.mxu0 0.0
        %1175 = vmatpush2.msra.mxu0 0.0
        %1176 = vmatprep.subr.mxu0 0.0
        %1177 = vmatpush2.msra.mxu0 0.0
        %1178 = vmatprep.subr.mxu0 0.0
        %1179 = vmatpush2.msra.mxu0 0.0
        %1180 = vmatprep.subr.mxu0 0.0
        %1181 = vmatpush2.msra.mxu0 0.0
        %1182 = vmatprep.subr.mxu0 0.0
        %1183 = vmatpush2.msra.mxu0 0.0
        %1184 = vmatprep.subr.mxu0 0.0
        %1185 = vmatpush2.msra.mxu0 0.0
        %1186 = vmatprep.subr.mxu0 0.0
        %1187 = vmatpush2.msra.mxu0 0.0
        %1188 = vmatprep.subr.mxu0 0.0
        %1189 = vmatpush2.msra.mxu0 0.0
        %1190 = vmatprep.subr.mxu0 0.0
        %1191 = vmatpush2.msra.mxu0 0.0
        %1192 = vmatprep.subr.mxu0 0.0
        %1193 = vmatpush2.msra.mxu0 0.0
        %1194 = vmatprep.subr.mxu0 0.0
        %1195 = vmatpush2.msra.mxu0 0.0
        %1196 = vmatprep.subr.mxu0 0.0
        %1197 = vmatpush2.msra.mxu0 0.0
        %1198 = vmatprep.subr.mxu0 0.0
        %1199 = vmatpush2.msra.mxu0 0.0
        %1200 = vmatprep.subr.mxu0 0.0
        %1201 = vmatpush2.msra.mxu0 0.0
        %1202 = vmatprep.subr.mxu0 0.0
        %1203 = vmatpush2.msra.mxu0 0.0
        %1204 = vmatprep.subr.mxu0 0.0
        %1205 = vmatpush2.msra.mxu0 0.0
        %1206 = vmatprep.mubr.f32.mxu0 0.0
        %1207 = vmatmul.mubr.f32.gmra.mxu0 %v1140
        %v1208 = vpop.f32.mrf.mxu0
        %v1209 = vadd.f32 0.0, %v1208
        %v1210 = vpop.f32.mrf.mxu0
        %1211 = vdwg.mxu0
        %v1212 = vrcp.pop %v1135
        %v1213 = vmul.f32 %v1209, %v1212
        %v1214 = vld [vmem:[#allocation10 + $0x10] sm:$0xff]
        %v1216 = vsel %vm572, %v1213, 0
        %1218 = vmatprep.subr.mxu0 0.0
        %1219 = vmatpush1.msra.mxu0 0.0
        %1220 = vmatprep.subr.mxu0 0.0
        %1221 = vmatpush1.msra.mxu0 0.0
        %1222 = vmatprep.subr.mxu0 0.0
        %1223 = vmatpush1.msra.mxu0 0.0
        %1224 = vmatprep.subr.mxu0 0.0
        %1225 = vmatpush1.msra.mxu0 0.0
        %1226 = vmatprep.subr.mxu0 0.0
        %1227 = vmatpush1.msra.mxu0 0.0
        %1228 = vmatprep.subr.mxu0 0.0
        %1229 = vmatpush1.msra.mxu0 0.0
        %1230 = vmatprep.subr.mxu0 0.0
        %1231 = vmatpush1.msra.mxu0 0.0
        %1232 = vmatprep.subr.mxu0 0.0
        %1233 = vmatpush1.msra.mxu0 0.0
        %1234 = vmatprep.subr.mxu0 0.0
        %1235 = vmatpush1.msra.mxu0 0.0
        %1236 = vmatprep.subr.mxu0 0.0
        %1237 = vmatpush1.msra.mxu0 0.0
        %1238 = vmatprep.subr.mxu0 0.0
        %1239 = vmatpush1.msra.mxu0 0.0
        %1240 = vmatprep.subr.mxu0 0.0
        %1241 = vmatpush1.msra.mxu0 0.0
        %1242 = vmatprep.subr.mxu0 0.0
        %1243 = vmatpush1.msra.mxu0 0.0
        %1244 = vmatprep.subr.mxu0 0.0
        %1245 = vmatpush1.msra.mxu0 0.0
        %1246 = vmatprep.subr.mxu0 0.0
        %1247 = vmatpush1.msra.mxu0 0.0
        %1248 = vmatprep.subr.mxu0 0.0
        %1249 = vmatpush1.msra.mxu0 %v1214
        %1250 = vmatprep.subr.mxu0 0.0
        %1251 = vmatpush2.msra.mxu0 0.0
        %1252 = vmatprep.subr.mxu0 0.0
        %1253 = vmatpush2.msra.mxu0 0.0
        %1254 = vmatprep.subr.mxu0 0.0
        %1255 = vmatpush2.msra.mxu0 0.0
        %1256 = vmatprep.subr.mxu0 0.0
        %1257 = vmatpush2.msra.mxu0 0.0
        %1258 = vmatprep.subr.mxu0 0.0
        %1259 = vmatpush2.msra.mxu0 0.0
        %1260 = vmatprep.subr.mxu0 0.0
        %1261 = vmatpush2.msra.mxu0 0.0
        %1262 = vmatprep.subr.mxu0 0.0
        %1263 = vmatpush2.msra.mxu0 0.0
        %1264 = vmatprep.subr.mxu0 0.0
        %1265 = vmatpush2.msra.mxu0 0.0
        %1266 = vmatprep.subr.mxu0 0.0
        %1267 = vmatpush2.msra.mxu0 0.0
        %1268 = vmatprep.subr.mxu0 0.0
        %1269 = vmatpush2.msra.mxu0 0.0
        %1270 = vmatprep.subr.mxu0 0.0
        %1271 = vmatpush2.msra.mxu0 0.0
        %1272 = vmatprep.subr.mxu0 0.0
        %1273 = vmatpush2.msra.mxu0 0.0
        %1274 = vmatprep.subr.mxu0 0.0
        %1275 = vmatpush2.msra.mxu0 0.0
        %1276 = vmatprep.subr.mxu0 0.0
        %1277 = vmatpush2.msra.mxu0 0.0
        %1278 = vmatprep.subr.mxu0 0.0
        %1279 = vmatpush2.msra.mxu0 0.0
        %1280 = vmatprep.subr.mxu0 0.0
        %1281 = vmatpush2.msra.mxu0 0.0
        %1282 = vmatprep.mubr.f32.mxu0 0.0
        %1283 = vmatmul.mubr.f32.gmra.mxu0 %v1216
        %v1284 = vpop.f32.mrf.mxu0
        %v1285 = vadd.f32 0.0, %v1284
        %v1286 = vpop.f32.mrf.mxu0
        %1287 = vdwg.mxu0
        %v1288 = vadd.f32 %v1046, %v1285
        %1289 = vrot.lane.b32.xlu0 %v485, 104
        %v1290 = vpop.permute.xlu0 %1289
        %1291 = vrot.lane.b32.xlu0 %v569, 104
        %v1292 = vpop.permute.xlu0 %1291
        %v1293 = vsel %vm572, %v1290, 0
        %v1295 = vsel %vm572, %v1292, 0
        %1297 = vmatprep.subr.mxu0 0.0
        %1298 = vmatpush1.xpose.msra.mxu0 0.0
        %1299 = vmatprep.subr.mxu0 0.0
        %1300 = vmatpush1.xpose.msra.mxu0 0.0
        %1301 = vmatprep.subr.mxu0 0.0
        %1302 = vmatpush1.xpose.msra.mxu0 0.0
        %1303 = vmatprep.subr.mxu0 0.0
        %1304 = vmatpush1.xpose.msra.mxu0 0.0
        %1305 = vmatprep.subr.mxu0 0.0
        %1306 = vmatpush1.xpose.msra.mxu0 0.0
        %1307 = vmatprep.subr.mxu0 0.0
        %1308 = vmatpush1.xpose.msra.mxu0 0.0
        %1309 = vmatprep.subr.mxu0 0.0
        %1310 = vmatpush1.xpose.msra.mxu0 0.0
        %1311 = vmatprep.subr.mxu0 0.0
        %1312 = vmatpush1.xpose.msra.mxu0 0.0
        %1313 = vmatprep.subr.mxu0 0.0
        %1314 = vmatpush1.xpose.msra.mxu0 0.0
        %1315 = vmatprep.subr.mxu0 0.0
        %1316 = vmatpush1.xpose.msra.mxu0 0.0
        %1317 = vmatprep.subr.mxu0 0.0
        %1318 = vmatpush1.xpose.msra.mxu0 0.0
        %1319 = vmatprep.subr.mxu0 0.0
        %1320 = vmatpush1.xpose.msra.mxu0 0.0
        %1321 = vmatprep.subr.mxu0 0.0
        %1322 = vmatpush1.xpose.msra.mxu0 0.0
        %1323 = vmatprep.subr.mxu0 0.0
        %1324 = vmatpush1.xpose.msra.mxu0 0.0
        %1325 = vmatprep.subr.mxu0 0.0
        %1326 = vmatpush1.xpose.msra.mxu0 0.0
        %1327 = vmatprep.subr.mxu0 0.0
        %1328 = vmatpush1.xpose.msra.mxu0 %v1295
        %1329 = vmatprep.subr.mxu0 0.0
        %1330 = vmatpush2.xpose.msra.mxu0 0.0
        %1331 = vmatprep.subr.mxu0 0.0
        %1332 = vmatpush2.xpose.msra.mxu0 0.0
        %1333 = vmatprep.subr.mxu0 0.0
        %1334 = vmatpush2.xpose.msra.mxu0 0.0
        %1335 = vmatprep.subr.mxu0 0.0
        %1336 = vmatpush2.xpose.msra.mxu0 0.0
        %1337 = vmatprep.subr.mxu0 0.0
        %1338 = vmatpush2.xpose.msra.mxu0 0.0
        %1339 = vmatprep.subr.mxu0 0.0
        %1340 = vmatpush2.xpose.msra.mxu0 0.0
        %1341 = vmatprep.subr.mxu0 0.0
        %1342 = vmatpush2.xpose.msra.mxu0 0.0
        %1343 = vmatprep.subr.mxu0 0.0
        %1344 = vmatpush2.xpose.msra.mxu0 0.0
        %1345 = vmatprep.subr.mxu0 0.0
        %1346 = vmatpush2.xpose.msra.mxu0 0.0
        %1347 = vmatprep.subr.mxu0 0.0
        %1348 = vmatpush2.xpose.msra.mxu0 0.0
        %1349 = vmatprep.subr.mxu0 0.0
        %1350 = vmatpush2.xpose.msra.mxu0 0.0
        %1351 = vmatprep.subr.mxu0 0.0
        %1352 = vmatpush2.xpose.msra.mxu0 0.0
        %1353 = vmatprep.subr.mxu0 0.0
        %1354 = vmatpush2.xpose.msra.mxu0 0.0
        %1355 = vmatprep.subr.mxu0 0.0
        %1356 = vmatpush2.xpose.msra.mxu0 0.0
        %1357 = vmatprep.subr.mxu0 0.0
        %1358 = vmatpush2.xpose.msra.mxu0 0.0
        %1359 = vmatprep.subr.mxu0 0.0
        %1360 = vmatpush2.xpose.msra.mxu0 0.0
        %1361 = vmatprep.mubr.f32.mxu0 0.0
        %1362 = vmatmul.mubr.f32.gmra.mxu0 %v1293
        %v1363 = vpop.f32.mrf.mxu0
        %v1364 = vadd.f32 0.0, %v1363
        %v1365 = vpop.f32.mrf.mxu0
        %1366 = vdwg.mxu0
        %v1367 = vsel %vm572, %v1364, -inf
        %1368 = vmax.xlane.f32.xlu0 %v1367
        %v1369 = vpop.xlane.xlu0 %1368
        %v1370 = vsub.f32 %v1364, %v1369
        %v1371 = vmul.f32 %v1370, 1.442695
        %v1372 = vpow.pop %v1371
        %v1373 = vsel %vm572, %v1372, 0.0
        %1374 = vadd.xlane.f32.xlu0 %v1373
        %v1375 = vpop.xlane.xlu0 %1374
        %1376 = vrot.lane.b32.xlu0 %v569, 72
        %v1377 = vpop.permute.xlu0 %1376
        %v1380 = vsel %vm572, %v1372, 0
        %1382 = vmatprep.subr.mxu0 0.0
        %1383 = vmatpush1.msra.mxu0 0.0
        %1384 = vmatprep.subr.mxu0 0.0
        %1385 = vmatpush1.msra.mxu0 0.0
        %1386 = vmatprep.subr.mxu0 0.0
        %1387 = vmatpush1.msra.mxu0 0.0
        %1388 = vmatprep.subr.mxu0 0.0
        %1389 = vmatpush1.msra.mxu0 0.0
        %1390 = vmatprep.subr.mxu0 0.0
        %1391 = vmatpush1.msra.mxu0 0.0
        %1392 = vmatprep.subr.mxu0 0.0
        %1393 = vmatpush1.msra.mxu0 0.0
        %1394 = vmatprep.subr.mxu0 0.0
        %1395 = vmatpush1.msra.mxu0 0.0
        %1396 = vmatprep.subr.mxu0 0.0
        %1397 = vmatpush1.msra.mxu0 0.0
        %1398 = vmatprep.subr.mxu0 0.0
        %1399 = vmatpush1.msra.mxu0 0.0
        %1400 = vmatprep.subr.mxu0 0.0
        %1401 = vmatpush1.msra.mxu0 0.0
        %1402 = vmatprep.subr.mxu0 0.0
        %1403 = vmatpush1.msra.mxu0 0.0
        %1404 = vmatprep.subr.mxu0 0.0
        %1405 = vmatpush1.msra.mxu0 0.0
        %1406 = vmatprep.subr.mxu0 0.0
        %1407 = vmatpush1.msra.mxu0 0.0
        %1408 = vmatprep.subr.mxu0 0.0
        %1409 = vmatpush1.msra.mxu0 0.0
        %1410 = vmatprep.subr.mxu0 0.0
        %1411 = vmatpush1.msra.mxu0 0.0
        %1412 = vmatprep.subr.mxu0 0.0
        %1413 = vmatpush1.msra.mxu0 %v1377
        %1414 = vmatprep.subr.mxu0 0.0
        %1415 = vmatpush2.msra.mxu0 0.0
        %1416 = vmatprep.subr.mxu0 0.0
        %1417 = vmatpush2.msra.mxu0 0.0
        %1418 = vmatprep.subr.mxu0 0.0
        %1419 = vmatpush2.msra.mxu0 0.0
        %1420 = vmatprep.subr.mxu0 0.0
        %1421 = vmatpush2.msra.mxu0 0.0
        %1422 = vmatprep.subr.mxu0 0.0
        %1423 = vmatpush2.msra.mxu0 0.0
        %1424 = vmatprep.subr.mxu0 0.0
        %1425 = vmatpush2.msra.mxu0 0.0
        %1426 = vmatprep.subr.mxu0 0.0
        %1427 = vmatpush2.msra.mxu0 0.0
        %1428 = vmatprep.subr.mxu0 0.0
        %1429 = vmatpush2.msra.mxu0 0.0
        %1430 = vmatprep.subr.mxu0 0.0
        %1431 = vmatpush2.msra.mxu0 0.0
        %1432 = vmatprep.subr.mxu0 0.0
        %1433 = vmatpush2.msra.mxu0 0.0
        %1434 = vmatprep.subr.mxu0 0.0
        %1435 = vmatpush2.msra.mxu0 0.0
        %1436 = vmatprep.subr.mxu0 0.0
        %1437 = vmatpush2.msra.mxu0 0.0
        %1438 = vmatprep.subr.mxu0 0.0
        %1439 = vmatpush2.msra.mxu0 0.0
        %1440 = vmatprep.subr.mxu0 0.0
        %1441 = vmatpush2.msra.mxu0 0.0
        %1442 = vmatprep.subr.mxu0 0.0
        %1443 = vmatpush2.msra.mxu0 0.0
        %1444 = vmatprep.subr.mxu0 0.0
        %1445 = vmatpush2.msra.mxu0 0.0
        %1446 = vmatprep.mubr.f32.mxu0 0.0
        %1447 = vmatmul.mubr.f32.gmra.mxu0 %v1380
        %v1448 = vpop.f32.mrf.mxu0
        %v1449 = vadd.f32 0.0, %v1448
        %v1450 = vpop.f32.mrf.mxu0
        %1451 = vdwg.mxu0
        %v1452 = vrcp.pop %v1375
        %v1453 = vmul.f32 %v1449, %v1452
        %v1454 = vld [vmem:[#allocation10 + $0x18] sm:$0xff]
        %v1456 = vsel %vm572, %v1453, 0
        %1458 = vmatprep.subr.mxu0 0.0
        %1459 = vmatpush1.msra.mxu0 0.0
        %1460 = vmatprep.subr.mxu0 0.0
        %1461 = vmatpush1.msra.mxu0 0.0
        %1462 = vmatprep.subr.mxu0 0.0
        %1463 = vmatpush1.msra.mxu0 0.0
        %1464 = vmatprep.subr.mxu0 0.0
        %1465 = vmatpush1.msra.mxu0 0.0
        %1466 = vmatprep.subr.mxu0 0.0
        %1467 = vmatpush1.msra.mxu0 0.0
        %1468 = vmatprep.subr.mxu0 0.0
        %1469 = vmatpush1.msra.mxu0 0.0
        %1470 = vmatprep.subr.mxu0 0.0
        %1471 = vmatpush1.msra.mxu0 0.0
        %1472 = vmatprep.subr.mxu0 0.0
        %1473 = vmatpush1.msra.mxu0 0.0
        %1474 = vmatprep.subr.mxu0 0.0
        %1475 = vmatpush1.msra.mxu0 0.0
        %1476 = vmatprep.subr.mxu0 0.0
        %1477 = vmatpush1.msra.mxu0 0.0
        %1478 = vmatprep.subr.mxu0 0.0
        %1479 = vmatpush1.msra.mxu0 0.0
        %1480 = vmatprep.subr.mxu0 0.0
        %1481 = vmatpush1.msra.mxu0 0.0
        %1482 = vmatprep.subr.mxu0 0.0
        %1483 = vmatpush1.msra.mxu0 0.0
        %1484 = vmatprep.subr.mxu0 0.0
        %1485 = vmatpush1.msra.mxu0 0.0
        %1486 = vmatprep.subr.mxu0 0.0
        %1487 = vmatpush1.msra.mxu0 0.0
        %1488 = vmatprep.subr.mxu0 0.0
        %1489 = vmatpush1.msra.mxu0 %v1454
        %1490 = vmatprep.subr.mxu0 0.0
        %1491 = vmatpush2.msra.mxu0 0.0
        %1492 = vmatprep.subr.mxu0 0.0
        %1493 = vmatpush2.msra.mxu0 0.0
        %1494 = vmatprep.subr.mxu0 0.0
        %1495 = vmatpush2.msra.mxu0 0.0
        %1496 = vmatprep.subr.mxu0 0.0
        %1497 = vmatpush2.msra.mxu0 0.0
        %1498 = vmatprep.subr.mxu0 0.0
        %1499 = vmatpush2.msra.mxu0 0.0
        %1500 = vmatprep.subr.mxu0 0.0
        %1501 = vmatpush2.msra.mxu0 0.0
        %1502 = vmatprep.subr.mxu0 0.0
        %1503 = vmatpush2.msra.mxu0 0.0
        %1504 = vmatprep.subr.mxu0 0.0
        %1505 = vmatpush2.msra.mxu0 0.0
        %1506 = vmatprep.subr.mxu0 0.0
        %1507 = vmatpush2.msra.mxu0 0.0
        %1508 = vmatprep.subr.mxu0 0.0
        %1509 = vmatpush2.msra.mxu0 0.0
        %1510 = vmatprep.subr.mxu0 0.0
        %1511 = vmatpush2.msra.mxu0 0.0
        %1512 = vmatprep.subr.mxu0 0.0
        %1513 = vmatpush2.msra.mxu0 0.0
        %1514 = vmatprep.subr.mxu0 0.0
        %1515 = vmatpush2.msra.mxu0 0.0
        %1516 = vmatprep.subr.mxu0 0.0
        %1517 = vmatpush2.msra.mxu0 0.0
        %1518 = vmatprep.subr.mxu0 0.0
        %1519 = vmatpush2.msra.mxu0 0.0
        %1520 = vmatprep.subr.mxu0 0.0
        %1521 = vmatpush2.msra.mxu0 0.0
        %1522 = vmatprep.mubr.f32.mxu0 0.0
        %1523 = vmatmul.mubr.f32.gmra.mxu0 %v1456
        %v1524 = vpop.f32.mrf.mxu0
        %v1525 = vadd.f32 0.0, %v1524
        %v1526 = vpop.f32.mrf.mxu0
        %1527 = vdwg.mxu0
        %v1528 = vadd.f32 %v1288, %v1525
        %v1529 = vld [vmem:[%s7] sm:$0x1]
        %v1531 = vlaneseq
        %v1532 = vshrl.u32 %v1531, 7
        %v1533 = vsub.s32 0, %v1532
        %v1534 = vrot.slane %v1529, %v1533
        %v1536 = vadd.f32 %v1528, %v1534
        %1537 = vst.msk [vmem:[%s400] sm:$0xff] %vm414, %v1536
        %s1538 = sand.u32 %s215, 1
        %s1539 = scalar_lea.sflag [#allocation4], %s1538
        %s1540 = sand.u32 %s215, 1
        %s1541 = smul.addr %s1540, 8
        %s1542 = scalar_lea.vmem [#allocation11], %s1541
        // Predicated region
        $region73: #{tpu_custom_call.1} parent=51 // pred_check
          %p1543 = pneg %p225
        $region74: #{tpu_custom_call.1} parent=51 // pred_check_branch
          %1545 = sbr.rel (%p1543) target = $region76
        $region75: #{tpu_custom_call.1} parent=51 // pred_region
          %s1547 = ssub.s32 128, 128
          %1548 = vsyncadd %s1539, %s1547
          %s1549 = smul.addr %s29, 128
          %s1550 = scalar_lea.hbm %s8, %s1549
          %s1552 = sshll.u32 %s1542, 4
          %s1553 = int_to_ptr.vmem [resolvable:$true] %s1552
          %1555 = dma.vmem_to_hbm [thread:$0]  %s1553, 128, %s1550, %s1539
        $region76: #{tpu_custom_call.1} parent=51 // pred_fallthru
          _
      $region52: #{tpu_custom_call.1} parent=5 // pred_fallthru
        _
      %p1556 = scmp.le.s32.totalorder 2, %s24
      // Predicated region
      $region77: #{tpu_custom_call.1} parent=5 // pred_check
        %p1557 = pneg %p1556
      $region78: #{tpu_custom_call.1} parent=5 // pred_check_branch
        %1559 = sbr.rel (%p1557) target = $region80
      $region79: #{tpu_custom_call.1} parent=5 // pred_region
        %s1560 = ssub.s32 %s24, 2
        // Predicated region
        $region81: #{tpu_custom_call.1} parent=79 // pred_check
          %p1561 = pneg %p231
        $region82: #{tpu_custom_call.1} parent=79 // pred_check_branch
          %1563 = sbr.rel (%p1561) target = $region84
        $region83: #{tpu_custom_call.1} parent=79 // pred_region
          %s1564 = sand.u32 %s216, 1
          %s1565 = scalar_lea.sflag [#allocation4], %s1564
          %s1566 = sand.u32 %s216, 1
          %s1567 = smul.addr %s1566, 8
          %s1568 = scalar_lea.vmem [#allocation11], %s1567
          %1569 = dma.done %s1565, 128
        $region84: #{tpu_custom_call.1} parent=79 // pred_fallthru
          _
      $region80: #{tpu_custom_call.1} parent=5 // pred_fallthru
        _
    $region6: #{tpu_custom_call.1} parent=1 // loop_footer
      %s28 = sadd.s32 1, %s24
    $region7: #{tpu_custom_call.1} parent=1 // loop_footer_branch
      %23 = sbr.rel target = $region3
    $region8: #{tpu_custom_call.1} parent=1 // loop_exit
      _
    %1570 = vsyncpa [#allocation3], 1
    %s1571 = scalar_lea.sflag [#allocation3], 1
    %1572 = vsyncpa %s1571, 1
    %1573 = vsyncpa [#allocation6], 1
    %s1574 = scalar_lea.sflag [#allocation6], 1
    %1575 = vsyncpa %s1574, 1
    %1576 = vsyncpa [#allocation9], 1
    %1577 = vsyncpa [#allocation4], 1
    %s1578 = scalar_lea.sflag [#allocation4], 1
    %1579 = vsyncpa %s1578, 1

</llo_original>
